<compile_context>
chip_gen: v7x
topology: tpu7x:2x2x1
jax: 0.10.0
libtpu: 0.0.40
codegen_flags: <defaults>
</compile_context>

<pallas_src>
import functools

import jax
import jax.numpy as jnp
from jax.experimental import pallas as pl
from jax.experimental.pallas import tpu as pltpu

LANES = 128


# ----------------------------------------------------------------------------
# small helpers
# ----------------------------------------------------------------------------
def _round_up(x, m):
    return (x + m - 1) // m * m


def _pick_row_tile(m_rows, cap=1024):
    """Biggest row tile <= cap, multiple of 8 (prefer exact divisors)."""
    mr = _round_up(m_rows, 8)
    if mr <= cap:
        return mr
    for t in range(cap, 127, -8):
        if mr % t == 0:
            return t
    return cap  # caller pads rows up to a multiple of the tile


def _pad_last(x, target):
    pad = target - x.shape[-1]
    if pad == 0:
        return x
    return jnp.pad(x, [(0, 0)] * (x.ndim - 1) + [(0, pad)])


# ----------------------------------------------------------------------------
# Pallas kernels
# ----------------------------------------------------------------------------
def _conv_pool_kernel(p_ref, w_ref, b_ref, o_ref):
    """Fused conv(im2col matmul) + bias + ReLU + MaxPool2d(2).

    p_ref: (4, tm, K) bf16 -- one patch matrix per 2x2 pooling-window position,
           rows ordered (n, oh/2, ow/2).
    w_ref: (K, 128) bf16 (output channels zero-padded to 128).
    b_ref: (1, 128) f32.
    o_ref: (tm, 128) bf16 -- pooled, relu'd activation, channels-last.
    relu(max_q(z_q + b)) == maxpool(relu(conv)) since relu is monotonic.
    """
    w = w_ref[...]
    z = jnp.dot(p_ref[0], w, preferred_element_type=jnp.float32)
    for q in range(1, 4):
        z = jnp.maximum(
            z, jnp.dot(p_ref[q], w, preferred_element_type=jnp.float32))
    z = jnp.maximum(z + b_ref[...], 0.0)
    o_ref[...] = z.astype(o_ref.dtype)


def _fc_fused_kernel(x_ref, w1_ref, b1_ref, w2_ref, b2_ref, w3_ref, b3_ref,
                     o_ref):
    """Fused fc1(+relu) -> fc2(+relu) -> fc3; weights stay resident in VMEM."""
    h = jnp.dot(x_ref[...], w1_ref[...], preferred_element_type=jnp.float32)
    h = jnp.maximum(h + b1_ref[...], 0.0).astype(jnp.bfloat16)
    h = jnp.dot(h, w2_ref[...], preferred_element_type=jnp.float32)
    h = jnp.maximum(h + b2_ref[...], 0.0).astype(jnp.bfloat16)
    h = jnp.dot(h, w3_ref[...], preferred_element_type=jnp.float32)
    o_ref[...] = (h + b3_ref[...]).astype(o_ref.dtype)


# ----------------------------------------------------------------------------
# im2col glue (XLA) -- patches grouped by 2x2 pooling-window position
# ----------------------------------------------------------------------------
def _im2col_pooled(x, kh, kw, c):
    """x:(N,H,W,C>=c) NHWC -> (4, N*oh/2*ow/2, kh*kw*c), feature order (kh,kw,c)."""
    # TODO(synk): build the 25-tap patches inside the Pallas kernel (VMEM ref
    # slicing) instead of materializing them through XLA/HBM.
    n, h, w, _ = x.shape
    oh, ow = h - kh + 1, w - kw + 1
    oh2, ow2 = oh // 2, ow // 2
    cols = [x[:, i:i + oh, j:j + ow, :c] for i in range(kh) for j in range(kw)]
    p = jnp.concatenate(cols, axis=-1)                    # (N, oh, ow, kh*kw*c)
    k = kh * kw * c
    qs = [p[:, qi::2, qj::2, :].reshape(n * oh2 * ow2, k)
          for qi in range(2) for qj in range(2)]
    return jnp.stack(qs, axis=0).astype(jnp.bfloat16), oh2, ow2


# ----------------------------------------------------------------------------
# Pallas wrappers
# ----------------------------------------------------------------------------
def conv_relu_pool(x_nhwc, w, b):
    """PyTorch-style valid conv (weight (O,I,KH,KW)) + ReLU + MaxPool2d(2).

    Returns ((N*oh/2*ow/2, 128) bf16, channels zero-padded to 128, rows ordered
    (n, h, w)), plus pooled spatial dims."""
    o, ci, kh, kw = w.shape
    p4, oh2, ow2 = _im2col_pooled(x_nhwc, kh, kw, ci)     # (4, M, K) bf16
    m, k = p4.shape[1], p4.shape[2]

    w_mat = _pad_last(w.transpose(2, 3, 1, 0).reshape(k, o),
                      LANES).astype(jnp.bfloat16)         # (K, 128)
    b_pad = _pad_last(b, LANES).reshape(1, LANES).astype(jnp.float32)

    tm = _pick_row_tile(m)
    mp = _round_up(m, tm)
    if mp != m:
        p4 = jnp.pad(p4, ((0, 0), (0, mp - m), (0, 0)))

    out = pl.pallas_call(
        _conv_pool_kernel,
        out_shape=jax.ShapeDtypeStruct((mp, LANES), jnp.bfloat16),
        grid=(mp // tm,),
        in_specs=[
            pl.BlockSpec((4, tm, k), lambda i: (0, i, 0)),
            pl.BlockSpec((k, LANES), lambda i: (0, 0)),   # weights resident
            pl.BlockSpec((1, LANES), lambda i: (0, 0)),   # bias resident
        ],
        out_specs=pl.BlockSpec((tm, LANES), lambda i: (i, 0)),
        compiler_params=pltpu.CompilerParams(
            dimension_semantics=("parallel",)),
        cost_estimate=pl.CostEstimate(
            flops=2 * 4 * mp * k * LANES, transcendentals=0,
            bytes_accessed=(4 * mp * k + k * LANES + mp * LANES) * 2
                           + LANES * 4),
    )(p4, w_mat, b_pad)
    out = out[:m] if mp != m else out
    return out, oh2, ow2


def fc_stack(x, w1, b1, w2, b2, w3, b3):
    """Fused fc1 -> relu -> fc2 -> relu -> fc3 in one pallas_call."""
    m, k = x.shape
    tm = _pick_row_tile(m, cap=512)
    mp = _round_up(m, tm)
    if mp != m:
        x = jnp.pad(x, ((0, mp - m), (0, 0)))
    n1, n2, n3 = w1.shape[1], w2.shape[1], w3.shape[1]
    const = lambda i: (0, 0)
    out = pl.pallas_call(
        _fc_fused_kernel,
        out_shape=jax.ShapeDtypeStruct((mp, n3), jnp.float32),
        grid=(mp // tm,),
        in_specs=[
            pl.BlockSpec((tm, k), lambda i: (i, 0)),
            pl.BlockSpec((k, n1), const), pl.BlockSpec((1, n1), const),
            pl.BlockSpec((n1, n2), const), pl.BlockSpec((1, n2), const),
            pl.BlockSpec((n2, n3), const), pl.BlockSpec((1, n3), const),
        ],
        out_specs=pl.BlockSpec((tm, n3), lambda i: (i, 0)),
        compiler_params=pltpu.CompilerParams(
            dimension_semantics=("parallel",)),
        cost_estimate=pl.CostEstimate(
            flops=2 * mp * (k * n1 + n1 * n2 + n2 * n3), transcendentals=0,
            bytes_accessed=(mp * k + k * n1 + n1 * n2 + n2 * n3) * 2
                           + mp * n3 * 4),
    )(x, w1, b1, w2, b2, w3, b3)
    return out[:m] if mp != m else out


# ----------------------------------------------------------------------------
# LeNet parameters + forward
# ----------------------------------------------------------------------------
def init_params(key):
    ks = jax.random.split(key, 10)

    def u(k, shape, fan_in):
        bound = 1.0 / jnp.sqrt(fan_in)
        return jax.random.uniform(k, shape, jnp.float32, -bound, bound)

    return {
        "conv1_w": u(ks[0], (6, 3, 5, 5), 3 * 5 * 5),
        "conv1_b": u(ks[1], (6,), 3 * 5 * 5),
        "conv2_w": u(ks[2], (16, 6, 5, 5), 6 * 5 * 5),
        "conv2_b": u(ks[3], (16,), 6 * 5 * 5),
        "fc1_w": u(ks[4], (120, 400), 400),
        "fc1_b": u(ks[5], (120,), 400),
        "fc2_w": u(ks[6], (84, 120), 120),
        "fc2_b": u(ks[7], (84,), 120),
        "fc3_w": u(ks[8], (10, 84), 84),
        "fc3_b": u(ks[9], (10,), 84),
    }


def lenet_forward(params, x):
    n = x.shape[0]
    # Single layout change: NCHW -> NHWC (channels-last everywhere after this).
    x = jnp.transpose(x, (0, 2, 3, 1)).astype(jnp.bfloat16)      # (N,32,32,3)

    y, oh2, ow2 = conv_relu_pool(x, params["conv1_w"], params["conv1_b"])
    y = y.reshape(n, oh2, ow2, LANES)                            # (N,14,14,128)

    y, oh2, ow2 = conv_relu_pool(y, params["conv2_w"], params["conv2_b"])
    y = y.reshape(n, oh2, ow2, LANES)[..., :16]                  # (N,5,5,16)
    y = y.reshape(n, oh2 * ow2 * 16).astype(jnp.bfloat16)        # (h,w,c) order

    # fc1 columns re-ordered from PyTorch's (c,h,w) flatten to our (h,w,c)
    # flatten, so no activation transpose is needed; all widths padded to 128.
    w1 = params["fc1_w"].reshape(120, 16, 5, 5).transpose(0, 2, 3, 1)
    w1 = _pad_last(w1.reshape(120, 400).T, LANES).astype(jnp.bfloat16)  # (400,128)
    w2 = jnp.zeros((LANES, LANES), jnp.float32).at[:120, :84].set(
        params["fc2_w"].T).astype(jnp.bfloat16)                  # (128,128)
    w3 = jnp.zeros((LANES, LANES), jnp.float32).at[:84, :10].set(
        params["fc3_w"].T).astype(jnp.bfloat16)                  # (128,128)
    b1 = _pad_last(params["fc1_b"], LANES).reshape(1, LANES).astype(jnp.float32)
    b2 = _pad_last(params["fc2_b"], LANES).reshape(1, LANES).astype(jnp.float32)
    b3 = _pad_last(params["fc3_b"], LANES).reshape(1, LANES).astype(jnp.float32)

    out = fc_stack(y, w1, b1, w2, b2, w3, b3)                    # (N, 128) f32
    return out[:, :10]


if __name__ == "__main__":
    key = jax.random.PRNGKey(0)
    pkey, xkey = jax.random.split(key)
    params = init_params(pkey)
    # LeNet's fc1 (16*5*5) implies a 32x32 spatial input; batch=2 keeps it small.
    x = jax.random.normal(xkey, (2, 3, 32, 32), dtype=jnp.float32)

    out = jax.jit(lenet_forward)(params, x)
    jax.block_until_ready(out)
    assert out.shape == (2, 10), out.shape
    print("KERNEL_OK")
</pallas_src>

<mosaic_0001>
module attributes {stable_mosaic.version = 11 : i64} {
  func.func @_conv_pool_kernel(%arg0: i32, %arg1: memref<4x392x75xbf16, #tpu.memory_space<vmem>>, %arg2: memref<75x128xbf16, #tpu.memory_space<vmem>>, %arg3: memref<1x128xf32, #tpu.memory_space<vmem>>, %arg4: memref<392x128xbf16, #tpu.memory_space<vmem>>) attributes {dimension_semantics = [#tpu.dimension_semantics<parallel>], iteration_bounds = array<i64: 1>, scalar_prefetch = 0 : i64, scratch_operands = 0 : i64, tpu.core_type = #tpu.core_type<tc>, window_params = [{transform_indices = @transform_0, window_bounds = array<i64: 4, 392, 75>}, {pipeline_mode = #tpu.pipeline_mode<synchronous>, transform_indices = @transform_1, window_bounds = array<i64: 75, 128>}, {pipeline_mode = #tpu.pipeline_mode<synchronous>, transform_indices = @transform_2, window_bounds = array<i64: 1, 128>}, {transform_indices = @transform_3, window_bounds = array<i64: 392, 128>}]} {
    %c0 = arith.constant 0 : index
    %c0_0 = arith.constant 0 : index
    %0 = vector.load %arg2[%c0, %c0_0] : memref<75x128xbf16, #tpu.memory_space<vmem>>, vector<75x128xbf16>
    %c0_1 = arith.constant 0 : index
    %c0_2 = arith.constant 0 : index
    %c0_3 = arith.constant 0 : index
    %1 = vector.load %arg1[%c0_1, %c0_2, %c0_3] : memref<4x392x75xbf16, #tpu.memory_space<vmem>>, vector<1x392x75xbf16>
    %2 = vector.shape_cast %1 : vector<1x392x75xbf16> to vector<392x75xbf16>
    %cst = arith.constant dense<0.000000e+00> : vector<392x128xf32>
    %3 = tpu.matmul %2, %0, %cst {dimension_numbers = #tpu.dot_dimension_numbers<[1], [0], [0], [1], [0, 0, 1, 1], [], []>} : vector<392x75xbf16>, vector<75x128xbf16>, vector<392x128xf32> -> vector<392x128xf32>
    %c1 = arith.constant 1 : index
    %c0_4 = arith.constant 0 : index
    %c0_5 = arith.constant 0 : index
    %4 = vector.load %arg1[%c1, %c0_4, %c0_5] : memref<4x392x75xbf16, #tpu.memory_space<vmem>>, vector<1x392x75xbf16>
    %5 = vector.shape_cast %4 : vector<1x392x75xbf16> to vector<392x75xbf16>
    %cst_6 = arith.constant dense<0.000000e+00> : vector<392x128xf32>
    %6 = tpu.matmul %5, %0, %cst_6 {dimension_numbers = #tpu.dot_dimension_numbers<[1], [0], [0], [1], [0, 0, 1, 1], [], []>} : vector<392x75xbf16>, vector<75x128xbf16>, vector<392x128xf32> -> vector<392x128xf32>
    %7 = arith.maximumf %3, %6 : vector<392x128xf32>
    %c2 = arith.constant 2 : index
    %c0_7 = arith.constant 0 : index
    %c0_8 = arith.constant 0 : index
    %8 = vector.load %arg1[%c2, %c0_7, %c0_8] : memref<4x392x75xbf16, #tpu.memory_space<vmem>>, vector<1x392x75xbf16>
    %9 = vector.shape_cast %8 : vector<1x392x75xbf16> to vector<392x75xbf16>
    %cst_9 = arith.constant dense<0.000000e+00> : vector<392x128xf32>
    %10 = tpu.matmul %9, %0, %cst_9 {dimension_numbers = #tpu.dot_dimension_numbers<[1], [0], [0], [1], [0, 0, 1, 1], [], []>} : vector<392x75xbf16>, vector<75x128xbf16>, vector<392x128xf32> -> vector<392x128xf32>
    %11 = arith.maximumf %7, %10 : vector<392x128xf32>
    %c3 = arith.constant 3 : index
    %c0_10 = arith.constant 0 : index
    %c0_11 = arith.constant 0 : index
    %12 = vector.load %arg1[%c3, %c0_10, %c0_11] : memref<4x392x75xbf16, #tpu.memory_space<vmem>>, vector<1x392x75xbf16>
    %13 = vector.shape_cast %12 : vector<1x392x75xbf16> to vector<392x75xbf16>
    %cst_12 = arith.constant dense<0.000000e+00> : vector<392x128xf32>
    %14 = tpu.matmul %13, %0, %cst_12 {dimension_numbers = #tpu.dot_dimension_numbers<[1], [0], [0], [1], [0, 0, 1, 1], [], []>} : vector<392x75xbf16>, vector<75x128xbf16>, vector<392x128xf32> -> vector<392x128xf32>
    %15 = arith.maximumf %11, %14 : vector<392x128xf32>
    %c0_13 = arith.constant 0 : index
    %c0_14 = arith.constant 0 : index
    %16 = vector.load %arg3[%c0_13, %c0_14] : memref<1x128xf32, #tpu.memory_space<vmem>>, vector<1x128xf32>
    %17 = vector.broadcast %16 : vector<1x128xf32> to vector<392x128xf32>
    %18 = arith.addf %15, %17 : vector<392x128xf32>
    %cst_15 = arith.constant 0.000000e+00 : f32
    %19 = vector.broadcast %cst_15 : f32 to vector<392x128xf32>
    %20 = arith.maximumf %18, %19 : vector<392x128xf32>
    %21 = arith.truncf %20 : vector<392x128xf32> to vector<392x128xbf16>
    %c0_16 = arith.constant 0 : index
    %c0_17 = arith.constant 0 : index
    %22 = vector.load %arg4[%c0_16, %c0_17] : memref<392x128xbf16, #tpu.memory_space<vmem>>, vector<392x128xbf16>
    tpu.vector_store %arg4[%c0_16, %c0_17], %21 {strides = array<i32>} : memref<392x128xbf16, #tpu.memory_space<vmem>>, vector<392x128xbf16>,
    return
  }
  func.func @transform_0(%arg0: i32) -> (i32, i32, i32) {
    %c0_i32 = arith.constant 0 : i32
    %c0_i32_0 = arith.constant 0 : i32
    %c0_i32_1 = arith.constant 0 : i32
    return %c0_i32, %arg0, %c0_i32_0 : i32, i32, i32
  }
  func.func @transform_1(%arg0: i32) -> (i32, i32) {
    %c0_i32 = arith.constant 0 : i32
    %c0_i32_0 = arith.constant 0 : i32
    %c0_i32_1 = arith.constant 0 : i32
    return %c0_i32, %c0_i32_0 : i32, i32
  }
  func.func @transform_2(%arg0: i32) -> (i32, i32) {
    %c0_i32 = arith.constant 0 : i32
    %c0_i32_0 = arith.constant 0 : i32
    %c0_i32_1 = arith.constant 0 : i32
    return %c0_i32, %c0_i32_0 : i32, i32
  }
  func.func @transform_3(%arg0: i32) -> (i32, i32) {
    %c0_i32 = arith.constant 0 : i32
    %c0_i32_0 = arith.constant 0 : i32
    return %arg0, %c0_i32 : i32, i32
  }
}

module attributes {stable_mosaic.version = 11 : i64} {
  func.func @_conv_pool_kernel(%arg0: i32, %arg1: memref<4x56x150xbf16, #tpu.memory_space<vmem>>, %arg2: memref<150x128xbf16, #tpu.memory_space<vmem>>, %arg3: memref<1x128xf32, #tpu.memory_space<vmem>>, %arg4: memref<56x128xbf16, #tpu.memory_space<vmem>>) attributes {dimension_semantics = [#tpu.dimension_semantics<parallel>], iteration_bounds = array<i64: 1>, scalar_prefetch = 0 : i64, scratch_operands = 0 : i64, tpu.core_type = #tpu.core_type<tc>, window_params = [{transform_indices = @transform_0, window_bounds = array<i64: 4, 56, 150>}, {pipeline_mode = #tpu.pipeline_mode<synchronous>, transform_indices = @transform_1, window_bounds = array<i64: 150, 128>}, {pipeline_mode = #tpu.pipeline_mode<synchronous>, transform_indices = @transform_2, window_bounds = array<i64: 1, 128>}, {transform_indices = @transform_3, window_bounds = array<i64: 56, 128>}]} {
    %c0 = arith.constant 0 : index
    %c0_0 = arith.constant 0 : index
    %0 = vector.load %arg2[%c0, %c0_0] : memref<150x128xbf16, #tpu.memory_space<vmem>>, vector<150x128xbf16>
    %c0_1 = arith.constant 0 : index
    %c0_2 = arith.constant 0 : index
    %c0_3 = arith.constant 0 : index
    %1 = vector.load %arg1[%c0_1, %c0_2, %c0_3] : memref<4x56x150xbf16, #tpu.memory_space<vmem>>, vector<1x56x150xbf16>
    %2 = vector.shape_cast %1 : vector<1x56x150xbf16> to vector<56x150xbf16>
    %cst = arith.constant dense<0.000000e+00> : vector<56x128xf32>
    %3 = tpu.matmul %2, %0, %cst {dimension_numbers = #tpu.dot_dimension_numbers<[1], [0], [0], [1], [0, 0, 1, 1], [], []>} : vector<56x150xbf16>, vector<150x128xbf16>, vector<56x128xf32> -> vector<56x128xf32>
    %c1 = arith.constant 1 : index
    %c0_4 = arith.constant 0 : index
    %c0_5 = arith.constant 0 : index
    %4 = vector.load %arg1[%c1, %c0_4, %c0_5] : memref<4x56x150xbf16, #tpu.memory_space<vmem>>, vector<1x56x150xbf16>
    %5 = vector.shape_cast %4 : vector<1x56x150xbf16> to vector<56x150xbf16>
    %cst_6 = arith.constant dense<0.000000e+00> : vector<56x128xf32>
    %6 = tpu.matmul %5, %0, %cst_6 {dimension_numbers = #tpu.dot_dimension_numbers<[1], [0], [0], [1], [0, 0, 1, 1], [], []>} : vector<56x150xbf16>, vector<150x128xbf16>, vector<56x128xf32> -> vector<56x128xf32>
    %7 = arith.maximumf %3, %6 : vector<56x128xf32>
    %c2 = arith.constant 2 : index
    %c0_7 = arith.constant 0 : index
    %c0_8 = arith.constant 0 : index
    %8 = vector.load %arg1[%c2, %c0_7, %c0_8] : memref<4x56x150xbf16, #tpu.memory_space<vmem>>, vector<1x56x150xbf16>
    %9 = vector.shape_cast %8 : vector<1x56x150xbf16> to vector<56x150xbf16>
    %cst_9 = arith.constant dense<0.000000e+00> : vector<56x128xf32>
    %10 = tpu.matmul %9, %0, %cst_9 {dimension_numbers = #tpu.dot_dimension_numbers<[1], [0], [0], [1], [0, 0, 1, 1], [], []>} : vector<56x150xbf16>, vector<150x128xbf16>, vector<56x128xf32> -> vector<56x128xf32>
    %11 = arith.maximumf %7, %10 : vector<56x128xf32>
    %c3 = arith.constant 3 : index
    %c0_10 = arith.constant 0 : index
    %c0_11 = arith.constant 0 : index
    %12 = vector.load %arg1[%c3, %c0_10, %c0_11] : memref<4x56x150xbf16, #tpu.memory_space<vmem>>, vector<1x56x150xbf16>
    %13 = vector.shape_cast %12 : vector<1x56x150xbf16> to vector<56x150xbf16>
    %cst_12 = arith.constant dense<0.000000e+00> : vector<56x128xf32>
    %14 = tpu.matmul %13, %0, %cst_12 {dimension_numbers = #tpu.dot_dimension_numbers<[1], [0], [0], [1], [0, 0, 1, 1], [], []>} : vector<56x150xbf16>, vector<150x128xbf16>, vector<56x128xf32> -> vector<56x128xf32>
    %15 = arith.maximumf %11, %14 : vector<56x128xf32>
    %c0_13 = arith.constant 0 : index
    %c0_14 = arith.constant 0 : index
    %16 = vector.load %arg3[%c0_13, %c0_14] : memref<1x128xf32, #tpu.memory_space<vmem>>, vector<1x128xf32>
    %17 = vector.broadcast %16 : vector<1x128xf32> to vector<56x128xf32>
    %18 = arith.addf %15, %17 : vector<56x128xf32>
    %cst_15 = arith.constant 0.000000e+00 : f32
    %19 = vector.broadcast %cst_15 : f32 to vector<56x128xf32>
    %20 = arith.maximumf %18, %19 : vector<56x128xf32>
    %21 = arith.truncf %20 : vector<56x128xf32> to vector<56x128xbf16>
    %c0_16 = arith.constant 0 : index
    %c0_17 = arith.constant 0 : index
    %22 = vector.load %arg4[%c0_16, %c0_17] : memref<56x128xbf16, #tpu.memory_space<vmem>>, vector<56x128xbf16>
    tpu.vector_store %arg4[%c0_16, %c0_17], %21 {strides = array<i32>} : memref<56x128xbf16, #tpu.memory_space<vmem>>, vector<56x128xbf16>,
    return
  }
  func.func @transform_0(%arg0: i32) -> (i32, i32, i32) {
    %c0_i32 = arith.constant 0 : i32
    %c0_i32_0 = arith.constant 0 : i32
    %c0_i32_1 = arith.constant 0 : i32
    return %c0_i32, %arg0, %c0_i32_0 : i32, i32, i32
  }
  func.func @transform_1(%arg0: i32) -> (i32, i32) {
    %c0_i32 = arith.constant 0 : i32
    %c0_i32_0 = arith.constant 0 : i32
    %c0_i32_1 = arith.constant 0 : i32
    return %c0_i32, %c0_i32_0 : i32, i32
  }
  func.func @transform_2(%arg0: i32) -> (i32, i32) {
    %c0_i32 = arith.constant 0 : i32
    %c0_i32_0 = arith.constant 0 : i32
    %c0_i32_1 = arith.constant 0 : i32
    return %c0_i32, %c0_i32_0 : i32, i32
  }
  func.func @transform_3(%arg0: i32) -> (i32, i32) {
    %c0_i32 = arith.constant 0 : i32
    %c0_i32_0 = arith.constant 0 : i32
    return %arg0, %c0_i32 : i32, i32
  }
}

module attributes {stable_mosaic.version = 11 : i64} {
  func.func @_fc_fused_kernel(%arg0: i32, %arg1: memref<8x400xbf16, #tpu.memory_space<vmem>>, %arg2: memref<400x128xbf16, #tpu.memory_space<vmem>>, %arg3: memref<1x128xf32, #tpu.memory_space<vmem>>, %arg4: memref<128x128xbf16, #tpu.memory_space<vmem>>, %arg5: memref<1x128xf32, #tpu.memory_space<vmem>>, %arg6: memref<128x128xbf16, #tpu.memory_space<vmem>>, %arg7: memref<1x128xf32, #tpu.memory_space<vmem>>, %arg8: memref<8x128xf32, #tpu.memory_space<vmem>>) attributes {dimension_semantics = [#tpu.dimension_semantics<parallel>], iteration_bounds = array<i64: 1>, scalar_prefetch = 0 : i64, scratch_operands = 0 : i64, tpu.core_type = #tpu.core_type<tc>, window_params = [{transform_indices = @transform_0, window_bounds = array<i64: 8, 400>}, {pipeline_mode = #tpu.pipeline_mode<synchronous>, transform_indices = @transform_1, window_bounds = array<i64: 400, 128>}, {pipeline_mode = #tpu.pipeline_mode<synchronous>, transform_indices = @transform_2, window_bounds = array<i64: 1, 128>}, {pipeline_mode = #tpu.pipeline_mode<synchronous>, transform_indices = @transform_3, window_bounds = array<i64: 128, 128>}, {pipeline_mode = #tpu.pipeline_mode<synchronous>, transform_indices = @transform_4, window_bounds = array<i64: 1, 128>}, {pipeline_mode = #tpu.pipeline_mode<synchronous>, transform_indices = @transform_5, window_bounds = array<i64: 128, 128>}, {pipeline_mode = #tpu.pipeline_mode<synchronous>, transform_indices = @transform_6, window_bounds = array<i64: 1, 128>}, {transform_indices = @transform_7, window_bounds = array<i64: 8, 128>}]} {
    %c0 = arith.constant 0 : index
    %c0_0 = arith.constant 0 : index
    %0 = vector.load %arg1[%c0, %c0_0] : memref<8x400xbf16, #tpu.memory_space<vmem>>, vector<8x400xbf16>
    %c0_1 = arith.constant 0 : index
    %c0_2 = arith.constant 0 : index
    %1 = vector.load %arg2[%c0_1, %c0_2] : memref<400x128xbf16, #tpu.memory_space<vmem>>, vector<400x128xbf16>
    %cst = arith.constant dense<0.000000e+00> : vector<8x128xf32>
    %2 = tpu.matmul %0, %1, %cst {dimension_numbers = #tpu.dot_dimension_numbers<[1], [0], [0], [1], [0, 0, 1, 1], [], []>} : vector<8x400xbf16>, vector<400x128xbf16>, vector<8x128xf32> -> vector<8x128xf32>
    %c0_3 = arith.constant 0 : index
    %c0_4 = arith.constant 0 : index
    %3 = vector.load %arg3[%c0_3, %c0_4] : memref<1x128xf32, #tpu.memory_space<vmem>>, vector<1x128xf32>
    %4 = vector.broadcast %3 : vector<1x128xf32> to vector<8x128xf32>
    %5 = arith.addf %2, %4 : vector<8x128xf32>
    %cst_5 = arith.constant 0.000000e+00 : f32
    %6 = vector.broadcast %cst_5 : f32 to vector<8x128xf32>
    %7 = arith.maximumf %5, %6 : vector<8x128xf32>
    %8 = arith.truncf %7 : vector<8x128xf32> to vector<8x128xbf16>
    %c0_6 = arith.constant 0 : index
    %c0_7 = arith.constant 0 : index
    %9 = vector.load %arg4[%c0_6, %c0_7] : memref<128x128xbf16, #tpu.memory_space<vmem>>, vector<128x128xbf16>
    %cst_8 = arith.constant dense<0.000000e+00> : vector<8x128xf32>
    %10 = tpu.matmul %8, %9, %cst_8 {dimension_numbers = #tpu.dot_dimension_numbers<[1], [0], [0], [1], [0, 0, 1, 1], [], []>} : vector<8x128xbf16>, vector<128x128xbf16>, vector<8x128xf32> -> vector<8x128xf32>
    %c0_9 = arith.constant 0 : index
    %c0_10 = arith.constant 0 : index
    %11 = vector.load %arg5[%c0_9, %c0_10] : memref<1x128xf32, #tpu.memory_space<vmem>>, vector<1x128xf32>
    %12 = vector.broadcast %11 : vector<1x128xf32> to vector<8x128xf32>
    %13 = arith.addf %10, %12 : vector<8x128xf32>
    %cst_11 = arith.constant 0.000000e+00 : f32
    %14 = vector.broadcast %cst_11 : f32 to vector<8x128xf32>
    %15 = arith.maximumf %13, %14 : vector<8x128xf32>
    %16 = arith.truncf %15 : vector<8x128xf32> to vector<8x128xbf16>
    %c0_12 = arith.constant 0 : index
    %c0_13 = arith.constant 0 : index
    %17 = vector.load %arg6[%c0_12, %c0_13] : memref<128x128xbf16, #tpu.memory_space<vmem>>, vector<128x128xbf16>
    %cst_14 = arith.constant dense<0.000000e+00> : vector<8x128xf32>
    %18 = tpu.matmul %16, %17, %cst_14 {dimension_numbers = #tpu.dot_dimension_numbers<[1], [0], [0], [1], [0, 0, 1, 1], [], []>} : vector<8x128xbf16>, vector<128x128xbf16>, vector<8x128xf32> -> vector<8x128xf32>
    %c0_15 = arith.constant 0 : index
    %c0_16 = arith.constant 0 : index
    %19 = vector.load %arg7[%c0_15, %c0_16] : memref<1x128xf32, #tpu.memory_space<vmem>>, vector<1x128xf32>
    %20 = vector.broadcast %19 : vector<1x128xf32> to vector<8x128xf32>
    %21 = arith.addf %18, %20 : vector<8x128xf32>
    %c0_17 = arith.constant 0 : index
    %c0_18 = arith.constant 0 : index
    %22 = vector.load %arg8[%c0_17, %c0_18] : memref<8x128xf32, #tpu.memory_space<vmem>>, vector<8x128xf32>
    tpu.vector_store %arg8[%c0_17, %c0_18], %21 {strides = array<i32>} : memref<8x128xf32, #tpu.memory_space<vmem>>, vector<8x128xf32>,
    return
  }
  func.func @transform_0(%arg0: i32) -> (i32, i32) {
    %c0_i32 = arith.constant 0 : i32
    %c0_i32_0 = arith.constant 0 : i32
    return %arg0, %c0_i32 : i32, i32
  }
  func.func @transform_1(%arg0: i32) -> (i32, i32) {
    %c0_i32 = arith.constant 0 : i32
    %c0_i32_0 = arith.constant 0 : i32
    %c0_i32_1 = arith.constant 0 : i32
    return %c0_i32, %c0_i32_0 : i32, i32
  }
  func.func @transform_2(%arg0: i32) -> (i32, i32) {
    %c0_i32 = arith.constant 0 : i32
    %c0_i32_0 = arith.constant 0 : i32
    %c0_i32_1 = arith.constant 0 : i32
    return %c0_i32, %c0_i32_0 : i32, i32
  }
  func.func @transform_3(%arg0: i32) -> (i32, i32) {
    %c0_i32 = arith.constant 0 : i32
    %c0_i32_0 = arith.constant 0 : i32
    %c0_i32_1 = arith.constant 0 : i32
    return %c0_i32, %c0_i32_0 : i32, i32
  }
  func.func @transform_4(%arg0: i32) -> (i32, i32) {
    %c0_i32 = arith.constant 0 : i32
    %c0_i32_0 = arith.constant 0 : i32
    %c0_i32_1 = arith.constant 0 : i32
    return %c0_i32, %c0_i32_0 : i32, i32
  }
  func.func @transform_5(%arg0: i32) -> (i32, i32) {
    %c0_i32 = arith.constant 0 : i32
    %c0_i32_0 = arith.constant 0 : i32
    %c0_i32_1 = arith.constant 0 : i32
    return %c0_i32, %c0_i32_0 : i32, i32
  }
  func.func @transform_6(%arg0: i32) -> (i32, i32) {
    %c0_i32 = arith.constant 0 : i32
    %c0_i32_0 = arith.constant 0 : i32
    %c0_i32_1 = arith.constant 0 : i32
    return %c0_i32, %c0_i32_0 : i32, i32
  }
  func.func @transform_7(%arg0: i32) -> (i32, i32) {
    %c0_i32 = arith.constant 0 : i32
    %c0_i32_0 = arith.constant 0 : i32
    return %arg0, %c0_i32 : i32, i32
  }
}

</mosaic_0001>

<llo_original>
// kernel: lenet_forward.3
$region0: #{lenet_forward.3}
  #allocation0 [shape = 'u32[]', space=smem, size = 0x4, offset = 0x4, fixed_abs, tag = 'smem constant byte address 0x4 - core index']
  #allocation1 [shape = 'u32[144,128]{1,0:T(1,128)}', space=vmem, size = 0x12000, scoped, tag = 'internal scratch']
  %s0 = inlined_call_operand.vmem [shape: bf16[4,392,75], index: 0, kind: input, shape index: {}]
  %s1 = inlined_call_operand.vmem [shape: bf16[75,128], index: 1, kind: input, shape index: {}]
  %s2 = inlined_call_operand.vmem [shape: f32[1,128], index: 2, kind: input, shape index: {}]
  %s3 = inlined_call_operand.vmem [shape: bf16[392,128], index: 3, kind: output, shape index: {}]
  %s4 = sld [smem:[#allocation0]]
  $region22: #{lenet_forward.3} parent=0
    _
  %s6 = ssub.s32 1, %s4
  %s7 = scalar_select 0, %s6, %s4
  // Predicated region
  $region2: #{lenet_forward.3} parent=0 // pred_check
    _
  $region3: #{lenet_forward.3} parent=0 // pred_check_branch
    %9 = sbr.rel (0) target = $region5
  $region4: #{lenet_forward.3} parent=0 // pred_region
    _
  $region5: #{lenet_forward.3} parent=0 // pred_fallthru
    _
  // Predicated region
  $region6: #{lenet_forward.3} parent=0 // pred_check
    _
  $region7: #{lenet_forward.3} parent=0 // pred_check_branch
    %11 = sbr.rel (0) target = $region9
  $region8: #{lenet_forward.3} parent=0 // pred_region
    _
  $region9: #{lenet_forward.3} parent=0 // pred_fallthru
    _
  // Predicated region
  $region10: #{lenet_forward.3} parent=0 // pred_check
    _
  $region11: #{lenet_forward.3} parent=0 // pred_check_branch
    %13 = sbr.rel (0) target = $region13
  $region12: #{lenet_forward.3} parent=0 // pred_region
    _
  $region13: #{lenet_forward.3} parent=0 // pred_fallthru
    _
  %v15 = vld [vmem:[%s1] sm:$0xf]
  %v16 = vld [vmem:[%s1 + $0x4] sm:$0xf]
  %v17 = vld [vmem:[%s1 + $0x8] sm:$0xf]
  %v18 = vld [vmem:[%s1 + $0xc] sm:$0xf]
  %v19 = vld [vmem:[%s1 + $0x10] sm:$0xf]
  %v20 = vld [vmem:[%s1 + $0x14] sm:$0xf]
  %v21 = vld [vmem:[%s1 + $0x18] sm:$0xf]
  %v22 = vld [vmem:[%s1 + $0x1c] sm:$0xf]
  %v23 = vld [vmem:[%s1 + $0x20] sm:$0xf]
  %v24 = vld [vmem:[%s1 + $0x24] sm:$0x3]
  %v25 = vld [vmem:[%s0] sm:$0xf]
  %v26 = vld [vmem:[%s0 + $0x4] sm:$0xf]
  %v27 = vld [vmem:[%s0 + $0x8] sm:$0xf]
  %v28 = vld [vmem:[%s0 + $0xc] sm:$0xf]
  %v29 = vld [vmem:[%s0 + $0x10] sm:$0xf]
  %v30 = vld [vmem:[%s0 + $0x14] sm:$0xf]
  %v31 = vld [vmem:[%s0 + $0x18] sm:$0xf]
  %v32 = vld [vmem:[%s0 + $0x1c] sm:$0xf]
  %v33 = vld [vmem:[%s0 + $0x20] sm:$0xf]
  %v34 = vld [vmem:[%s0 + $0x24] sm:$0xf]
  %v35 = vld [vmem:[%s0 + $0x28] sm:$0xf]
  %v36 = vld [vmem:[%s0 + $0x2c] sm:$0xf]
  %v37 = vld [vmem:[%s0 + $0x30] sm:$0xf]
  %v38 = vld [vmem:[%s0 + $0x34] sm:$0xf]
  %v39 = vld [vmem:[%s0 + $0x38] sm:$0xf]
  %v40 = vld [vmem:[%s0 + $0x3c] sm:$0xf]
  %v41 = vld [vmem:[%s0 + $0x40] sm:$0xf]
  %v42 = vld [vmem:[%s0 + $0x44] sm:$0xf]
  %v43 = vld [vmem:[%s0 + $0x48] sm:$0xf]
  %v44 = vld [vmem:[%s0 + $0x4c] sm:$0xf]
  %v45 = vld [vmem:[%s0 + $0x50] sm:$0xf]
  %v46 = vld [vmem:[%s0 + $0x54] sm:$0xf]
  %v47 = vld [vmem:[%s0 + $0x58] sm:$0xf]
  %v48 = vld [vmem:[%s0 + $0x5c] sm:$0xf]
  %v49 = vld [vmem:[%s0 + $0x60] sm:$0xf]
  %v50 = vld [vmem:[%s0 + $0x64] sm:$0xf]
  %v51 = vld [vmem:[%s0 + $0x68] sm:$0xf]
  %v52 = vld [vmem:[%s0 + $0x6c] sm:$0xf]
  %v53 = vld [vmem:[%s0 + $0x70] sm:$0xf]
  %v54 = vld [vmem:[%s0 + $0x74] sm:$0xf]
  %v55 = vld [vmem:[%s0 + $0x78] sm:$0xf]
  %v56 = vld [vmem:[%s0 + $0x7c] sm:$0xf]
  %v57 = vld [vmem:[%s0 + $0x80] sm:$0xf]
  %v58 = vld [vmem:[%s0 + $0x84] sm:$0xf]
  %v59 = vld [vmem:[%s0 + $0x88] sm:$0xf]
  %v60 = vld [vmem:[%s0 + $0x8c] sm:$0xf]
  %v61 = vld [vmem:[%s0 + $0x90] sm:$0xf]
  %v62 = vld [vmem:[%s0 + $0x94] sm:$0xf]
  %v63 = vld [vmem:[%s0 + $0x98] sm:$0xf]
  %v64 = vld [vmem:[%s0 + $0x9c] sm:$0xf]
  %v65 = vld [vmem:[%s0 + $0xa0] sm:$0xf]
  %v66 = vld [vmem:[%s0 + $0xa4] sm:$0xf]
  %v67 = vld [vmem:[%s0 + $0xa8] sm:$0xf]
  %v68 = vld [vmem:[%s0 + $0xac] sm:$0xf]
  %v69 = vld [vmem:[%s0 + $0xb0] sm:$0xf]
  %v70 = vld [vmem:[%s0 + $0xb4] sm:$0xf]
  %v71 = vld [vmem:[%s0 + $0xb8] sm:$0xf]
  %v72 = vld [vmem:[%s0 + $0xbc] sm:$0xf]
  %v73 = vld [vmem:[%s0 + $0xc0] sm:$0xf]
  %v123 = vunpack.c.l.b16 %v25
  %v124 = vunpack.c.l.b16 %v26
  %v125 = vunpack.c.l.b16 %v27
  %v126 = vunpack.c.l.b16 %v28
  %v127 = vunpack.c.l.b16 %v29
  %v128 = vunpack.c.l.b16 %v30
  %v129 = vunpack.c.l.b16 %v31
  %v130 = vunpack.c.l.b16 %v32
  %v131 = vunpack.c.l.b16 %v33
  %v132 = vunpack.c.l.b16 %v34
  %v133 = vunpack.c.l.b16 %v35
  %v134 = vunpack.c.l.b16 %v36
  %v135 = vunpack.c.l.b16 %v37
  %v136 = vunpack.c.l.b16 %v38
  %v137 = vunpack.c.l.b16 %v39
  %v138 = vunpack.c.l.b16 %v40
  %v139 = vunpack.c.l.b16 %v41
  %v140 = vunpack.c.l.b16 %v42
  %v141 = vunpack.c.l.b16 %v43
  %v142 = vunpack.c.l.b16 %v44
  %v143 = vunpack.c.l.b16 %v45
  %v144 = vunpack.c.l.b16 %v46
  %v145 = vunpack.c.l.b16 %v47
  %v146 = vunpack.c.l.b16 %v48
  %v147 = vunpack.c.l.b16 %v49
  %v148 = vunpack.c.l.b16 %v50
  %v149 = vunpack.c.l.b16 %v51
  %v150 = vunpack.c.l.b16 %v52
  %v151 = vunpack.c.l.b16 %v53
  %v152 = vunpack.c.l.b16 %v54
  %v153 = vunpack.c.l.b16 %v55
  %v154 = vunpack.c.l.b16 %v56
  %v155 = vunpack.c.l.b16 %v57
  %v156 = vunpack.c.l.b16 %v58
  %v157 = vunpack.c.l.b16 %v59
  %v158 = vunpack.c.l.b16 %v60
  %v159 = vunpack.c.l.b16 %v61
  %v160 = vunpack.c.l.b16 %v62
  %v161 = vunpack.c.l.b16 %v63
  %v162 = vunpack.c.l.b16 %v64
  %v163 = vunpack.c.l.b16 %v65
  %v164 = vunpack.c.l.b16 %v66
  %v165 = vunpack.c.l.b16 %v67
  %v166 = vunpack.c.l.b16 %v68
  %v167 = vunpack.c.l.b16 %v69
  %v168 = vunpack.c.l.b16 %v70
  %v169 = vunpack.c.l.b16 %v71
  %v170 = vunpack.c.l.b16 %v72
  %v171 = vunpack.c.l.b16 %v73
  %v172 = vpack.c.b16 %v124, %v123
  %v173 = vpack.c.b16 %v126, %v125
  %v174 = vpack.c.b16 %v128, %v127
  %v175 = vpack.c.b16 %v130, %v129
  %v176 = vpack.c.b16 %v132, %v131
  %v177 = vpack.c.b16 %v134, %v133
  %v178 = vpack.c.b16 %v136, %v135
  %v179 = vpack.c.b16 %v138, %v137
  %v180 = vpack.c.b16 %v140, %v139
  %v181 = vpack.c.b16 %v142, %v141
  %v182 = vpack.c.b16 %v144, %v143
  %v183 = vpack.c.b16 %v146, %v145
  %v184 = vpack.c.b16 %v148, %v147
  %v185 = vpack.c.b16 %v150, %v149
  %v186 = vpack.c.b16 %v152, %v151
  %v187 = vpack.c.b16 %v154, %v153
  %v188 = vpack.c.b16 %v156, %v155
  %v189 = vpack.c.b16 %v158, %v157
  %v190 = vpack.c.b16 %v160, %v159
  %v191 = vpack.c.b16 %v162, %v161
  %v192 = vpack.c.b16 %v164, %v163
  %v193 = vpack.c.b16 %v166, %v165
  %v194 = vpack.c.b16 %v168, %v167
  %v195 = vpack.c.b16 %v170, %v169
  %v196 = vpack.c.b16 %v171, %v171
  %v207 = vunpack.c.l.b16 %v15
  %v208 = vunpack.c.l.b16 %v16
  %v209 = vunpack.c.l.b16 %v17
  %v210 = vunpack.c.l.b16 %v18
  %v211 = vunpack.c.l.b16 %v19
  %v212 = vunpack.c.l.b16 %v20
  %v213 = vunpack.c.l.b16 %v21
  %v214 = vunpack.c.l.b16 %v22
  %v215 = vunpack.c.l.b16 %v23
  %v216 = vunpack.c.l.b16 %v24
  %v217 = vpack.c.b16 %v208, %v207
  %v218 = vpack.c.b16 %v210, %v209
  %v219 = vpack.c.b16 %v212, %v211
  %v220 = vpack.c.b16 %v214, %v213
  %v221 = vpack.c.b16 %v216, %v215
  %vm226 = vcmask 613376
  %v228 = vsel %vm226, %v172, 0
  %v231 = vsel %vm226, %v173, 0
  %v234 = vsel %vm226, %v174, 0
  %v237 = vsel %vm226, %v175, 0
  %v240 = vsel %vm226, %v176, 0
  %v243 = vsel %vm226, %v177, 0
  %v246 = vsel %vm226, %v178, 0
  %v249 = vsel %vm226, %v179, 0
  %v252 = vsel %vm226, %v180, 0
  %v255 = vsel %vm226, %v181, 0
  %v258 = vsel %vm226, %v182, 0
  %v261 = vsel %vm226, %v183, 0
  %v264 = vsel %vm226, %v184, 0
  %v267 = vsel %vm226, %v185, 0
  %v270 = vsel %vm226, %v186, 0
  %v273 = vsel %vm226, %v187, 0
  %v276 = vsel %vm226, %v188, 0
  %v279 = vsel %vm226, %v189, 0
  %v282 = vsel %vm226, %v190, 0
  %v285 = vsel %vm226, %v191, 0
  %v288 = vsel %vm226, %v192, 0
  %v291 = vsel %vm226, %v193, 0
  %v294 = vsel %vm226, %v194, 0
  %v297 = vsel %vm226, %v195, 0
  %v300 = vsel %vm226, %v196, 0
  %vm302 = vcmask 1044480
  %vm303 = vcmask 1045504
  %v304 = vsel %vm302, 4294967295, 65535
  %v305 = vsel %vm303, %v304, 0
  %v307 = vand.u32 %v221, %v305
  %309 = vmatprep.subr.bf16.mxu0 0
  %310 = vmatpush1.bf16.msra.mxu0 %v217
  %311 = vmatprep.subr.bf16.mxu0 0
  %312 = vmatpush1.bf16.msra.mxu0 %v218
  %313 = vmatprep.subr.bf16.mxu0 0
  %314 = vmatpush1.bf16.msra.mxu0 %v219
  %315 = vmatprep.subr.bf16.mxu0 0
  %316 = vmatpush1.bf16.msra.mxu0 %v220
  %317 = vmatprep.subr.bf16.mxu0 0
  %318 = vmatpush1.bf16.msra.mxu0 %v307
  %319 = vmatprep.subr.bf16.mxu0 0
  %320 = vmatpush1.bf16.msra.mxu0 0
  %321 = vmatprep.subr.bf16.mxu0 0
  %322 = vmatpush1.bf16.msra.mxu0 0
  %323 = vmatprep.subr.bf16.mxu0 0
  %324 = vmatpush1.bf16.msra.mxu0 0
  %325 = vmatprep.subr.bf16.mxu0 0
  %326 = vmatpush1.bf16.msra.mxu0 0
  %327 = vmatprep.subr.bf16.mxu0 0
  %328 = vmatpush1.bf16.msra.mxu0 0
  %329 = vmatprep.subr.bf16.mxu0 0
  %330 = vmatpush1.bf16.msra.mxu0 0
  %331 = vmatprep.subr.bf16.mxu0 0
  %332 = vmatpush1.bf16.msra.mxu0 0
  %333 = vmatprep.subr.bf16.mxu0 0
  %334 = vmatpush1.bf16.msra.mxu0 0
  %335 = vmatprep.subr.bf16.mxu0 0
  %336 = vmatpush1.bf16.msra.mxu0 0
  %337 = vmatprep.subr.bf16.mxu0 0
  %338 = vmatpush1.bf16.msra.mxu0 0
  %339 = vmatprep.subr.bf16.mxu0 0
  %340 = vmatpush1.bf16.msra.mxu0 0
  %341 = vmatprep.mubr.bf16.mxu0 0
  %342 = vmatmul.mubr.bf16.gmra.mrb[0].mxu0 %v228
  %v343 = vpop.f32.mrb[0].mxu0
  %v344 = vadd.f32 0.0, %v343
  %v345 = vpop.f32.mrb[0].mxu0
  %v346 = vpop.f32.mrb[0].mxu0
  %v347 = vadd.f32 0.0, %v346
  %v348 = vpop.f32.mrb[0].mxu0
  %349 = vmatprep.mubr.bf16.mxu0 0
  %350 = vmatmul.mubr.bf16.gmra.mrb[0].mxu0 %v231
  %v351 = vpop.f32.mrb[0].mxu0
  %v352 = vadd.f32 0.0, %v351
  %v353 = vpop.f32.mrb[0].mxu0
  %v354 = vpop.f32.mrb[0].mxu0
  %v355 = vadd.f32 0.0, %v354
  %v356 = vpop.f32.mrb[0].mxu0
  %357 = vmatprep.mubr.bf16.mxu0 0
  %358 = vmatmul.mubr.bf16.gmra.mrb[0].mxu0 %v234
  %v359 = vpop.f32.mrb[0].mxu0
  %v360 = vadd.f32 0.0, %v359
  %v361 = vpop.f32.mrb[0].mxu0
  %v362 = vpop.f32.mrb[0].mxu0
  %v363 = vadd.f32 0.0, %v362
  %v364 = vpop.f32.mrb[0].mxu0
  %365 = vmatprep.mubr.bf16.mxu0 0
  %366 = vmatmul.mubr.bf16.gmra.mrb[0].mxu0 %v237
  %v367 = vpop.f32.mrb[0].mxu0
  %v368 = vadd.f32 0.0, %v367
  %v369 = vpop.f32.mrb[0].mxu0
  %v370 = vpop.f32.mrb[0].mxu0
  %v371 = vadd.f32 0.0, %v370
  %v372 = vpop.f32.mrb[0].mxu0
  %373 = vmatprep.mubr.bf16.mxu0 0
  %374 = vmatmul.mubr.bf16.gmra.mrb[0].mxu0 %v240
  %v375 = vpop.f32.mrb[0].mxu0
  %v376 = vadd.f32 0.0, %v375
  %v377 = vpop.f32.mrb[0].mxu0
  %v378 = vpop.f32.mrb[0].mxu0
  %v379 = vadd.f32 0.0, %v378
  %v380 = vpop.f32.mrb[0].mxu0
  %381 = vmatprep.mubr.bf16.mxu0 0
  %382 = vmatmul.mubr.bf16.gmra.mrb[0].mxu0 %v243
  %v383 = vpop.f32.mrb[0].mxu0
  %v384 = vadd.f32 0.0, %v383
  %v385 = vpop.f32.mrb[0].mxu0
  %v386 = vpop.f32.mrb[0].mxu0
  %v387 = vadd.f32 0.0, %v386
  %v388 = vpop.f32.mrb[0].mxu0
  %389 = vmatprep.mubr.bf16.mxu0 0
  %390 = vmatmul.mubr.bf16.gmra.mrb[0].mxu0 %v246
  %v391 = vpop.f32.mrb[0].mxu0
  %v392 = vadd.f32 0.0, %v391
  %v393 = vpop.f32.mrb[0].mxu0
  %v394 = vpop.f32.mrb[0].mxu0
  %v395 = vadd.f32 0.0, %v394
  %v396 = vpop.f32.mrb[0].mxu0
  %397 = vmatprep.mubr.bf16.mxu0 0
  %398 = vmatmul.mubr.bf16.gmra.mrb[0].mxu0 %v249
  %v399 = vpop.f32.mrb[0].mxu0
  %v400 = vadd.f32 0.0, %v399
  %v401 = vpop.f32.mrb[0].mxu0
  %v402 = vpop.f32.mrb[0].mxu0
  %v403 = vadd.f32 0.0, %v402
  %v404 = vpop.f32.mrb[0].mxu0
  %405 = vmatprep.mubr.bf16.mxu0 0
  %406 = vmatmul.mubr.bf16.gmra.mrb[0].mxu0 %v252
  %v407 = vpop.f32.mrb[0].mxu0
  %v408 = vadd.f32 0.0, %v407
  %v409 = vpop.f32.mrb[0].mxu0
  %v410 = vpop.f32.mrb[0].mxu0
  %v411 = vadd.f32 0.0, %v410
  %v412 = vpop.f32.mrb[0].mxu0
  %413 = vmatprep.mubr.bf16.mxu0 0
  %414 = vmatmul.mubr.bf16.gmra.mrb[0].mxu0 %v255
  %v415 = vpop.f32.mrb[0].mxu0
  %v416 = vadd.f32 0.0, %v415
  %v417 = vpop.f32.mrb[0].mxu0
  %v418 = vpop.f32.mrb[0].mxu0
  %v419 = vadd.f32 0.0, %v418
  %v420 = vpop.f32.mrb[0].mxu0
  %421 = vmatprep.mubr.bf16.mxu0 0
  %422 = vmatmul.mubr.bf16.gmra.mrb[0].mxu0 %v258
  %v423 = vpop.f32.mrb[0].mxu0
  %v424 = vadd.f32 0.0, %v423
  %v425 = vpop.f32.mrb[0].mxu0
  %v426 = vpop.f32.mrb[0].mxu0
  %v427 = vadd.f32 0.0, %v426
  %v428 = vpop.f32.mrb[0].mxu0
  %429 = vmatprep.mubr.bf16.mxu0 0
  %430 = vmatmul.mubr.bf16.gmra.mrb[0].mxu0 %v261
  %v431 = vpop.f32.mrb[0].mxu0
  %v432 = vadd.f32 0.0, %v431
  %v433 = vpop.f32.mrb[0].mxu0
  %v434 = vpop.f32.mrb[0].mxu0
  %v435 = vadd.f32 0.0, %v434
  %v436 = vpop.f32.mrb[0].mxu0
  %437 = vmatprep.mubr.bf16.mxu0 0
  %438 = vmatmul.mubr.bf16.gmra.mrb[0].mxu0 %v264
  %v439 = vpop.f32.mrb[0].mxu0
  %v440 = vadd.f32 0.0, %v439
  %v441 = vpop.f32.mrb[0].mxu0
  %v442 = vpop.f32.mrb[0].mxu0
  %v443 = vadd.f32 0.0, %v442
  %v444 = vpop.f32.mrb[0].mxu0
  %445 = vmatprep.mubr.bf16.mxu0 0
  %446 = vmatmul.mubr.bf16.gmra.mrb[0].mxu0 %v267
  %v447 = vpop.f32.mrb[0].mxu0
  %v448 = vadd.f32 0.0, %v447
  %v449 = vpop.f32.mrb[0].mxu0
  %v450 = vpop.f32.mrb[0].mxu0
  %v451 = vadd.f32 0.0, %v450
  %v452 = vpop.f32.mrb[0].mxu0
  %453 = vmatprep.mubr.bf16.mxu0 0
  %454 = vmatmul.mubr.bf16.gmra.mrb[0].mxu0 %v270
  %v455 = vpop.f32.mrb[0].mxu0
  %v456 = vadd.f32 0.0, %v455
  %v457 = vpop.f32.mrb[0].mxu0
  %v458 = vpop.f32.mrb[0].mxu0
  %v459 = vadd.f32 0.0, %v458
  %v460 = vpop.f32.mrb[0].mxu0
  %461 = vmatprep.mubr.bf16.mxu0 0
  %462 = vmatmul.mubr.bf16.gmra.mrb[0].mxu0 %v273
  %v463 = vpop.f32.mrb[0].mxu0
  %v464 = vadd.f32 0.0, %v463
  %v465 = vpop.f32.mrb[0].mxu0
  %v466 = vpop.f32.mrb[0].mxu0
  %v467 = vadd.f32 0.0, %v466
  %v468 = vpop.f32.mrb[0].mxu0
  %469 = vmatprep.mubr.bf16.mxu0 0
  %470 = vmatmul.mubr.bf16.gmra.mrb[0].mxu0 %v276
  %v471 = vpop.f32.mrb[0].mxu0
  %v472 = vadd.f32 0.0, %v471
  %v473 = vpop.f32.mrb[0].mxu0
  %v474 = vpop.f32.mrb[0].mxu0
  %v475 = vadd.f32 0.0, %v474
  %v476 = vpop.f32.mrb[0].mxu0
  %477 = vmatprep.mubr.bf16.mxu0 0
  %478 = vmatmul.mubr.bf16.gmra.mrb[0].mxu0 %v279
  %v479 = vpop.f32.mrb[0].mxu0
  %v480 = vadd.f32 0.0, %v479
  %v481 = vpop.f32.mrb[0].mxu0
  %v482 = vpop.f32.mrb[0].mxu0
  %v483 = vadd.f32 0.0, %v482
  %v484 = vpop.f32.mrb[0].mxu0
  %485 = vmatprep.mubr.bf16.mxu0 0
  %486 = vmatmul.mubr.bf16.gmra.mrb[0].mxu0 %v282
  %v487 = vpop.f32.mrb[0].mxu0
  %v488 = vadd.f32 0.0, %v487
  %v489 = vpop.f32.mrb[0].mxu0
  %v490 = vpop.f32.mrb[0].mxu0
  %v491 = vadd.f32 0.0, %v490
  %v492 = vpop.f32.mrb[0].mxu0
  %493 = vmatprep.mubr.bf16.mxu0 0
  %494 = vmatmul.mubr.bf16.gmra.mrb[0].mxu0 %v285
  %v495 = vpop.f32.mrb[0].mxu0
  %v496 = vadd.f32 0.0, %v495
  %v497 = vpop.f32.mrb[0].mxu0
  %v498 = vpop.f32.mrb[0].mxu0
  %v499 = vadd.f32 0.0, %v498
  %v500 = vpop.f32.mrb[0].mxu0
  %501 = vmatprep.mubr.bf16.mxu0 0
  %502 = vmatmul.mubr.bf16.gmra.mrb[0].mxu0 %v288
  %v503 = vpop.f32.mrb[0].mxu0
  %v504 = vadd.f32 0.0, %v503
  %v505 = vpop.f32.mrb[0].mxu0
  %v506 = vpop.f32.mrb[0].mxu0
  %v507 = vadd.f32 0.0, %v506
  %v508 = vpop.f32.mrb[0].mxu0
  %509 = vmatprep.mubr.bf16.mxu0 0
  %510 = vmatmul.mubr.bf16.gmra.mrb[0].mxu0 %v291
  %v511 = vpop.f32.mrb[0].mxu0
  %v512 = vadd.f32 0.0, %v511
  %v513 = vpop.f32.mrb[0].mxu0
  %v514 = vpop.f32.mrb[0].mxu0
  %v515 = vadd.f32 0.0, %v514
  %v516 = vpop.f32.mrb[0].mxu0
  %517 = vmatprep.mubr.bf16.mxu0 0
  %518 = vmatmul.mubr.bf16.gmra.mrb[0].mxu0 %v294
  %v519 = vpop.f32.mrb[0].mxu0
  %v520 = vadd.f32 0.0, %v519
  %v521 = vpop.f32.mrb[0].mxu0
  %v522 = vpop.f32.mrb[0].mxu0
  %v523 = vadd.f32 0.0, %v522
  %v524 = vpop.f32.mrb[0].mxu0
  %525 = vmatprep.mubr.bf16.mxu0 0
  %526 = vmatmul.mubr.bf16.gmra.mrb[0].mxu0 %v297
  %v527 = vpop.f32.mrb[0].mxu0
  %v528 = vadd.f32 0.0, %v527
  %v529 = vpop.f32.mrb[0].mxu0
  %v530 = vpop.f32.mrb[0].mxu0
  %v531 = vadd.f32 0.0, %v530
  %v532 = vpop.f32.mrb[0].mxu0
  %533 = vmatprep.mubr.bf16.mxu0 0
  %534 = vmatmul.mubr.bf16.gmra.mrb[0].mxu0 %v300
  %v535 = vpop.f32.mrb[0].mxu0
  %v536 = vadd.f32 0.0, %v535
  %v537 = vpop.f32.mrb[0].mxu0
  %v538 = vpop.f32.mrb[0].mxu0
  %v539 = vpop.f32.mrb[0].mxu0
  %540 = vdwg.mxu0
  %s541 = scalar_lea.vmem %s0, 196
  %v542 = vld [vmem:[%s541] sm:$0xf]
  %v543 = vld [vmem:[%s541 + $0x4] sm:$0xf]
  %v544 = vld [vmem:[%s541 + $0x8] sm:$0xf]
  %v545 = vld [vmem:[%s541 + $0xc] sm:$0xf]
  %v546 = vld [vmem:[%s541 + $0x10] sm:$0xf]
  %v547 = vld [vmem:[%s541 + $0x14] sm:$0xf]
  %v548 = vld [vmem:[%s541 + $0x18] sm:$0xf]
  %v549 = vld [vmem:[%s541 + $0x1c] sm:$0xf]
  %v550 = vld [vmem:[%s541 + $0x20] sm:$0xf]
  %v551 = vld [vmem:[%s541 + $0x24] sm:$0xf]
  %v552 = vld [vmem:[%s541 + $0x28] sm:$0xf]
  %v553 = vld [vmem:[%s541 + $0x2c] sm:$0xf]
  %v554 = vld [vmem:[%s541 + $0x30] sm:$0xf]
  %v555 = vld [vmem:[%s541 + $0x34] sm:$0xf]
  %v556 = vld [vmem:[%s541 + $0x38] sm:$0xf]
  %v557 = vld [vmem:[%s541 + $0x3c] sm:$0xf]
  %v558 = vld [vmem:[%s541 + $0x40] sm:$0xf]
  %v559 = vld [vmem:[%s541 + $0x44] sm:$0xf]
  %v560 = vld [vmem:[%s541 + $0x48] sm:$0xf]
  %v561 = vld [vmem:[%s541 + $0x4c] sm:$0xf]
  %v562 = vld [vmem:[%s541 + $0x50] sm:$0xf]
  %v563 = vld [vmem:[%s541 + $0x54] sm:$0xf]
  %v564 = vld [vmem:[%s541 + $0x58] sm:$0xf]
  %v565 = vld [vmem:[%s541 + $0x5c] sm:$0xf]
  %v566 = vld [vmem:[%s541 + $0x60] sm:$0xf]
  %v567 = vld [vmem:[%s541 + $0x64] sm:$0xf]
  %v568 = vld [vmem:[%s541 + $0x68] sm:$0xf]
  %v569 = vld [vmem:[%s541 + $0x6c] sm:$0xf]
  %v570 = vld [vmem:[%s541 + $0x70] sm:$0xf]
  %v571 = vld [vmem:[%s541 + $0x74] sm:$0xf]
  %v572 = vld [vmem:[%s541 + $0x78] sm:$0xf]
  %v573 = vld [vmem:[%s541 + $0x7c] sm:$0xf]
  %v574 = vld [vmem:[%s541 + $0x80] sm:$0xf]
  %v575 = vld [vmem:[%s541 + $0x84] sm:$0xf]
  %v576 = vld [vmem:[%s541 + $0x88] sm:$0xf]
  %v577 = vld [vmem:[%s541 + $0x8c] sm:$0xf]
  %v578 = vld [vmem:[%s541 + $0x90] sm:$0xf]
  %v579 = vld [vmem:[%s541 + $0x94] sm:$0xf]
  %v580 = vld [vmem:[%s541 + $0x98] sm:$0xf]
  %v581 = vld [vmem:[%s541 + $0x9c] sm:$0xf]
  %v582 = vld [vmem:[%s541 + $0xa0] sm:$0xf]
  %v583 = vld [vmem:[%s541 + $0xa4] sm:$0xf]
  %v584 = vld [vmem:[%s541 + $0xa8] sm:$0xf]
  %v585 = vld [vmem:[%s541 + $0xac] sm:$0xf]
  %v586 = vld [vmem:[%s541 + $0xb0] sm:$0xf]
  %v587 = vld [vmem:[%s541 + $0xb4] sm:$0xf]
  %v588 = vld [vmem:[%s541 + $0xb8] sm:$0xf]
  %v589 = vld [vmem:[%s541 + $0xbc] sm:$0xf]
  %v590 = vld [vmem:[%s541 + $0xc0] sm:$0xf]
  %v640 = vunpack.c.l.b16 %v542
  %v641 = vunpack.c.l.b16 %v543
  %v642 = vunpack.c.l.b16 %v544
  %v643 = vunpack.c.l.b16 %v545
  %v644 = vunpack.c.l.b16 %v546
  %v645 = vunpack.c.l.b16 %v547
  %v646 = vunpack.c.l.b16 %v548
  %v647 = vunpack.c.l.b16 %v549
  %v648 = vunpack.c.l.b16 %v550
  %v649 = vunpack.c.l.b16 %v551
  %v650 = vunpack.c.l.b16 %v552
  %v651 = vunpack.c.l.b16 %v553
  %v652 = vunpack.c.l.b16 %v554
  %v653 = vunpack.c.l.b16 %v555
  %v654 = vunpack.c.l.b16 %v556
  %v655 = vunpack.c.l.b16 %v557
  %v656 = vunpack.c.l.b16 %v558
  %v657 = vunpack.c.l.b16 %v559
  %v658 = vunpack.c.l.b16 %v560
  %v659 = vunpack.c.l.b16 %v561
  %v660 = vunpack.c.l.b16 %v562
  %v661 = vunpack.c.l.b16 %v563
  %v662 = vunpack.c.l.b16 %v564
  %v663 = vunpack.c.l.b16 %v565
  %v664 = vunpack.c.l.b16 %v566
  %v665 = vunpack.c.l.b16 %v567
  %v666 = vunpack.c.l.b16 %v568
  %v667 = vunpack.c.l.b16 %v569
  %v668 = vunpack.c.l.b16 %v570
  %v669 = vunpack.c.l.b16 %v571
  %v670 = vunpack.c.l.b16 %v572
  %v671 = vunpack.c.l.b16 %v573
  %v672 = vunpack.c.l.b16 %v574
  %v673 = vunpack.c.l.b16 %v575
  %v674 = vunpack.c.l.b16 %v576
  %v675 = vunpack.c.l.b16 %v577
  %v676 = vunpack.c.l.b16 %v578
  %v677 = vunpack.c.l.b16 %v579
  %v678 = vunpack.c.l.b16 %v580
  %v679 = vunpack.c.l.b16 %v581
  %v680 = vunpack.c.l.b16 %v582
  %v681 = vunpack.c.l.b16 %v583
  %v682 = vunpack.c.l.b16 %v584
  %v683 = vunpack.c.l.b16 %v585
  %v684 = vunpack.c.l.b16 %v586
  %v685 = vunpack.c.l.b16 %v587
  %v686 = vunpack.c.l.b16 %v588
  %v687 = vunpack.c.l.b16 %v589
  %v688 = vunpack.c.l.b16 %v590
  %v689 = vpack.c.b16 %v641, %v640
  %v690 = vpack.c.b16 %v643, %v642
  %v691 = vpack.c.b16 %v645, %v644
  %v692 = vpack.c.b16 %v647, %v646
  %v693 = vpack.c.b16 %v649, %v648
  %v694 = vpack.c.b16 %v651, %v650
  %v695 = vpack.c.b16 %v653, %v652
  %v696 = vpack.c.b16 %v655, %v654
  %v697 = vpack.c.b16 %v657, %v656
  %v698 = vpack.c.b16 %v659, %v658
  %v699 = vpack.c.b16 %v661, %v660
  %v700 = vpack.c.b16 %v663, %v662
  %v701 = vpack.c.b16 %v665, %v664
  %v702 = vpack.c.b16 %v667, %v666
  %v703 = vpack.c.b16 %v669, %v668
  %v704 = vpack.c.b16 %v671, %v670
  %v705 = vpack.c.b16 %v673, %v672
  %v706 = vpack.c.b16 %v675, %v674
  %v707 = vpack.c.b16 %v677, %v676
  %v708 = vpack.c.b16 %v679, %v678
  %v709 = vpack.c.b16 %v681, %v680
  %v710 = vpack.c.b16 %v683, %v682
  %v711 = vpack.c.b16 %v685, %v684
  %v712 = vpack.c.b16 %v687, %v686
  %v713 = vpack.c.b16 %v688, %v688
  %v715 = vsel %vm226, %v689, 0
  %v718 = vsel %vm226, %v690, 0
  %v721 = vsel %vm226, %v691, 0
  %v724 = vsel %vm226, %v692, 0
  %v727 = vsel %vm226, %v693, 0
  %v730 = vsel %vm226, %v694, 0
  %v733 = vsel %vm226, %v695, 0
  %v736 = vsel %vm226, %v696, 0
  %v739 = vsel %vm226, %v697, 0
  %v742 = vsel %vm226, %v698, 0
  %v745 = vsel %vm226, %v699, 0
  %v748 = vsel %vm226, %v700, 0
  %v751 = vsel %vm226, %v701, 0
  %v754 = vsel %vm226, %v702, 0
  %v757 = vsel %vm226, %v703, 0
  %v760 = vsel %vm226, %v704, 0
  %v763 = vsel %vm226, %v705, 0
  %v766 = vsel %vm226, %v706, 0
  %v769 = vsel %vm226, %v707, 0
  %v772 = vsel %vm226, %v708, 0
  %v775 = vsel %vm226, %v709, 0
  %v778 = vsel %vm226, %v710, 0
  %v781 = vsel %vm226, %v711, 0
  %v784 = vsel %vm226, %v712, 0
  %v787 = vsel %vm226, %v713, 0
  %789 = vmatprep.subr.bf16.mxu0 0
  %790 = vmatpush1.bf16.msra.mxu0 %v217
  %791 = vmatprep.subr.bf16.mxu0 0
  %792 = vmatpush1.bf16.msra.mxu0 %v218
  %793 = vmatprep.subr.bf16.mxu0 0
  %794 = vmatpush1.bf16.msra.mxu0 %v219
  %795 = vmatprep.subr.bf16.mxu0 0
  %796 = vmatpush1.bf16.msra.mxu0 %v220
  %797 = vmatprep.subr.bf16.mxu0 0
  %798 = vmatpush1.bf16.msra.mxu0 %v307
  %799 = vmatprep.subr.bf16.mxu0 0
  %800 = vmatpush1.bf16.msra.mxu0 0
  %801 = vmatprep.subr.bf16.mxu0 0
  %802 = vmatpush1.bf16.msra.mxu0 0
  %803 = vmatprep.subr.bf16.mxu0 0
  %804 = vmatpush1.bf16.msra.mxu0 0
  %805 = vmatprep.subr.bf16.mxu0 0
  %806 = vmatpush1.bf16.msra.mxu0 0
  %807 = vmatprep.subr.bf16.mxu0 0
  %808 = vmatpush1.bf16.msra.mxu0 0
  %809 = vmatprep.subr.bf16.mxu0 0
  %810 = vmatpush1.bf16.msra.mxu0 0
  %811 = vmatprep.subr.bf16.mxu0 0
  %812 = vmatpush1.bf16.msra.mxu0 0
  %813 = vmatprep.subr.bf16.mxu0 0
  %814 = vmatpush1.bf16.msra.mxu0 0
  %815 = vmatprep.subr.bf16.mxu0 0
  %816 = vmatpush1.bf16.msra.mxu0 0
  %817 = vmatprep.subr.bf16.mxu0 0
  %818 = vmatpush1.bf16.msra.mxu0 0
  %819 = vmatprep.subr.bf16.mxu0 0
  %820 = vmatpush1.bf16.msra.mxu0 0
  %821 = vmatprep.mubr.bf16.mxu0 0
  %822 = vmatmul.mubr.bf16.gmra.mrb[0].mxu0 %v715
  %v823 = vpop.f32.mrb[0].mxu0
  %v824 = vadd.f32 0.0, %v823
  %v825 = vpop.f32.mrb[0].mxu0
  %v826 = vpop.f32.mrb[0].mxu0
  %v827 = vadd.f32 0.0, %v826
  %v828 = vpop.f32.mrb[0].mxu0
  %829 = vmatprep.mubr.bf16.mxu0 0
  %830 = vmatmul.mubr.bf16.gmra.mrb[0].mxu0 %v718
  %v831 = vpop.f32.mrb[0].mxu0
  %v832 = vadd.f32 0.0, %v831
  %v833 = vpop.f32.mrb[0].mxu0
  %v834 = vpop.f32.mrb[0].mxu0
  %v835 = vadd.f32 0.0, %v834
  %v836 = vpop.f32.mrb[0].mxu0
  %837 = vmatprep.mubr.bf16.mxu0 0
  %838 = vmatmul.mubr.bf16.gmra.mrb[0].mxu0 %v721
  %v839 = vpop.f32.mrb[0].mxu0
  %v840 = vadd.f32 0.0, %v839
  %v841 = vpop.f32.mrb[0].mxu0
  %v842 = vpop.f32.mrb[0].mxu0
  %v843 = vadd.f32 0.0, %v842
  %v844 = vpop.f32.mrb[0].mxu0
  %845 = vmatprep.mubr.bf16.mxu0 0
  %846 = vmatmul.mubr.bf16.gmra.mrb[0].mxu0 %v724
  %v847 = vpop.f32.mrb[0].mxu0
  %v848 = vadd.f32 0.0, %v847
  %v849 = vpop.f32.mrb[0].mxu0
  %v850 = vpop.f32.mrb[0].mxu0
  %v851 = vadd.f32 0.0, %v850
  %v852 = vpop.f32.mrb[0].mxu0
  %853 = vmatprep.mubr.bf16.mxu0 0
  %854 = vmatmul.mubr.bf16.gmra.mrb[0].mxu0 %v727
  %v855 = vpop.f32.mrb[0].mxu0
  %v856 = vadd.f32 0.0, %v855
  %v857 = vpop.f32.mrb[0].mxu0
  %v858 = vpop.f32.mrb[0].mxu0
  %v859 = vadd.f32 0.0, %v858
  %v860 = vpop.f32.mrb[0].mxu0
  %861 = vmatprep.mubr.bf16.mxu0 0
  %862 = vmatmul.mubr.bf16.gmra.mrb[0].mxu0 %v730
  %v863 = vpop.f32.mrb[0].mxu0
  %v864 = vadd.f32 0.0, %v863
  %v865 = vpop.f32.mrb[0].mxu0
  %v866 = vpop.f32.mrb[0].mxu0
  %v867 = vadd.f32 0.0, %v866
  %v868 = vpop.f32.mrb[0].mxu0
  %869 = vmatprep.mubr.bf16.mxu0 0
  %870 = vmatmul.mubr.bf16.gmra.mrb[0].mxu0 %v733
  %v871 = vpop.f32.mrb[0].mxu0
  %v872 = vadd.f32 0.0, %v871
  %v873 = vpop.f32.mrb[0].mxu0
  %v874 = vpop.f32.mrb[0].mxu0
  %v875 = vadd.f32 0.0, %v874
  %v876 = vpop.f32.mrb[0].mxu0
  %877 = vmatprep.mubr.bf16.mxu0 0
  %878 = vmatmul.mubr.bf16.gmra.mrb[0].mxu0 %v736
  %v879 = vpop.f32.mrb[0].mxu0
  %v880 = vadd.f32 0.0, %v879
  %v881 = vpop.f32.mrb[0].mxu0
  %v882 = vpop.f32.mrb[0].mxu0
  %v883 = vadd.f32 0.0, %v882
  %v884 = vpop.f32.mrb[0].mxu0
  %885 = vmatprep.mubr.bf16.mxu0 0
  %886 = vmatmul.mubr.bf16.gmra.mrb[0].mxu0 %v739
  %v887 = vpop.f32.mrb[0].mxu0
  %v888 = vadd.f32 0.0, %v887
  %v889 = vpop.f32.mrb[0].mxu0
  %v890 = vpop.f32.mrb[0].mxu0
  %v891 = vadd.f32 0.0, %v890
  %v892 = vpop.f32.mrb[0].mxu0
  %893 = vmatprep.mubr.bf16.mxu0 0
  %894 = vmatmul.mubr.bf16.gmra.mrb[0].mxu0 %v742
  %v895 = vpop.f32.mrb[0].mxu0
  %v896 = vadd.f32 0.0, %v895
  %v897 = vpop.f32.mrb[0].mxu0
  %v898 = vpop.f32.mrb[0].mxu0
  %v899 = vadd.f32 0.0, %v898
  %v900 = vpop.f32.mrb[0].mxu0
  %901 = vmatprep.mubr.bf16.mxu0 0
  %902 = vmatmul.mubr.bf16.gmra.mrb[0].mxu0 %v745
  %v903 = vpop.f32.mrb[0].mxu0
  %v904 = vadd.f32 0.0, %v903
  %v905 = vpop.f32.mrb[0].mxu0
  %v906 = vpop.f32.mrb[0].mxu0
  %v907 = vadd.f32 0.0, %v906
  %v908 = vpop.f32.mrb[0].mxu0
  %909 = vmatprep.mubr.bf16.mxu0 0
  %910 = vmatmul.mubr.bf16.gmra.mrb[0].mxu0 %v748
  %v911 = vpop.f32.mrb[0].mxu0
  %v912 = vadd.f32 0.0, %v911
  %v913 = vpop.f32.mrb[0].mxu0
  %v914 = vpop.f32.mrb[0].mxu0
  %v915 = vadd.f32 0.0, %v914
  %v916 = vpop.f32.mrb[0].mxu0
  %917 = vmatprep.mubr.bf16.mxu0 0
  %918 = vmatmul.mubr.bf16.gmra.mrb[0].mxu0 %v751
  %v919 = vpop.f32.mrb[0].mxu0
  %v920 = vadd.f32 0.0, %v919
  %v921 = vpop.f32.mrb[0].mxu0
  %v922 = vpop.f32.mrb[0].mxu0
  %v923 = vadd.f32 0.0, %v922
  %v924 = vpop.f32.mrb[0].mxu0
  %925 = vmatprep.mubr.bf16.mxu0 0
  %926 = vmatmul.mubr.bf16.gmra.mrb[0].mxu0 %v754
  %v927 = vpop.f32.mrb[0].mxu0
  %v928 = vadd.f32 0.0, %v927
  %v929 = vpop.f32.mrb[0].mxu0
  %v930 = vpop.f32.mrb[0].mxu0
  %v931 = vadd.f32 0.0, %v930
  %v932 = vpop.f32.mrb[0].mxu0
  %933 = vmatprep.mubr.bf16.mxu0 0
  %934 = vmatmul.mubr.bf16.gmra.mrb[0].mxu0 %v757
  %v935 = vpop.f32.mrb[0].mxu0
  %v936 = vadd.f32 0.0, %v935
  %v937 = vpop.f32.mrb[0].mxu0
  %v938 = vpop.f32.mrb[0].mxu0
  %v939 = vadd.f32 0.0, %v938
  %v940 = vpop.f32.mrb[0].mxu0
  %941 = vmatprep.mubr.bf16.mxu0 0
  %942 = vmatmul.mubr.bf16.gmra.mrb[0].mxu0 %v760
  %v943 = vpop.f32.mrb[0].mxu0
  %v944 = vadd.f32 0.0, %v943
  %v945 = vpop.f32.mrb[0].mxu0
  %v946 = vpop.f32.mrb[0].mxu0
  %v947 = vadd.f32 0.0, %v946
  %v948 = vpop.f32.mrb[0].mxu0
  %949 = vmatprep.mubr.bf16.mxu0 0
  %950 = vmatmul.mubr.bf16.gmra.mrb[0].mxu0 %v763
  %v951 = vpop.f32.mrb[0].mxu0
  %v952 = vadd.f32 0.0, %v951
  %v953 = vpop.f32.mrb[0].mxu0
  %v954 = vpop.f32.mrb[0].mxu0
  %v955 = vadd.f32 0.0, %v954
  %v956 = vpop.f32.mrb[0].mxu0
  %957 = vmatprep.mubr.bf16.mxu0 0
  %958 = vmatmul.mubr.bf16.gmra.mrb[0].mxu0 %v766
  %v959 = vpop.f32.mrb[0].mxu0
  %v960 = vadd.f32 0.0, %v959
  %v961 = vpop.f32.mrb[0].mxu0
  %v962 = vpop.f32.mrb[0].mxu0
  %v963 = vadd.f32 0.0, %v962
  %v964 = vpop.f32.mrb[0].mxu0
  %965 = vmatprep.mubr.bf16.mxu0 0
  %966 = vmatmul.mubr.bf16.gmra.mrb[0].mxu0 %v769
  %v967 = vpop.f32.mrb[0].mxu0
  %v968 = vadd.f32 0.0, %v967
  %v969 = vpop.f32.mrb[0].mxu0
  %v970 = vpop.f32.mrb[0].mxu0
  %v971 = vadd.f32 0.0, %v970
  %v972 = vpop.f32.mrb[0].mxu0
  %973 = vmatprep.mubr.bf16.mxu0 0
  %974 = vmatmul.mubr.bf16.gmra.mrb[0].mxu0 %v772
  %v975 = vpop.f32.mrb[0].mxu0
  %v976 = vadd.f32 0.0, %v975
  %v977 = vpop.f32.mrb[0].mxu0
  %v978 = vpop.f32.mrb[0].mxu0
  %v979 = vadd.f32 0.0, %v978
  %v980 = vpop.f32.mrb[0].mxu0
  %981 = vmatprep.mubr.bf16.mxu0 0
  %982 = vmatmul.mubr.bf16.gmra.mrb[0].mxu0 %v775
  %v983 = vpop.f32.mrb[0].mxu0
  %v984 = vadd.f32 0.0, %v983
  %v985 = vpop.f32.mrb[0].mxu0
  %v986 = vpop.f32.mrb[0].mxu0
  %v987 = vadd.f32 0.0, %v986
  %v988 = vpop.f32.mrb[0].mxu0
  %989 = vmatprep.mubr.bf16.mxu0 0
  %990 = vmatmul.mubr.bf16.gmra.mrb[0].mxu0 %v778
  %v991 = vpop.f32.mrb[0].mxu0
  %v992 = vadd.f32 0.0, %v991
  %v993 = vpop.f32.mrb[0].mxu0
  %v994 = vpop.f32.mrb[0].mxu0
  %v995 = vadd.f32 0.0, %v994
  %v996 = vpop.f32.mrb[0].mxu0
  %997 = vmatprep.mubr.bf16.mxu0 0
  %998 = vmatmul.mubr.bf16.gmra.mrb[0].mxu0 %v781
  %v999 = vpop.f32.mrb[0].mxu0
  %v1000 = vadd.f32 0.0, %v999
  %v1001 = vpop.f32.mrb[0].mxu0
  %v1002 = vpop.f32.mrb[0].mxu0
  %v1003 = vadd.f32 0.0, %v1002
  %v1004 = vpop.f32.mrb[0].mxu0
  %1005 = vmatprep.mubr.bf16.mxu0 0
  %1006 = vmatmul.mubr.bf16.gmra.mrb[0].mxu0 %v784
  %v1007 = vpop.f32.mrb[0].mxu0
  %v1008 = vadd.f32 0.0, %v1007
  %v1009 = vpop.f32.mrb[0].mxu0
  %v1010 = vpop.f32.mrb[0].mxu0
  %v1011 = vadd.f32 0.0, %v1010
  %v1012 = vpop.f32.mrb[0].mxu0
  %1013 = vmatprep.mubr.bf16.mxu0 0
  %1014 = vmatmul.mubr.bf16.gmra.mrb[0].mxu0 %v787
  %v1015 = vpop.f32.mrb[0].mxu0
  %v1016 = vadd.f32 0.0, %v1015
  %v1017 = vpop.f32.mrb[0].mxu0
  %v1018 = vpop.f32.mrb[0].mxu0
  %v1019 = vpop.f32.mrb[0].mxu0
  %1020 = vdwg.mxu0
  %v1021 = vmax.f32 %v344, %v824
  %v1022 = vmax.f32 %v347, %v827
  %v1023 = vmax.f32 %v352, %v832
  %v1024 = vmax.f32 %v355, %v835
  %v1025 = vmax.f32 %v360, %v840
  %v1026 = vmax.f32 %v363, %v843
  %v1027 = vmax.f32 %v368, %v848
  %v1028 = vmax.f32 %v371, %v851
  %v1029 = vmax.f32 %v376, %v856
  %v1030 = vmax.f32 %v379, %v859
  %v1031 = vmax.f32 %v384, %v864
  %v1032 = vmax.f32 %v387, %v867
  %v1033 = vmax.f32 %v392, %v872
  %v1034 = vmax.f32 %v395, %v875
  %v1035 = vmax.f32 %v400, %v880
  %v1036 = vmax.f32 %v403, %v883
  %v1037 = vmax.f32 %v408, %v888
  %v1038 = vmax.f32 %v411, %v891
  %v1039 = vmax.f32 %v416, %v896
  %v1040 = vmax.f32 %v419, %v899
  %v1041 = vmax.f32 %v424, %v904
  %v1042 = vmax.f32 %v427, %v907
  %v1043 = vmax.f32 %v432, %v912
  %v1044 = vmax.f32 %v435, %v915
  %v1045 = vmax.f32 %v440, %v920
  %v1046 = vmax.f32 %v443, %v923
  %v1047 = vmax.f32 %v448, %v928
  %v1048 = vmax.f32 %v451, %v931
  %v1049 = vmax.f32 %v456, %v936
  %v1050 = vmax.f32 %v459, %v939
  %v1051 = vmax.f32 %v464, %v944
  %v1052 = vmax.f32 %v467, %v947
  %v1053 = vmax.f32 %v472, %v952
  %v1054 = vmax.f32 %v475, %v955
  %v1055 = vmax.f32 %v480, %v960
  %v1056 = vmax.f32 %v483, %v963
  %v1057 = vmax.f32 %v488, %v968
  %v1058 = vmax.f32 %v491, %v971
  %v1059 = vmax.f32 %v496, %v976
  %v1060 = vmax.f32 %v499, %v979
  %v1061 = vmax.f32 %v504, %v984
  %v1062 = vmax.f32 %v507, %v987
  %v1063 = vmax.f32 %v512, %v992
  %v1064 = vmax.f32 %v515, %v995
  %v1065 = vmax.f32 %v520, %v1000
  %v1066 = vmax.f32 %v523, %v1003
  %v1067 = vmax.f32 %v528, %v1008
  %v1068 = vmax.f32 %v531, %v1011
  %v1069 = vmax.f32 %v536, %v1016
  %s1070 = scalar_lea.vmem %s0, 392
  %v1071 = vld [vmem:[%s1070] sm:$0xf]
  %v1072 = vld [vmem:[%s1070 + $0x4] sm:$0xf]
  %v1073 = vld [vmem:[%s1070 + $0x8] sm:$0xf]
  %v1074 = vld [vmem:[%s1070 + $0xc] sm:$0xf]
  %v1075 = vld [vmem:[%s1070 + $0x10] sm:$0xf]
  %v1076 = vld [vmem:[%s1070 + $0x14] sm:$0xf]
  %v1077 = vld [vmem:[%s1070 + $0x18] sm:$0xf]
  %v1078 = vld [vmem:[%s1070 + $0x1c] sm:$0xf]
  %v1079 = vld [vmem:[%s1070 + $0x20] sm:$0xf]
  %v1080 = vld [vmem:[%s1070 + $0x24] sm:$0xf]
  %v1081 = vld [vmem:[%s1070 + $0x28] sm:$0xf]
  %v1082 = vld [vmem:[%s1070 + $0x2c] sm:$0xf]
  %v1083 = vld [vmem:[%s1070 + $0x30] sm:$0xf]
  %v1084 = vld [vmem:[%s1070 + $0x34] sm:$0xf]
  %v1085 = vld [vmem:[%s1070 + $0x38] sm:$0xf]
  %v1086 = vld [vmem:[%s1070 + $0x3c] sm:$0xf]
  %v1087 = vld [vmem:[%s1070 + $0x40] sm:$0xf]
  %v1088 = vld [vmem:[%s1070 + $0x44] sm:$0xf]
  %v1089 = vld [vmem:[%s1070 + $0x48] sm:$0xf]
  %v1090 = vld [vmem:[%s1070 + $0x4c] sm:$0xf]
  %v1091 = vld [vmem:[%s1070 + $0x50] sm:$0xf]
  %v1092 = vld [vmem:[%s1070 + $0x54] sm:$0xf]
  %v1093 = vld [vmem:[%s1070 + $0x58] sm:$0xf]
  %v1094 = vld [vmem:[%s1070 + $0x5c] sm:$0xf]
  %v1095 = vld [vmem:[%s1070 + $0x60] sm:$0xf]
  %v1096 = vld [vmem:[%s1070 + $0x64] sm:$0xf]
  %v1097 = vld [vmem:[%s1070 + $0x68] sm:$0xf]
  %v1098 = vld [vmem:[%s1070 + $0x6c] sm:$0xf]
  %v1099 = vld [vmem:[%s1070 + $0x70] sm:$0xf]
  %v1100 = vld [vmem:[%s1070 + $0x74] sm:$0xf]
  %v1101 = vld [vmem:[%s1070 + $0x78] sm:$0xf]
  %v1102 = vld [vmem:[%s1070 + $0x7c] sm:$0xf]
  %v1103 = vld [vmem:[%s1070 + $0x80] sm:$0xf]
  %v1104 = vld [vmem:[%s1070 + $0x84] sm:$0xf]
  %v1105 = vld [vmem:[%s1070 + $0x88] sm:$0xf]
  %v1106 = vld [vmem:[%s1070 + $0x8c] sm:$0xf]
  %v1107 = vld [vmem:[%s1070 + $0x90] sm:$0xf]
  %v1108 = vld [vmem:[%s1070 + $0x94] sm:$0xf]
  %v1109 = vld [vmem:[%s1070 + $0x98] sm:$0xf]
  %v1110 = vld [vmem:[%s1070 + $0x9c] sm:$0xf]
  %v1111 = vld [vmem:[%s1070 + $0xa0] sm:$0xf]
  %v1112 = vld [vmem:[%s1070 + $0xa4] sm:$0xf]
  %v1113 = vld [vmem:[%s1070 + $0xa8] sm:$0xf]
  %v1114 = vld [vmem:[%s1070 + $0xac] sm:$0xf]
  %v1115 = vld [vmem:[%s1070 + $0xb0] sm:$0xf]
  %v1116 = vld [vmem:[%s1070 + $0xb4] sm:$0xf]
  %v1117 = vld [vmem:[%s1070 + $0xb8] sm:$0xf]
  %v1118 = vld [vmem:[%s1070 + $0xbc] sm:$0xf]
  %v1119 = vld [vmem:[%s1070 + $0xc0] sm:$0xf]
  %v1169 = vunpack.c.l.b16 %v1071
  %v1170 = vunpack.c.l.b16 %v1072
  %v1171 = vunpack.c.l.b16 %v1073
  %v1172 = vunpack.c.l.b16 %v1074
  %v1173 = vunpack.c.l.b16 %v1075
  %v1174 = vunpack.c.l.b16 %v1076
  %v1175 = vunpack.c.l.b16 %v1077
  %v1176 = vunpack.c.l.b16 %v1078
  %v1177 = vunpack.c.l.b16 %v1079
  %v1178 = vunpack.c.l.b16 %v1080
  %v1179 = vunpack.c.l.b16 %v1081
  %v1180 = vunpack.c.l.b16 %v1082
  %v1181 = vunpack.c.l.b16 %v1083
  %v1182 = vunpack.c.l.b16 %v1084
  %v1183 = vunpack.c.l.b16 %v1085
  %v1184 = vunpack.c.l.b16 %v1086
  %v1185 = vunpack.c.l.b16 %v1087
  %v1186 = vunpack.c.l.b16 %v1088
  %v1187 = vunpack.c.l.b16 %v1089
  %v1188 = vunpack.c.l.b16 %v1090
  %v1189 = vunpack.c.l.b16 %v1091
  %v1190 = vunpack.c.l.b16 %v1092
  %v1191 = vunpack.c.l.b16 %v1093
  %v1192 = vunpack.c.l.b16 %v1094
  %v1193 = vunpack.c.l.b16 %v1095
  %v1194 = vunpack.c.l.b16 %v1096
  %v1195 = vunpack.c.l.b16 %v1097
  %v1196 = vunpack.c.l.b16 %v1098
  %v1197 = vunpack.c.l.b16 %v1099
  %v1198 = vunpack.c.l.b16 %v1100
  %v1199 = vunpack.c.l.b16 %v1101
  %v1200 = vunpack.c.l.b16 %v1102
  %v1201 = vunpack.c.l.b16 %v1103
  %v1202 = vunpack.c.l.b16 %v1104
  %v1203 = vunpack.c.l.b16 %v1105
  %v1204 = vunpack.c.l.b16 %v1106
  %v1205 = vunpack.c.l.b16 %v1107
  %v1206 = vunpack.c.l.b16 %v1108
  %v1207 = vunpack.c.l.b16 %v1109
  %v1208 = vunpack.c.l.b16 %v1110
  %v1209 = vunpack.c.l.b16 %v1111
  %v1210 = vunpack.c.l.b16 %v1112
  %v1211 = vunpack.c.l.b16 %v1113
  %v1212 = vunpack.c.l.b16 %v1114
  %v1213 = vunpack.c.l.b16 %v1115
  %v1214 = vunpack.c.l.b16 %v1116
  %v1215 = vunpack.c.l.b16 %v1117
  %v1216 = vunpack.c.l.b16 %v1118
  %v1217 = vunpack.c.l.b16 %v1119
  %v1218 = vpack.c.b16 %v1170, %v1169
  %v1219 = vpack.c.b16 %v1172, %v1171
  %v1220 = vpack.c.b16 %v1174, %v1173
  %v1221 = vpack.c.b16 %v1176, %v1175
  %v1222 = vpack.c.b16 %v1178, %v1177
  %v1223 = vpack.c.b16 %v1180, %v1179
  %v1224 = vpack.c.b16 %v1182, %v1181
  %v1225 = vpack.c.b16 %v1184, %v1183
  %v1226 = vpack.c.b16 %v1186, %v1185
  %v1227 = vpack.c.b16 %v1188, %v1187
  %v1228 = vpack.c.b16 %v1190, %v1189
  %v1229 = vpack.c.b16 %v1192, %v1191
  %v1230 = vpack.c.b16 %v1194, %v1193
  %v1231 = vpack.c.b16 %v1196, %v1195
  %v1232 = vpack.c.b16 %v1198, %v1197
  %v1233 = vpack.c.b16 %v1200, %v1199
  %v1234 = vpack.c.b16 %v1202, %v1201
  %v1235 = vpack.c.b16 %v1204, %v1203
  %v1236 = vpack.c.b16 %v1206, %v1205
  %v1237 = vpack.c.b16 %v1208, %v1207
  %v1238 = vpack.c.b16 %v1210, %v1209
  %v1239 = vpack.c.b16 %v1212, %v1211
  %v1240 = vpack.c.b16 %v1214, %v1213
  %v1241 = vpack.c.b16 %v1216, %v1215
  %v1242 = vpack.c.b16 %v1217, %v1217
  %v1244 = vsel %vm226, %v1218, 0
  %v1247 = vsel %vm226, %v1219, 0
  %v1250 = vsel %vm226, %v1220, 0
  %v1253 = vsel %vm226, %v1221, 0
  %v1256 = vsel %vm226, %v1222, 0
  %v1259 = vsel %vm226, %v1223, 0
  %v1262 = vsel %vm226, %v1224, 0
  %v1265 = vsel %vm226, %v1225, 0
  %v1268 = vsel %vm226, %v1226, 0
  %v1271 = vsel %vm226, %v1227, 0
  %v1274 = vsel %vm226, %v1228, 0
  %v1277 = vsel %vm226, %v1229, 0
  %v1280 = vsel %vm226, %v1230, 0
  %v1283 = vsel %vm226, %v1231, 0
  %v1286 = vsel %vm226, %v1232, 0
  %v1289 = vsel %vm226, %v1233, 0
  %v1292 = vsel %vm226, %v1234, 0
  %v1295 = vsel %vm226, %v1235, 0
  %v1298 = vsel %vm226, %v1236, 0
  %v1301 = vsel %vm226, %v1237, 0
  %v1304 = vsel %vm226, %v1238, 0
  %v1307 = vsel %vm226, %v1239, 0
  %v1310 = vsel %vm226, %v1240, 0
  %v1313 = vsel %vm226, %v1241, 0
  %v1316 = vsel %vm226, %v1242, 0
  %1318 = vmatprep.subr.bf16.mxu0 0
  %1319 = vmatpush1.bf16.msra.mxu0 %v217
  %1320 = vmatprep.subr.bf16.mxu0 0
  %1321 = vmatpush1.bf16.msra.mxu0 %v218
  %1322 = vmatprep.subr.bf16.mxu0 0
  %1323 = vmatpush1.bf16.msra.mxu0 %v219
  %1324 = vmatprep.subr.bf16.mxu0 0
  %1325 = vmatpush1.bf16.msra.mxu0 %v220
  %1326 = vmatprep.subr.bf16.mxu0 0
  %1327 = vmatpush1.bf16.msra.mxu0 %v307
  %1328 = vmatprep.subr.bf16.mxu0 0
  %1329 = vmatpush1.bf16.msra.mxu0 0
  %1330 = vmatprep.subr.bf16.mxu0 0
  %1331 = vmatpush1.bf16.msra.mxu0 0
  %1332 = vmatprep.subr.bf16.mxu0 0
  %1333 = vmatpush1.bf16.msra.mxu0 0
  %1334 = vmatprep.subr.bf16.mxu0 0
  %1335 = vmatpush1.bf16.msra.mxu0 0
  %1336 = vmatprep.subr.bf16.mxu0 0
  %1337 = vmatpush1.bf16.msra.mxu0 0
  %1338 = vmatprep.subr.bf16.mxu0 0
  %1339 = vmatpush1.bf16.msra.mxu0 0
  %1340 = vmatprep.subr.bf16.mxu0 0
  %1341 = vmatpush1.bf16.msra.mxu0 0
  %1342 = vmatprep.subr.bf16.mxu0 0
  %1343 = vmatpush1.bf16.msra.mxu0 0
  %1344 = vmatprep.subr.bf16.mxu0 0
  %1345 = vmatpush1.bf16.msra.mxu0 0
  %1346 = vmatprep.subr.bf16.mxu0 0
  %1347 = vmatpush1.bf16.msra.mxu0 0
  %1348 = vmatprep.subr.bf16.mxu0 0
  %1349 = vmatpush1.bf16.msra.mxu0 0
  %1350 = vmatprep.mubr.bf16.mxu0 0
  %1351 = vmatmul.mubr.bf16.gmra.mrb[0].mxu0 %v1244
  %v1352 = vpop.f32.mrb[0].mxu0
  %v1353 = vadd.f32 0.0, %v1352
  %v1354 = vpop.f32.mrb[0].mxu0
  %v1355 = vpop.f32.mrb[0].mxu0
  %v1356 = vadd.f32 0.0, %v1355
  %v1357 = vpop.f32.mrb[0].mxu0
  %1358 = vmatprep.mubr.bf16.mxu0 0
  %1359 = vmatmul.mubr.bf16.gmra.mrb[0].mxu0 %v1247
  %v1360 = vpop.f32.mrb[0].mxu0
  %v1361 = vadd.f32 0.0, %v1360
  %v1362 = vpop.f32.mrb[0].mxu0
  %v1363 = vpop.f32.mrb[0].mxu0
  %v1364 = vadd.f32 0.0, %v1363
  %v1365 = vpop.f32.mrb[0].mxu0
  %1366 = vmatprep.mubr.bf16.mxu0 0
  %1367 = vmatmul.mubr.bf16.gmra.mrb[0].mxu0 %v1250
  %v1368 = vpop.f32.mrb[0].mxu0
  %v1369 = vadd.f32 0.0, %v1368
  %v1370 = vpop.f32.mrb[0].mxu0
  %v1371 = vpop.f32.mrb[0].mxu0
  %v1372 = vadd.f32 0.0, %v1371
  %v1373 = vpop.f32.mrb[0].mxu0
  %1374 = vmatprep.mubr.bf16.mxu0 0
  %1375 = vmatmul.mubr.bf16.gmra.mrb[0].mxu0 %v1253
  %v1376 = vpop.f32.mrb[0].mxu0
  %v1377 = vadd.f32 0.0, %v1376
  %v1378 = vpop.f32.mrb[0].mxu0
  %v1379 = vpop.f32.mrb[0].mxu0
  %v1380 = vadd.f32 0.0, %v1379
  %v1381 = vpop.f32.mrb[0].mxu0
  %1382 = vmatprep.mubr.bf16.mxu0 0
  %1383 = vmatmul.mubr.bf16.gmra.mrb[0].mxu0 %v1256
  %v1384 = vpop.f32.mrb[0].mxu0
  %v1385 = vadd.f32 0.0, %v1384
  %v1386 = vpop.f32.mrb[0].mxu0
  %v1387 = vpop.f32.mrb[0].mxu0
  %v1388 = vadd.f32 0.0, %v1387
  %v1389 = vpop.f32.mrb[0].mxu0
  %1390 = vmatprep.mubr.bf16.mxu0 0
  %1391 = vmatmul.mubr.bf16.gmra.mrb[0].mxu0 %v1259
  %v1392 = vpop.f32.mrb[0].mxu0
  %v1393 = vadd.f32 0.0, %v1392
  %v1394 = vpop.f32.mrb[0].mxu0
  %v1395 = vpop.f32.mrb[0].mxu0
  %v1396 = vadd.f32 0.0, %v1395
  %v1397 = vpop.f32.mrb[0].mxu0
  %1398 = vmatprep.mubr.bf16.mxu0 0
  %1399 = vmatmul.mubr.bf16.gmra.mrb[0].mxu0 %v1262
  %v1400 = vpop.f32.mrb[0].mxu0
  %v1401 = vadd.f32 0.0, %v1400
  %v1402 = vpop.f32.mrb[0].mxu0
  %v1403 = vpop.f32.mrb[0].mxu0
  %v1404 = vadd.f32 0.0, %v1403
  %v1405 = vpop.f32.mrb[0].mxu0
  %1406 = vmatprep.mubr.bf16.mxu0 0
  %1407 = vmatmul.mubr.bf16.gmra.mrb[0].mxu0 %v1265
  %v1408 = vpop.f32.mrb[0].mxu0
  %v1409 = vadd.f32 0.0, %v1408
  %v1410 = vpop.f32.mrb[0].mxu0
  %v1411 = vpop.f32.mrb[0].mxu0
  %v1412 = vadd.f32 0.0, %v1411
  %v1413 = vpop.f32.mrb[0].mxu0
  %1414 = vmatprep.mubr.bf16.mxu0 0
  %1415 = vmatmul.mubr.bf16.gmra.mrb[0].mxu0 %v1268
  %v1416 = vpop.f32.mrb[0].mxu0
  %v1417 = vadd.f32 0.0, %v1416
  %v1418 = vpop.f32.mrb[0].mxu0
  %v1419 = vpop.f32.mrb[0].mxu0
  %v1420 = vadd.f32 0.0, %v1419
  %v1421 = vpop.f32.mrb[0].mxu0
  %1422 = vmatprep.mubr.bf16.mxu0 0
  %1423 = vmatmul.mubr.bf16.gmra.mrb[0].mxu0 %v1271
  %v1424 = vpop.f32.mrb[0].mxu0
  %v1425 = vadd.f32 0.0, %v1424
  %v1426 = vpop.f32.mrb[0].mxu0
  %v1427 = vpop.f32.mrb[0].mxu0
  %v1428 = vadd.f32 0.0, %v1427
  %v1429 = vpop.f32.mrb[0].mxu0
  %1430 = vmatprep.mubr.bf16.mxu0 0
  %1431 = vmatmul.mubr.bf16.gmra.mrb[0].mxu0 %v1274
  %v1432 = vpop.f32.mrb[0].mxu0
  %v1433 = vadd.f32 0.0, %v1432
  %v1434 = vpop.f32.mrb[0].mxu0
  %v1435 = vpop.f32.mrb[0].mxu0
  %v1436 = vadd.f32 0.0, %v1435
  %v1437 = vpop.f32.mrb[0].mxu0
  %1438 = vmatprep.mubr.bf16.mxu0 0
  %1439 = vmatmul.mubr.bf16.gmra.mrb[0].mxu0 %v1277
  %v1440 = vpop.f32.mrb[0].mxu0
  %v1441 = vadd.f32 0.0, %v1440
  %v1442 = vpop.f32.mrb[0].mxu0
  %v1443 = vpop.f32.mrb[0].mxu0
  %v1444 = vadd.f32 0.0, %v1443
  %v1445 = vpop.f32.mrb[0].mxu0
  %1446 = vmatprep.mubr.bf16.mxu0 0
  %1447 = vmatmul.mubr.bf16.gmra.mrb[0].mxu0 %v1280
  %v1448 = vpop.f32.mrb[0].mxu0
  %v1449 = vadd.f32 0.0, %v1448
  %v1450 = vpop.f32.mrb[0].mxu0
  %v1451 = vpop.f32.mrb[0].mxu0
  %v1452 = vadd.f32 0.0, %v1451
  %v1453 = vpop.f32.mrb[0].mxu0
  %1454 = vmatprep.mubr.bf16.mxu0 0
  %1455 = vmatmul.mubr.bf16.gmra.mrb[0].mxu0 %v1283
  %v1456 = vpop.f32.mrb[0].mxu0
  %v1457 = vadd.f32 0.0, %v1456
  %v1458 = vpop.f32.mrb[0].mxu0
  %v1459 = vpop.f32.mrb[0].mxu0
  %v1460 = vadd.f32 0.0, %v1459
  %v1461 = vpop.f32.mrb[0].mxu0
  %1462 = vmatprep.mubr.bf16.mxu0 0
  %1463 = vmatmul.mubr.bf16.gmra.mrb[0].mxu0 %v1286
  %v1464 = vpop.f32.mrb[0].mxu0
  %v1465 = vadd.f32 0.0, %v1464
  %v1466 = vpop.f32.mrb[0].mxu0
  %v1467 = vpop.f32.mrb[0].mxu0
  %v1468 = vadd.f32 0.0, %v1467
  %v1469 = vpop.f32.mrb[0].mxu0
  %1470 = vmatprep.mubr.bf16.mxu0 0
  %1471 = vmatmul.mubr.bf16.gmra.mrb[0].mxu0 %v1289
  %v1472 = vpop.f32.mrb[0].mxu0
  %v1473 = vadd.f32 0.0, %v1472
  %v1474 = vpop.f32.mrb[0].mxu0
  %v1475 = vpop.f32.mrb[0].mxu0
  %v1476 = vadd.f32 0.0, %v1475
  %v1477 = vpop.f32.mrb[0].mxu0
  %1478 = vmatprep.mubr.bf16.mxu0 0
  %1479 = vmatmul.mubr.bf16.gmra.mrb[0].mxu0 %v1292
  %v1480 = vpop.f32.mrb[0].mxu0
  %v1481 = vadd.f32 0.0, %v1480
  %v1482 = vpop.f32.mrb[0].mxu0
  %v1483 = vpop.f32.mrb[0].mxu0
  %v1484 = vadd.f32 0.0, %v1483
  %v1485 = vpop.f32.mrb[0].mxu0
  %1486 = vmatprep.mubr.bf16.mxu0 0
  %1487 = vmatmul.mubr.bf16.gmra.mrb[0].mxu0 %v1295
  %v1488 = vpop.f32.mrb[0].mxu0
  %v1489 = vadd.f32 0.0, %v1488
  %v1490 = vpop.f32.mrb[0].mxu0
  %v1491 = vpop.f32.mrb[0].mxu0
  %v1492 = vadd.f32 0.0, %v1491
  %v1493 = vpop.f32.mrb[0].mxu0
  %1494 = vmatprep.mubr.bf16.mxu0 0
  %1495 = vmatmul.mubr.bf16.gmra.mrb[0].mxu0 %v1298
  %v1496 = vpop.f32.mrb[0].mxu0
  %v1497 = vadd.f32 0.0, %v1496
  %v1498 = vpop.f32.mrb[0].mxu0
  %v1499 = vpop.f32.mrb[0].mxu0
  %v1500 = vadd.f32 0.0, %v1499
  %v1501 = vpop.f32.mrb[0].mxu0
  %1502 = vmatprep.mubr.bf16.mxu0 0
  %1503 = vmatmul.mubr.bf16.gmra.mrb[0].mxu0 %v1301
  %v1504 = vpop.f32.mrb[0].mxu0
  %v1505 = vadd.f32 0.0, %v1504
  %v1506 = vpop.f32.mrb[0].mxu0
  %v1507 = vpop.f32.mrb[0].mxu0
  %v1508 = vadd.f32 0.0, %v1507
  %v1509 = vpop.f32.mrb[0].mxu0
  %1510 = vmatprep.mubr.bf16.mxu0 0
  %1511 = vmatmul.mubr.bf16.gmra.mrb[0].mxu0 %v1304
  %v1512 = vpop.f32.mrb[0].mxu0
  %v1513 = vadd.f32 0.0, %v1512
  %v1514 = vpop.f32.mrb[0].mxu0
  %v1515 = vpop.f32.mrb[0].mxu0
  %v1516 = vadd.f32 0.0, %v1515
  %v1517 = vpop.f32.mrb[0].mxu0
  %1518 = vmatprep.mubr.bf16.mxu0 0
  %1519 = vmatmul.mubr.bf16.gmra.mrb[0].mxu0 %v1307
  %v1520 = vpop.f32.mrb[0].mxu0
  %v1521 = vadd.f32 0.0, %v1520
  %v1522 = vpop.f32.mrb[0].mxu0
  %v1523 = vpop.f32.mrb[0].mxu0
  %v1524 = vadd.f32 0.0, %v1523
  %v1525 = vpop.f32.mrb[0].mxu0
  %1526 = vmatprep.mubr.bf16.mxu0 0
  %1527 = vmatmul.mubr.bf16.gmra.mrb[0].mxu0 %v1310
  %v1528 = vpop.f32.mrb[0].mxu0
  %v1529 = vadd.f32 0.0, %v1528
  %v1530 = vpop.f32.mrb[0].mxu0
  %v1531 = vpop.f32.mrb[0].mxu0
  %v1532 = vadd.f32 0.0, %v1531
  %v1533 = vpop.f32.mrb[0].mxu0
  %1534 = vmatprep.mubr.bf16.mxu0 0
  %1535 = vmatmul.mubr.bf16.gmra.mrb[0].mxu0 %v1313
  %v1536 = vpop.f32.mrb[0].mxu0
  %v1537 = vadd.f32 0.0, %v1536
  %v1538 = vpop.f32.mrb[0].mxu0
  %v1539 = vpop.f32.mrb[0].mxu0
  %v1540 = vadd.f32 0.0, %v1539
  %v1541 = vpop.f32.mrb[0].mxu0
  %1542 = vmatprep.mubr.bf16.mxu0 0
  %1543 = vmatmul.mubr.bf16.gmra.mrb[0].mxu0 %v1316
  %v1544 = vpop.f32.mrb[0].mxu0
  %v1545 = vadd.f32 0.0, %v1544
  %v1546 = vpop.f32.mrb[0].mxu0
  %v1547 = vpop.f32.mrb[0].mxu0
  %v1548 = vpop.f32.mrb[0].mxu0
  %1549 = vdwg.mxu0
  %v1550 = vmax.f32 %v1021, %v1353
  %v1551 = vmax.f32 %v1022, %v1356
  %v1552 = vmax.f32 %v1023, %v1361
  %v1553 = vmax.f32 %v1024, %v1364
  %v1554 = vmax.f32 %v1025, %v1369
  %v1555 = vmax.f32 %v1026, %v1372
  %v1556 = vmax.f32 %v1027, %v1377
  %v1557 = vmax.f32 %v1028, %v1380
  %v1558 = vmax.f32 %v1029, %v1385
  %v1559 = vmax.f32 %v1030, %v1388
  %v1560 = vmax.f32 %v1031, %v1393
  %v1561 = vmax.f32 %v1032, %v1396
  %v1562 = vmax.f32 %v1033, %v1401
  %v1563 = vmax.f32 %v1034, %v1404
  %v1564 = vmax.f32 %v1035, %v1409
  %v1565 = vmax.f32 %v1036, %v1412
  %v1566 = vmax.f32 %v1037, %v1417
  %v1567 = vmax.f32 %v1038, %v1420
  %v1568 = vmax.f32 %v1039, %v1425
  %v1569 = vmax.f32 %v1040, %v1428
  %v1570 = vmax.f32 %v1041, %v1433
  %v1571 = vmax.f32 %v1042, %v1436
  %v1572 = vmax.f32 %v1043, %v1441
  %v1573 = vmax.f32 %v1044, %v1444
  %v1574 = vmax.f32 %v1045, %v1449
  %v1575 = vmax.f32 %v1046, %v1452
  %v1576 = vmax.f32 %v1047, %v1457
  %v1577 = vmax.f32 %v1048, %v1460
  %v1578 = vmax.f32 %v1049, %v1465
  %v1579 = vmax.f32 %v1050, %v1468
  %v1580 = vmax.f32 %v1051, %v1473
  %v1581 = vmax.f32 %v1052, %v1476
  %v1582 = vmax.f32 %v1053, %v1481
  %v1583 = vmax.f32 %v1054, %v1484
  %v1584 = vmax.f32 %v1055, %v1489
  %v1585 = vmax.f32 %v1056, %v1492
  %v1586 = vmax.f32 %v1057, %v1497
  %v1587 = vmax.f32 %v1058, %v1500
  %v1588 = vmax.f32 %v1059, %v1505
  %v1589 = vmax.f32 %v1060, %v1508
  %v1590 = vmax.f32 %v1061, %v1513
  %v1591 = vmax.f32 %v1062, %v1516
  %v1592 = vmax.f32 %v1063, %v1521
  %v1593 = vmax.f32 %v1064, %v1524
  %v1594 = vmax.f32 %v1065, %v1529
  %v1595 = vmax.f32 %v1066, %v1532
  %v1596 = vmax.f32 %v1067, %v1537
  %v1597 = vmax.f32 %v1068, %v1540
  %v1598 = vmax.f32 %v1069, %v1545
  %s1599 = scalar_lea.vmem %s0, 588
  %v1600 = vld [vmem:[%s1599] sm:$0xf]
  %v1601 = vld [vmem:[%s1599 + $0x4] sm:$0xf]
  %v1602 = vld [vmem:[%s1599 + $0x8] sm:$0xf]
  %v1603 = vld [vmem:[%s1599 + $0xc] sm:$0xf]
  %v1604 = vld [vmem:[%s1599 + $0x10] sm:$0xf]
  %v1605 = vld [vmem:[%s1599 + $0x14] sm:$0xf]
  %v1606 = vld [vmem:[%s1599 + $0x18] sm:$0xf]
  %v1607 = vld [vmem:[%s1599 + $0x1c] sm:$0xf]
  %v1608 = vld [vmem:[%s1599 + $0x20] sm:$0xf]
  %v1609 = vld [vmem:[%s1599 + $0x24] sm:$0xf]
  %v1610 = vld [vmem:[%s1599 + $0x28] sm:$0xf]
  %v1611 = vld [vmem:[%s1599 + $0x2c] sm:$0xf]
  %v1612 = vld [vmem:[%s1599 + $0x30] sm:$0xf]
  %v1613 = vld [vmem:[%s1599 + $0x34] sm:$0xf]
  %v1614 = vld [vmem:[%s1599 + $0x38] sm:$0xf]
  %v1615 = vld [vmem:[%s1599 + $0x3c] sm:$0xf]
  %v1616 = vld [vmem:[%s1599 + $0x40] sm:$0xf]
  %v1617 = vld [vmem:[%s1599 + $0x44] sm:$0xf]
  %v1618 = vld [vmem:[%s1599 + $0x48] sm:$0xf]
  %v1619 = vld [vmem:[%s1599 + $0x4c] sm:$0xf]
  %v1620 = vld [vmem:[%s1599 + $0x50] sm:$0xf]
  %v1621 = vld [vmem:[%s1599 + $0x54] sm:$0xf]
  %v1622 = vld [vmem:[%s1599 + $0x58] sm:$0xf]
  %v1623 = vld [vmem:[%s1599 + $0x5c] sm:$0xf]
  %v1624 = vld [vmem:[%s1599 + $0x60] sm:$0xf]
  %v1625 = vld [vmem:[%s1599 + $0x64] sm:$0xf]
  %v1626 = vld [vmem:[%s1599 + $0x68] sm:$0xf]
  %v1627 = vld [vmem:[%s1599 + $0x6c] sm:$0xf]
  %v1628 = vld [vmem:[%s1599 + $0x70] sm:$0xf]
  %v1629 = vld [vmem:[%s1599 + $0x74] sm:$0xf]
  %v1630 = vld [vmem:[%s1599 + $0x78] sm:$0xf]
  %v1631 = vld [vmem:[%s1599 + $0x7c] sm:$0xf]
  %v1632 = vld [vmem:[%s1599 + $0x80] sm:$0xf]
  %v1633 = vld [vmem:[%s1599 + $0x84] sm:$0xf]
  %v1634 = vld [vmem:[%s1599 + $0x88] sm:$0xf]
  %v1635 = vld [vmem:[%s1599 + $0x8c] sm:$0xf]
  %v1636 = vld [vmem:[%s1599 + $0x90] sm:$0xf]
  %v1637 = vld [vmem:[%s1599 + $0x94] sm:$0xf]
  %v1638 = vld [vmem:[%s1599 + $0x98] sm:$0xf]
  %v1639 = vld [vmem:[%s1599 + $0x9c] sm:$0xf]
  %v1640 = vld [vmem:[%s1599 + $0xa0] sm:$0xf]
  %v1641 = vld [vmem:[%s1599 + $0xa4] sm:$0xf]
  %v1642 = vld [vmem:[%s1599 + $0xa8] sm:$0xf]
  %v1643 = vld [vmem:[%s1599 + $0xac] sm:$0xf]
  %v1644 = vld [vmem:[%s1599 + $0xb0] sm:$0xf]
  %v1645 = vld [vmem:[%s1599 + $0xb4] sm:$0xf]
  %v1646 = vld [vmem:[%s1599 + $0xb8] sm:$0xf]
  %v1647 = vld [vmem:[%s1599 + $0xbc] sm:$0xf]
  %v1648 = vld [vmem:[%s1599 + $0xc0] sm:$0xf]
  %v1698 = vunpack.c.l.b16 %v1600
  %v1699 = vunpack.c.l.b16 %v1601
  %v1700 = vunpack.c.l.b16 %v1602
  %v1701 = vunpack.c.l.b16 %v1603
  %v1702 = vunpack.c.l.b16 %v1604
  %v1703 = vunpack.c.l.b16 %v1605
  %v1704 = vunpack.c.l.b16 %v1606
  %v1705 = vunpack.c.l.b16 %v1607
  %v1706 = vunpack.c.l.b16 %v1608
  %v1707 = vunpack.c.l.b16 %v1609
  %v1708 = vunpack.c.l.b16 %v1610
  %v1709 = vunpack.c.l.b16 %v1611
  %v1710 = vunpack.c.l.b16 %v1612
  %v1711 = vunpack.c.l.b16 %v1613
  %v1712 = vunpack.c.l.b16 %v1614
  %v1713 = vunpack.c.l.b16 %v1615
  %v1714 = vunpack.c.l.b16 %v1616
  %v1715 = vunpack.c.l.b16 %v1617
  %v1716 = vunpack.c.l.b16 %v1618
  %v1717 = vunpack.c.l.b16 %v1619
  %v1718 = vunpack.c.l.b16 %v1620
  %v1719 = vunpack.c.l.b16 %v1621
  %v1720 = vunpack.c.l.b16 %v1622
  %v1721 = vunpack.c.l.b16 %v1623
  %v1722 = vunpack.c.l.b16 %v1624
  %v1723 = vunpack.c.l.b16 %v1625
  %v1724 = vunpack.c.l.b16 %v1626
  %v1725 = vunpack.c.l.b16 %v1627
  %v1726 = vunpack.c.l.b16 %v1628
  %v1727 = vunpack.c.l.b16 %v1629
  %v1728 = vunpack.c.l.b16 %v1630
  %v1729 = vunpack.c.l.b16 %v1631
  %v1730 = vunpack.c.l.b16 %v1632
  %v1731 = vunpack.c.l.b16 %v1633
  %v1732 = vunpack.c.l.b16 %v1634
  %v1733 = vunpack.c.l.b16 %v1635
  %v1734 = vunpack.c.l.b16 %v1636
  %v1735 = vunpack.c.l.b16 %v1637
  %v1736 = vunpack.c.l.b16 %v1638
  %v1737 = vunpack.c.l.b16 %v1639
  %v1738 = vunpack.c.l.b16 %v1640
  %v1739 = vunpack.c.l.b16 %v1641
  %v1740 = vunpack.c.l.b16 %v1642
  %v1741 = vunpack.c.l.b16 %v1643
  %v1742 = vunpack.c.l.b16 %v1644
  %v1743 = vunpack.c.l.b16 %v1645
  %v1744 = vunpack.c.l.b16 %v1646
  %v1745 = vunpack.c.l.b16 %v1647
  %v1746 = vunpack.c.l.b16 %v1648
  %v1747 = vpack.c.b16 %v1699, %v1698
  %v1748 = vpack.c.b16 %v1701, %v1700
  %v1749 = vpack.c.b16 %v1703, %v1702
  %v1750 = vpack.c.b16 %v1705, %v1704
  %v1751 = vpack.c.b16 %v1707, %v1706
  %v1752 = vpack.c.b16 %v1709, %v1708
  %v1753 = vpack.c.b16 %v1711, %v1710
  %v1754 = vpack.c.b16 %v1713, %v1712
  %v1755 = vpack.c.b16 %v1715, %v1714
  %v1756 = vpack.c.b16 %v1717, %v1716
  %v1757 = vpack.c.b16 %v1719, %v1718
  %v1758 = vpack.c.b16 %v1721, %v1720
  %v1759 = vpack.c.b16 %v1723, %v1722
  %v1760 = vpack.c.b16 %v1725, %v1724
  %v1761 = vpack.c.b16 %v1727, %v1726
  %v1762 = vpack.c.b16 %v1729, %v1728
  %v1763 = vpack.c.b16 %v1731, %v1730
  %v1764 = vpack.c.b16 %v1733, %v1732
  %v1765 = vpack.c.b16 %v1735, %v1734
  %v1766 = vpack.c.b16 %v1737, %v1736
  %v1767 = vpack.c.b16 %v1739, %v1738
  %v1768 = vpack.c.b16 %v1741, %v1740
  %v1769 = vpack.c.b16 %v1743, %v1742
  %v1770 = vpack.c.b16 %v1745, %v1744
  %v1771 = vpack.c.b16 %v1746, %v1746
  %v1773 = vsel %vm226, %v1747, 0
  %v1776 = vsel %vm226, %v1748, 0
  %v1779 = vsel %vm226, %v1749, 0
  %v1782 = vsel %vm226, %v1750, 0
  %v1785 = vsel %vm226, %v1751, 0
  %v1788 = vsel %vm226, %v1752, 0
  %v1791 = vsel %vm226, %v1753, 0
  %v1794 = vsel %vm226, %v1754, 0
  %v1797 = vsel %vm226, %v1755, 0
  %v1800 = vsel %vm226, %v1756, 0
  %v1803 = vsel %vm226, %v1757, 0
  %v1806 = vsel %vm226, %v1758, 0
  %v1809 = vsel %vm226, %v1759, 0
  %v1812 = vsel %vm226, %v1760, 0
  %v1815 = vsel %vm226, %v1761, 0
  %v1818 = vsel %vm226, %v1762, 0
  %v1821 = vsel %vm226, %v1763, 0
  %v1824 = vsel %vm226, %v1764, 0
  %v1827 = vsel %vm226, %v1765, 0
  %v1830 = vsel %vm226, %v1766, 0
  %v1833 = vsel %vm226, %v1767, 0
  %v1836 = vsel %vm226, %v1768, 0
  %v1839 = vsel %vm226, %v1769, 0
  %v1842 = vsel %vm226, %v1770, 0
  %v1845 = vsel %vm226, %v1771, 0
  %1847 = vmatprep.subr.bf16.mxu0 0
  %1848 = vmatpush1.bf16.msra.mxu0 %v217
  %1849 = vmatprep.subr.bf16.mxu0 0
  %1850 = vmatpush1.bf16.msra.mxu0 %v218
  %1851 = vmatprep.subr.bf16.mxu0 0
  %1852 = vmatpush1.bf16.msra.mxu0 %v219
  %1853 = vmatprep.subr.bf16.mxu0 0
  %1854 = vmatpush1.bf16.msra.mxu0 %v220
  %1855 = vmatprep.subr.bf16.mxu0 0
  %1856 = vmatpush1.bf16.msra.mxu0 %v307
  %1857 = vmatprep.subr.bf16.mxu0 0
  %1858 = vmatpush1.bf16.msra.mxu0 0
  %1859 = vmatprep.subr.bf16.mxu0 0
  %1860 = vmatpush1.bf16.msra.mxu0 0
  %1861 = vmatprep.subr.bf16.mxu0 0
  %1862 = vmatpush1.bf16.msra.mxu0 0
  %1863 = vmatprep.subr.bf16.mxu0 0
  %1864 = vmatpush1.bf16.msra.mxu0 0
  %1865 = vmatprep.subr.bf16.mxu0 0
  %1866 = vmatpush1.bf16.msra.mxu0 0
  %1867 = vmatprep.subr.bf16.mxu0 0
  %1868 = vmatpush1.bf16.msra.mxu0 0
  %1869 = vmatprep.subr.bf16.mxu0 0
  %1870 = vmatpush1.bf16.msra.mxu0 0
  %1871 = vmatprep.subr.bf16.mxu0 0
  %1872 = vmatpush1.bf16.msra.mxu0 0
  %1873 = vmatprep.subr.bf16.mxu0 0
  %1874 = vmatpush1.bf16.msra.mxu0 0
  %1875 = vmatprep.subr.bf16.mxu0 0
  %1876 = vmatpush1.bf16.msra.mxu0 0
  %1877 = vmatprep.subr.bf16.mxu0 0
  %1878 = vmatpush1.bf16.msra.mxu0 0
  %1879 = vmatprep.mubr.bf16.mxu0 0
  %1880 = vmatmul.mubr.bf16.gmra.mrb[0].mxu0 %v1773
  %v1881 = vpop.f32.mrb[0].mxu0
  %v1882 = vadd.f32 0.0, %v1881
  %v1883 = vpop.f32.mrb[0].mxu0
  %v1884 = vpop.f32.mrb[0].mxu0
  %v1885 = vadd.f32 0.0, %v1884
  %v1886 = vpop.f32.mrb[0].mxu0
  %1887 = vmatprep.mubr.bf16.mxu0 0
  %1888 = vmatmul.mubr.bf16.gmra.mrb[0].mxu0 %v1776
  %v1889 = vpop.f32.mrb[0].mxu0
  %v1890 = vadd.f32 0.0, %v1889
  %v1891 = vpop.f32.mrb[0].mxu0
  %v1892 = vpop.f32.mrb[0].mxu0
  %v1893 = vadd.f32 0.0, %v1892
  %v1894 = vpop.f32.mrb[0].mxu0
  %1895 = vmatprep.mubr.bf16.mxu0 0
  %1896 = vmatmul.mubr.bf16.gmra.mrb[0].mxu0 %v1779
  %v1897 = vpop.f32.mrb[0].mxu0
  %v1898 = vadd.f32 0.0, %v1897
  %v1899 = vpop.f32.mrb[0].mxu0
  %v1900 = vpop.f32.mrb[0].mxu0
  %v1901 = vadd.f32 0.0, %v1900
  %v1902 = vpop.f32.mrb[0].mxu0
  %1903 = vmatprep.mubr.bf16.mxu0 0
  %1904 = vmatmul.mubr.bf16.gmra.mrb[0].mxu0 %v1782
  %v1905 = vpop.f32.mrb[0].mxu0
  %v1906 = vadd.f32 0.0, %v1905
  %v1907 = vpop.f32.mrb[0].mxu0
  %v1908 = vpop.f32.mrb[0].mxu0
  %v1909 = vadd.f32 0.0, %v1908
  %v1910 = vpop.f32.mrb[0].mxu0
  %1911 = vmatprep.mubr.bf16.mxu0 0
  %1912 = vmatmul.mubr.bf16.gmra.mrb[0].mxu0 %v1785
  %v1913 = vpop.f32.mrb[0].mxu0
  %v1914 = vadd.f32 0.0, %v1913
  %v1915 = vpop.f32.mrb[0].mxu0
  %v1916 = vpop.f32.mrb[0].mxu0
  %v1917 = vadd.f32 0.0, %v1916
  %v1918 = vpop.f32.mrb[0].mxu0
  %1919 = vmatprep.mubr.bf16.mxu0 0
  %1920 = vmatmul.mubr.bf16.gmra.mrb[0].mxu0 %v1788
  %v1921 = vpop.f32.mrb[0].mxu0
  %v1922 = vadd.f32 0.0, %v1921
  %v1923 = vpop.f32.mrb[0].mxu0
  %v1924 = vpop.f32.mrb[0].mxu0
  %v1925 = vadd.f32 0.0, %v1924
  %v1926 = vpop.f32.mrb[0].mxu0
  %1927 = vmatprep.mubr.bf16.mxu0 0
  %1928 = vmatmul.mubr.bf16.gmra.mrb[0].mxu0 %v1791
  %v1929 = vpop.f32.mrb[0].mxu0
  %v1930 = vadd.f32 0.0, %v1929
  %v1931 = vpop.f32.mrb[0].mxu0
  %v1932 = vpop.f32.mrb[0].mxu0
  %v1933 = vadd.f32 0.0, %v1932
  %v1934 = vpop.f32.mrb[0].mxu0
  %1935 = vmatprep.mubr.bf16.mxu0 0
  %1936 = vmatmul.mubr.bf16.gmra.mrb[0].mxu0 %v1794
  %v1937 = vpop.f32.mrb[0].mxu0
  %v1938 = vadd.f32 0.0, %v1937
  %v1939 = vpop.f32.mrb[0].mxu0
  %v1940 = vpop.f32.mrb[0].mxu0
  %v1941 = vadd.f32 0.0, %v1940
  %v1942 = vpop.f32.mrb[0].mxu0
  %1943 = vmatprep.mubr.bf16.mxu0 0
  %1944 = vmatmul.mubr.bf16.gmra.mrb[0].mxu0 %v1797
  %v1945 = vpop.f32.mrb[0].mxu0
  %v1946 = vadd.f32 0.0, %v1945
  %v1947 = vpop.f32.mrb[0].mxu0
  %v1948 = vpop.f32.mrb[0].mxu0
  %v1949 = vadd.f32 0.0, %v1948
  %v1950 = vpop.f32.mrb[0].mxu0
  %1951 = vmatprep.mubr.bf16.mxu0 0
  %1952 = vmatmul.mubr.bf16.gmra.mrb[0].mxu0 %v1800
  %v1953 = vpop.f32.mrb[0].mxu0
  %v1954 = vadd.f32 0.0, %v1953
  %v1955 = vpop.f32.mrb[0].mxu0
  %v1956 = vpop.f32.mrb[0].mxu0
  %v1957 = vadd.f32 0.0, %v1956
  %v1958 = vpop.f32.mrb[0].mxu0
  %1959 = vmatprep.mubr.bf16.mxu0 0
  %1960 = vmatmul.mubr.bf16.gmra.mrb[0].mxu0 %v1803
  %v1961 = vpop.f32.mrb[0].mxu0
  %v1962 = vadd.f32 0.0, %v1961
  %v1963 = vpop.f32.mrb[0].mxu0
  %v1964 = vpop.f32.mrb[0].mxu0
  %v1965 = vadd.f32 0.0, %v1964
  %v1966 = vpop.f32.mrb[0].mxu0
  %1967 = vmatprep.mubr.bf16.mxu0 0
  %1968 = vmatmul.mubr.bf16.gmra.mrb[0].mxu0 %v1806
  %v1969 = vpop.f32.mrb[0].mxu0
  %v1970 = vadd.f32 0.0, %v1969
  %v1971 = vpop.f32.mrb[0].mxu0
  %v1972 = vpop.f32.mrb[0].mxu0
  %v1973 = vadd.f32 0.0, %v1972
  %v1974 = vpop.f32.mrb[0].mxu0
  %1975 = vmatprep.mubr.bf16.mxu0 0
  %1976 = vmatmul.mubr.bf16.gmra.mrb[0].mxu0 %v1809
  %v1977 = vpop.f32.mrb[0].mxu0
  %v1978 = vadd.f32 0.0, %v1977
  %v1979 = vpop.f32.mrb[0].mxu0
  %v1980 = vpop.f32.mrb[0].mxu0
  %v1981 = vadd.f32 0.0, %v1980
  %v1982 = vpop.f32.mrb[0].mxu0
  %1983 = vmatprep.mubr.bf16.mxu0 0
  %1984 = vmatmul.mubr.bf16.gmra.mrb[0].mxu0 %v1812
  %v1985 = vpop.f32.mrb[0].mxu0
  %v1986 = vadd.f32 0.0, %v1985
  %v1987 = vpop.f32.mrb[0].mxu0
  %v1988 = vpop.f32.mrb[0].mxu0
  %v1989 = vadd.f32 0.0, %v1988
  %v1990 = vpop.f32.mrb[0].mxu0
  %1991 = vmatprep.mubr.bf16.mxu0 0
  %1992 = vmatmul.mubr.bf16.gmra.mrb[0].mxu0 %v1815
  %v1993 = vpop.f32.mrb[0].mxu0
  %v1994 = vadd.f32 0.0, %v1993
  %v1995 = vpop.f32.mrb[0].mxu0
  %v1996 = vpop.f32.mrb[0].mxu0
  %v1997 = vadd.f32 0.0, %v1996
  %v1998 = vpop.f32.mrb[0].mxu0
  %1999 = vmatprep.mubr.bf16.mxu0 0
  %2000 = vmatmul.mubr.bf16.gmra.mrb[0].mxu0 %v1818
  %v2001 = vpop.f32.mrb[0].mxu0
  %v2002 = vadd.f32 0.0, %v2001
  %v2003 = vpop.f32.mrb[0].mxu0
  %v2004 = vpop.f32.mrb[0].mxu0
  %v2005 = vadd.f32 0.0, %v2004
  %v2006 = vpop.f32.mrb[0].mxu0
  %2007 = vmatprep.mubr.bf16.mxu0 0
  %2008 = vmatmul.mubr.bf16.gmra.mrb[0].mxu0 %v1821
  %v2009 = vpop.f32.mrb[0].mxu0
  %v2010 = vadd.f32 0.0, %v2009
  %v2011 = vpop.f32.mrb[0].mxu0
  %v2012 = vpop.f32.mrb[0].mxu0
  %v2013 = vadd.f32 0.0, %v2012
  %v2014 = vpop.f32.mrb[0].mxu0
  %2015 = vmatprep.mubr.bf16.mxu0 0
  %2016 = vmatmul.mubr.bf16.gmra.mrb[0].mxu0 %v1824
  %v2017 = vpop.f32.mrb[0].mxu0
  %v2018 = vadd.f32 0.0, %v2017
  %v2019 = vpop.f32.mrb[0].mxu0
  %v2020 = vpop.f32.mrb[0].mxu0
  %v2021 = vadd.f32 0.0, %v2020
  %v2022 = vpop.f32.mrb[0].mxu0
  %2023 = vmatprep.mubr.bf16.mxu0 0
  %2024 = vmatmul.mubr.bf16.gmra.mrb[0].mxu0 %v1827
  %v2025 = vpop.f32.mrb[0].mxu0
  %v2026 = vadd.f32 0.0, %v2025
  %v2027 = vpop.f32.mrb[0].mxu0
  %v2028 = vpop.f32.mrb[0].mxu0
  %v2029 = vadd.f32 0.0, %v2028
  %v2030 = vpop.f32.mrb[0].mxu0
  %2031 = vmatprep.mubr.bf16.mxu0 0
  %2032 = vmatmul.mubr.bf16.gmra.mrb[0].mxu0 %v1830
  %v2033 = vpop.f32.mrb[0].mxu0
  %v2034 = vadd.f32 0.0, %v2033
  %v2035 = vpop.f32.mrb[0].mxu0
  %v2036 = vpop.f32.mrb[0].mxu0
  %v2037 = vadd.f32 0.0, %v2036
  %v2038 = vpop.f32.mrb[0].mxu0
  %2039 = vmatprep.mubr.bf16.mxu0 0
  %2040 = vmatmul.mubr.bf16.gmra.mrb[0].mxu0 %v1833
  %v2041 = vpop.f32.mrb[0].mxu0
  %v2042 = vadd.f32 0.0, %v2041
  %v2043 = vpop.f32.mrb[0].mxu0
  %v2044 = vpop.f32.mrb[0].mxu0
  %v2045 = vadd.f32 0.0, %v2044
  %v2046 = vpop.f32.mrb[0].mxu0
  %2047 = vmatprep.mubr.bf16.mxu0 0
  %2048 = vmatmul.mubr.bf16.gmra.mrb[0].mxu0 %v1836
  %v2049 = vpop.f32.mrb[0].mxu0
  %v2050 = vadd.f32 0.0, %v2049
  %v2051 = vpop.f32.mrb[0].mxu0
  %v2052 = vpop.f32.mrb[0].mxu0
  %v2053 = vadd.f32 0.0, %v2052
  %v2054 = vpop.f32.mrb[0].mxu0
  %2055 = vmatprep.mubr.bf16.mxu0 0
  %2056 = vmatmul.mubr.bf16.gmra.mrb[0].mxu0 %v1839
  %v2057 = vpop.f32.mrb[0].mxu0
  %v2058 = vadd.f32 0.0, %v2057
  %v2059 = vpop.f32.mrb[0].mxu0
  %v2060 = vpop.f32.mrb[0].mxu0
  %v2061 = vadd.f32 0.0, %v2060
  %v2062 = vpop.f32.mrb[0].mxu0
  %2063 = vmatprep.mubr.bf16.mxu0 0
  %2064 = vmatmul.mubr.bf16.gmra.mrb[0].mxu0 %v1842
  %v2065 = vpop.f32.mrb[0].mxu0
  %v2066 = vadd.f32 0.0, %v2065
  %v2067 = vpop.f32.mrb[0].mxu0
  %v2068 = vpop.f32.mrb[0].mxu0
  %v2069 = vadd.f32 0.0, %v2068
  %v2070 = vpop.f32.mrb[0].mxu0
  %2071 = vmatprep.mubr.bf16.mxu0 0
  %2072 = vmatmul.mubr.bf16.gmra.mrb[0].mxu0 %v1845
  %v2073 = vpop.f32.mrb[0].mxu0
  %v2074 = vadd.f32 0.0, %v2073
  %v2075 = vpop.f32.mrb[0].mxu0
  %v2076 = vpop.f32.mrb[0].mxu0
  %v2077 = vpop.f32.mrb[0].mxu0
  %2078 = vdwg.mxu0
  %v2079 = vmax.f32 %v1550, %v1882
  %v2080 = vmax.f32 %v1551, %v1885
  %v2081 = vmax.f32 %v1552, %v1890
  %v2082 = vmax.f32 %v1553, %v1893
  %v2083 = vmax.f32 %v1554, %v1898
  %v2084 = vmax.f32 %v1555, %v1901
  %v2085 = vmax.f32 %v1556, %v1906
  %v2086 = vmax.f32 %v1557, %v1909
  %v2087 = vmax.f32 %v1558, %v1914
  %v2088 = vmax.f32 %v1559, %v1917
  %v2089 = vmax.f32 %v1560, %v1922
  %v2090 = vmax.f32 %v1561, %v1925
  %v2091 = vmax.f32 %v1562, %v1930
  %v2092 = vmax.f32 %v1563, %v1933
  %v2093 = vmax.f32 %v1564, %v1938
  %v2094 = vmax.f32 %v1565, %v1941
  %v2095 = vmax.f32 %v1566, %v1946
  %v2096 = vmax.f32 %v1567, %v1949
  %v2097 = vmax.f32 %v1568, %v1954
  %v2098 = vmax.f32 %v1569, %v1957
  %v2099 = vmax.f32 %v1570, %v1962
  %v2100 = vmax.f32 %v1571, %v1965
  %v2101 = vmax.f32 %v1572, %v1970
  %v2102 = vmax.f32 %v1573, %v1973
  %v2103 = vmax.f32 %v1574, %v1978
  %v2104 = vmax.f32 %v1575, %v1981
  %v2105 = vmax.f32 %v1576, %v1986
  %v2106 = vmax.f32 %v1577, %v1989
  %v2107 = vmax.f32 %v1578, %v1994
  %v2108 = vmax.f32 %v1579, %v1997
  %v2109 = vmax.f32 %v1580, %v2002
  %v2110 = vmax.f32 %v1581, %v2005
  %v2111 = vmax.f32 %v1582, %v2010
  %v2112 = vmax.f32 %v1583, %v2013
  %v2113 = vmax.f32 %v1584, %v2018
  %v2114 = vmax.f32 %v1585, %v2021
  %v2115 = vmax.f32 %v1586, %v2026
  %v2116 = vmax.f32 %v1587, %v2029
  %v2117 = vmax.f32 %v1588, %v2034
  %v2118 = vmax.f32 %v1589, %v2037
  %v2119 = vmax.f32 %v1590, %v2042
  %v2120 = vmax.f32 %v1591, %v2045
  %v2121 = vmax.f32 %v1592, %v2050
  %v2122 = vmax.f32 %v1593, %v2053
  %v2123 = vmax.f32 %v1594, %v2058
  %v2124 = vmax.f32 %v1595, %v2061
  %v2125 = vmax.f32 %v1596, %v2066
  %v2126 = vmax.f32 %v1597, %v2069
  %v2127 = vmax.f32 %v1598, %v2074
  %v2128 = vld [vmem:[%s2] sm:$0x1]
  %v2130 = vlaneseq
  %v2131 = vshrl.u32 %v2130, 7
  %v2132 = vsub.s32 0, %v2131
  %v2133 = vrot.slane %v2128, %v2132
  %v2135 = vadd.f32 %v2079, %v2133
  %v2136 = vadd.f32 %v2080, %v2133
  %v2137 = vadd.f32 %v2081, %v2133
  %v2138 = vadd.f32 %v2082, %v2133
  %v2139 = vadd.f32 %v2083, %v2133
  %v2140 = vadd.f32 %v2084, %v2133
  %v2141 = vadd.f32 %v2085, %v2133
  %v2142 = vadd.f32 %v2086, %v2133
  %v2143 = vadd.f32 %v2087, %v2133
  %v2144 = vadd.f32 %v2088, %v2133
  %v2145 = vadd.f32 %v2089, %v2133
  %v2146 = vadd.f32 %v2090, %v2133
  %v2147 = vadd.f32 %v2091, %v2133
  %v2148 = vadd.f32 %v2092, %v2133
  %v2149 = vadd.f32 %v2093, %v2133
  %v2150 = vadd.f32 %v2094, %v2133
  %v2151 = vadd.f32 %v2095, %v2133
  %v2152 = vadd.f32 %v2096, %v2133
  %v2153 = vadd.f32 %v2097, %v2133
  %v2154 = vadd.f32 %v2098, %v2133
  %v2155 = vadd.f32 %v2099, %v2133
  %v2156 = vadd.f32 %v2100, %v2133
  %v2157 = vadd.f32 %v2101, %v2133
  %v2158 = vadd.f32 %v2102, %v2133
  %v2159 = vadd.f32 %v2103, %v2133
  %v2160 = vadd.f32 %v2104, %v2133
  %v2161 = vadd.f32 %v2105, %v2133
  %v2162 = vadd.f32 %v2106, %v2133
  %v2163 = vadd.f32 %v2107, %v2133
  %v2164 = vadd.f32 %v2108, %v2133
  %v2165 = vadd.f32 %v2109, %v2133
  %v2166 = vadd.f32 %v2110, %v2133
  %v2167 = vadd.f32 %v2111, %v2133
  %v2168 = vadd.f32 %v2112, %v2133
  %v2169 = vadd.f32 %v2113, %v2133
  %v2170 = vadd.f32 %v2114, %v2133
  %v2171 = vadd.f32 %v2115, %v2133
  %v2172 = vadd.f32 %v2116, %v2133
  %v2173 = vadd.f32 %v2117, %v2133
  %v2174 = vadd.f32 %v2118, %v2133
  %v2175 = vadd.f32 %v2119, %v2133
  %v2176 = vadd.f32 %v2120, %v2133
  %v2177 = vadd.f32 %v2121, %v2133
  %v2178 = vadd.f32 %v2122, %v2133
  %v2179 = vadd.f32 %v2123, %v2133
  %v2180 = vadd.f32 %v2124, %v2133
  %v2181 = vadd.f32 %v2125, %v2133
  %v2182 = vadd.f32 %v2126, %v2133
  %v2183 = vadd.f32 %v2127, %v2133
  %v2184 = vmax.f32 %v2135, 0.0
  %v2185 = vmax.f32 %v2136, 0.0
  %v2186 = vmax.f32 %v2137, 0.0
  %v2187 = vmax.f32 %v2138, 0.0
  %v2188 = vmax.f32 %v2139, 0.0
  %v2189 = vmax.f32 %v2140, 0.0
  %v2190 = vmax.f32 %v2141, 0.0
  %v2191 = vmax.f32 %v2142, 0.0
  %v2192 = vmax.f32 %v2143, 0.0
  %v2193 = vmax.f32 %v2144, 0.0
  %v2194 = vmax.f32 %v2145, 0.0
  %v2195 = vmax.f32 %v2146, 0.0
  %v2196 = vmax.f32 %v2147, 0.0
  %v2197 = vmax.f32 %v2148, 0.0
  %v2198 = vmax.f32 %v2149, 0.0
  %v2199 = vmax.f32 %v2150, 0.0
  %v2200 = vmax.f32 %v2151, 0.0
  %v2201 = vmax.f32 %v2152, 0.0
  %v2202 = vmax.f32 %v2153, 0.0
  %v2203 = vmax.f32 %v2154, 0.0
  %v2204 = vmax.f32 %v2155, 0.0
  %v2205 = vmax.f32 %v2156, 0.0
  %v2206 = vmax.f32 %v2157, 0.0
  %v2207 = vmax.f32 %v2158, 0.0
  %v2208 = vmax.f32 %v2159, 0.0
  %v2209 = vmax.f32 %v2160, 0.0
  %v2210 = vmax.f32 %v2161, 0.0
  %v2211 = vmax.f32 %v2162, 0.0
  %v2212 = vmax.f32 %v2163, 0.0
  %v2213 = vmax.f32 %v2164, 0.0
  %v2214 = vmax.f32 %v2165, 0.0
  %v2215 = vmax.f32 %v2166, 0.0
  %v2216 = vmax.f32 %v2167, 0.0
  %v2217 = vmax.f32 %v2168, 0.0
  %v2218 = vmax.f32 %v2169, 0.0
  %v2219 = vmax.f32 %v2170, 0.0
  %v2220 = vmax.f32 %v2171, 0.0
  %v2221 = vmax.f32 %v2172, 0.0
  %v2222 = vmax.f32 %v2173, 0.0
  %v2223 = vmax.f32 %v2174, 0.0
  %v2224 = vmax.f32 %v2175, 0.0
  %v2225 = vmax.f32 %v2176, 0.0
  %v2226 = vmax.f32 %v2177, 0.0
  %v2227 = vmax.f32 %v2178, 0.0
  %v2228 = vmax.f32 %v2179, 0.0
  %v2229 = vmax.f32 %v2180, 0.0
  %v2230 = vmax.f32 %v2181, 0.0
  %v2231 = vmax.f32 %v2182, 0.0
  %v2232 = vmax.f32 %v2183, 0.0
  %v2233 = vpack.c.bf16 %v2185, %v2184
  %v2234 = vpack.c.bf16 %v2187, %v2186
  %v2235 = vpack.c.bf16 %v2189, %v2188
  %v2236 = vpack.c.bf16 %v2191, %v2190
  %v2237 = vpack.c.bf16 %v2193, %v2192
  %v2238 = vpack.c.bf16 %v2195, %v2194
  %v2239 = vpack.c.bf16 %v2197, %v2196
  %v2240 = vpack.c.bf16 %v2199, %v2198
  %v2241 = vpack.c.bf16 %v2201, %v2200
  %v2242 = vpack.c.bf16 %v2203, %v2202
  %v2243 = vpack.c.bf16 %v2205, %v2204
  %v2244 = vpack.c.bf16 %v2207, %v2206
  %v2245 = vpack.c.bf16 %v2209, %v2208
  %v2246 = vpack.c.bf16 %v2211, %v2210
  %v2247 = vpack.c.bf16 %v2213, %v2212
  %v2248 = vpack.c.bf16 %v2215, %v2214
  %v2249 = vpack.c.bf16 %v2217, %v2216
  %v2250 = vpack.c.bf16 %v2219, %v2218
  %v2251 = vpack.c.bf16 %v2221, %v2220
  %v2252 = vpack.c.bf16 %v2223, %v2222
  %v2253 = vpack.c.bf16 %v2225, %v2224
  %v2254 = vpack.c.bf16 %v2227, %v2226
  %v2255 = vpack.c.bf16 %v2229, %v2228
  %v2256 = vpack.c.bf16 %v2231, %v2230
  %v2257 = vpack.c.bf16 %v2232, %v2232
  %v2283 = vunpack.c.l.b16 %v2233
  %v2284 = vunpack.c.h.b16 %v2233
  %v2285 = vunpack.c.l.b16 %v2234
  %v2286 = vunpack.c.h.b16 %v2234
  %v2287 = vunpack.c.l.b16 %v2235
  %v2288 = vunpack.c.h.b16 %v2235
  %v2289 = vunpack.c.l.b16 %v2236
  %v2290 = vunpack.c.h.b16 %v2236
  %v2291 = vunpack.c.l.b16 %v2237
  %v2292 = vunpack.c.h.b16 %v2237
  %v2293 = vunpack.c.l.b16 %v2238
  %v2294 = vunpack.c.h.b16 %v2238
  %v2295 = vunpack.c.l.b16 %v2239
  %v2296 = vunpack.c.h.b16 %v2239
  %v2297 = vunpack.c.l.b16 %v2240
  %v2298 = vunpack.c.h.b16 %v2240
  %v2299 = vunpack.c.l.b16 %v2241
  %v2300 = vunpack.c.h.b16 %v2241
  %v2301 = vunpack.c.l.b16 %v2242
  %v2302 = vunpack.c.h.b16 %v2242
  %v2303 = vunpack.c.l.b16 %v2243
  %v2304 = vunpack.c.h.b16 %v2243
  %v2305 = vunpack.c.l.b16 %v2244
  %v2306 = vunpack.c.h.b16 %v2244
  %v2307 = vunpack.c.l.b16 %v2245
  %v2308 = vunpack.c.h.b16 %v2245
  %v2309 = vunpack.c.l.b16 %v2246
  %v2310 = vunpack.c.h.b16 %v2246
  %v2311 = vunpack.c.l.b16 %v2247
  %v2312 = vunpack.c.h.b16 %v2247
  %v2313 = vunpack.c.l.b16 %v2248
  %v2314 = vunpack.c.h.b16 %v2248
  %v2315 = vunpack.c.l.b16 %v2249
  %v2316 = vunpack.c.h.b16 %v2249
  %v2317 = vunpack.c.l.b16 %v2250
  %v2318 = vunpack.c.h.b16 %v2250
  %v2319 = vunpack.c.l.b16 %v2251
  %v2320 = vunpack.c.h.b16 %v2251
  %v2321 = vunpack.c.l.b16 %v2252
  %v2322 = vunpack.c.h.b16 %v2252
  %v2323 = vunpack.c.l.b16 %v2253
  %v2324 = vunpack.c.h.b16 %v2253
  %v2325 = vunpack.c.l.b16 %v2254
  %v2326 = vunpack.c.h.b16 %v2254
  %v2327 = vunpack.c.l.b16 %v2255
  %v2328 = vunpack.c.h.b16 %v2255
  %v2329 = vunpack.c.l.b16 %v2256
  %v2330 = vunpack.c.h.b16 %v2256
  %v2331 = vunpack.c.l.b16 %v2257
  %v2332 = vpack.c.b16 %v2283, %v2283
  %v2333 = vpack.c.b16 %v2284, %v2284
  %v2334 = vpack.c.b16 %v2285, %v2285
  %v2335 = vpack.c.b16 %v2286, %v2286
  %v2336 = vpack.c.b16 %v2287, %v2287
  %v2337 = vpack.c.b16 %v2288, %v2288
  %v2338 = vpack.c.b16 %v2289, %v2289
  %v2339 = vpack.c.b16 %v2290, %v2290
  %v2340 = vpack.c.b16 %v2291, %v2291
  %v2341 = vpack.c.b16 %v2292, %v2292
  %v2342 = vpack.c.b16 %v2293, %v2293
  %v2343 = vpack.c.b16 %v2294, %v2294
  %v2344 = vpack.c.b16 %v2295, %v2295
  %v2345 = vpack.c.b16 %v2296, %v2296
  %v2346 = vpack.c.b16 %v2297, %v2297
  %v2347 = vpack.c.b16 %v2298, %v2298
  %v2348 = vpack.c.b16 %v2299, %v2299
  %v2349 = vpack.c.b16 %v2300, %v2300
  %v2350 = vpack.c.b16 %v2301, %v2301
  %v2351 = vpack.c.b16 %v2302, %v2302
  %v2352 = vpack.c.b16 %v2303, %v2303
  %v2353 = vpack.c.b16 %v2304, %v2304
  %v2354 = vpack.c.b16 %v2305, %v2305
  %v2355 = vpack.c.b16 %v2306, %v2306
  %v2356 = vpack.c.b16 %v2307, %v2307
  %v2357 = vpack.c.b16 %v2308, %v2308
  %v2358 = vpack.c.b16 %v2309, %v2309
  %v2359 = vpack.c.b16 %v2310, %v2310
  %v2360 = vpack.c.b16 %v2311, %v2311
  %v2361 = vpack.c.b16 %v2312, %v2312
  %v2362 = vpack.c.b16 %v2313, %v2313
  %v2363 = vpack.c.b16 %v2314, %v2314
  %v2364 = vpack.c.b16 %v2315, %v2315
  %v2365 = vpack.c.b16 %v2316, %v2316
  %v2366 = vpack.c.b16 %v2317, %v2317
  %v2367 = vpack.c.b16 %v2318, %v2318
  %v2368 = vpack.c.b16 %v2319, %v2319
  %v2369 = vpack.c.b16 %v2320, %v2320
  %v2370 = vpack.c.b16 %v2321, %v2321
  %v2371 = vpack.c.b16 %v2322, %v2322
  %v2372 = vpack.c.b16 %v2323, %v2323
  %v2373 = vpack.c.b16 %v2324, %v2324
  %v2374 = vpack.c.b16 %v2325, %v2325
  %v2375 = vpack.c.b16 %v2326, %v2326
  %v2376 = vpack.c.b16 %v2327, %v2327
  %v2377 = vpack.c.b16 %v2328, %v2328
  %v2378 = vpack.c.b16 %v2329, %v2329
  %v2379 = vpack.c.b16 %v2330, %v2330
  %v2380 = vpack.c.b16 %v2331, %v2331
  %2430 = vst [vmem:[%s3] sm:$0xf] %v2332
  %2431 = vst [vmem:[%s3 + $0x4] sm:$0xf] %v2333
  %2432 = vst [vmem:[%s3 + $0x8] sm:$0xf] %v2334
  %2433 = vst [vmem:[%s3 + $0xc] sm:$0xf] %v2335
  %2434 = vst [vmem:[%s3 + $0x10] sm:$0xf] %v2336
  %2435 = vst [vmem:[%s3 + $0x14] sm:$0xf] %v2337
  %2436 = vst [vmem:[%s3 + $0x18] sm:$0xf] %v2338
  %2437 = vst [vmem:[%s3 + $0x1c] sm:$0xf] %v2339
  %2438 = vst [vmem:[%s3 + $0x20] sm:$0xf] %v2340
  %2439 = vst [vmem:[%s3 + $0x24] sm:$0xf] %v2341
  %2440 = vst [vmem:[%s3 + $0x28] sm:$0xf] %v2342
  %2441 = vst [vmem:[%s3 + $0x2c] sm:$0xf] %v2343
  %2442 = vst [vmem:[%s3 + $0x30] sm:$0xf] %v2344
  %2443 = vst [vmem:[%s3 + $0x34] sm:$0xf] %v2345
  %2444 = vst [vmem:[%s3 + $0x38] sm:$0xf] %v2346
  %2445 = vst [vmem:[%s3 + $0x3c] sm:$0xf] %v2347
  %2446 = vst [vmem:[%s3 + $0x40] sm:$0xf] %v2348
  %2447 = vst [vmem:[%s3 + $0x44] sm:$0xf] %v2349
  %2448 = vst [vmem:[%s3 + $0x48] sm:$0xf] %v2350
  %2449 = vst [vmem:[%s3 + $0x4c] sm:$0xf] %v2351
  %2450 = vst [vmem:[%s3 + $0x50] sm:$0xf] %v2352
  %2451 = vst [vmem:[%s3 + $0x54] sm:$0xf] %v2353
  %2452 = vst [vmem:[%s3 + $0x58] sm:$0xf] %v2354
  %2453 = vst [vmem:[%s3 + $0x5c] sm:$0xf] %v2355
  %2454 = vst [vmem:[%s3 + $0x60] sm:$0xf] %v2356
  %2455 = vst [vmem:[%s3 + $0x64] sm:$0xf] %v2357
  %2456 = vst [vmem:[%s3 + $0x68] sm:$0xf] %v2358
  %2457 = vst [vmem:[%s3 + $0x6c] sm:$0xf] %v2359
  %2458 = vst [vmem:[%s3 + $0x70] sm:$0xf] %v2360
  %2459 = vst [vmem:[%s3 + $0x74] sm:$0xf] %v2361
  %2460 = vst [vmem:[%s3 + $0x78] sm:$0xf] %v2362
  %2461 = vst [vmem:[%s3 + $0x7c] sm:$0xf] %v2363
  %2462 = vst [vmem:[%s3 + $0x80] sm:$0xf] %v2364
  %2463 = vst [vmem:[%s3 + $0x84] sm:$0xf] %v2365
  %2464 = vst [vmem:[%s3 + $0x88] sm:$0xf] %v2366
  %2465 = vst [vmem:[%s3 + $0x8c] sm:$0xf] %v2367
  %2466 = vst [vmem:[%s3 + $0x90] sm:$0xf] %v2368
  %2467 = vst [vmem:[%s3 + $0x94] sm:$0xf] %v2369
  %2468 = vst [vmem:[%s3 + $0x98] sm:$0xf] %v2370
  %2469 = vst [vmem:[%s3 + $0x9c] sm:$0xf] %v2371
  %2470 = vst [vmem:[%s3 + $0xa0] sm:$0xf] %v2372
  %2471 = vst [vmem:[%s3 + $0xa4] sm:$0xf] %v2373
  %2472 = vst [vmem:[%s3 + $0xa8] sm:$0xf] %v2374
  %2473 = vst [vmem:[%s3 + $0xac] sm:$0xf] %v2375
  %2474 = vst [vmem:[%s3 + $0xb0] sm:$0xf] %v2376
  %2475 = vst [vmem:[%s3 + $0xb4] sm:$0xf] %v2377
  %2476 = vst [vmem:[%s3 + $0xb8] sm:$0xf] %v2378
  %2477 = vst [vmem:[%s3 + $0xbc] sm:$0xf] %v2379
  %2478 = vst [vmem:[%s3 + $0xc0] sm:$0xf] %v2380
  // Predicated region
  $region14: #{lenet_forward.3} parent=0 // pred_check
    _
  $region15: #{lenet_forward.3} parent=0 // pred_check_branch
    %2480 = sbr.rel (0) target = $region17
  $region16: #{lenet_forward.3} parent=0 // pred_region
    _
  $region17: #{lenet_forward.3} parent=0 // pred_fallthru
    _
  // Predicated region
  $region18: #{lenet_forward.3} parent=0 // pred_check
    _
  $region19: #{lenet_forward.3} parent=0 // pred_check_branch
    %2482 = sbr.rel (0) target = $region21
  $region20: #{lenet_forward.3} parent=0 // pred_region
    _
  $region21: #{lenet_forward.3} parent=0 // pred_fallthru
    _

// kernel: lenet_forward.4
$region0: #{lenet_forward.4}
  #allocation0 [shape = 'u32[]', space=smem, size = 0x4, offset = 0x4, fixed_abs, tag = 'smem constant byte address 0x4 - core index']
  #allocation1 [shape = 'u32[144,128]{1,0:T(1,128)}', space=vmem, size = 0x12000, scoped, tag = 'internal scratch']
  %s0 = inlined_call_operand.vmem [shape: bf16[4,56,150], index: 0, kind: input, shape index: {}]
  %s1 = inlined_call_operand.vmem [shape: bf16[150,128], index: 1, kind: input, shape index: {}]
  %s2 = inlined_call_operand.vmem [shape: f32[1,128], index: 2, kind: input, shape index: {}]
  %s3 = inlined_call_operand.vmem [shape: bf16[56,128], index: 3, kind: output, shape index: {}]
  %s4 = sld [smem:[#allocation0]]
  $region22: #{lenet_forward.4} parent=0
    _
  %s6 = ssub.s32 1, %s4
  %s7 = scalar_select 0, %s6, %s4
  // Predicated region
  $region2: #{lenet_forward.4} parent=0 // pred_check
    _
  $region3: #{lenet_forward.4} parent=0 // pred_check_branch
    %9 = sbr.rel (0) target = $region5
  $region4: #{lenet_forward.4} parent=0 // pred_region
    _
  $region5: #{lenet_forward.4} parent=0 // pred_fallthru
    _
  // Predicated region
  $region6: #{lenet_forward.4} parent=0 // pred_check
    _
  $region7: #{lenet_forward.4} parent=0 // pred_check_branch
    %11 = sbr.rel (0) target = $region9
  $region8: #{lenet_forward.4} parent=0 // pred_region
    _
  $region9: #{lenet_forward.4} parent=0 // pred_fallthru
    _
  // Predicated region
  $region10: #{lenet_forward.4} parent=0 // pred_check
    _
  $region11: #{lenet_forward.4} parent=0 // pred_check_branch
    %13 = sbr.rel (0) target = $region13
  $region12: #{lenet_forward.4} parent=0 // pred_region
    _
  $region13: #{lenet_forward.4} parent=0 // pred_fallthru
    _
  %v15 = vld [vmem:[%s1] sm:$0xf]
  %v16 = vld [vmem:[%s1 + $0x4] sm:$0xf]
  %v17 = vld [vmem:[%s1 + $0x8] sm:$0xf]
  %v18 = vld [vmem:[%s1 + $0xc] sm:$0xf]
  %v19 = vld [vmem:[%s1 + $0x10] sm:$0xf]
  %v20 = vld [vmem:[%s1 + $0x14] sm:$0xf]
  %v21 = vld [vmem:[%s1 + $0x18] sm:$0xf]
  %v22 = vld [vmem:[%s1 + $0x1c] sm:$0xf]
  %v23 = vld [vmem:[%s1 + $0x20] sm:$0xf]
  %v24 = vld [vmem:[%s1 + $0x24] sm:$0xf]
  %v25 = vld [vmem:[%s1 + $0x28] sm:$0xf]
  %v26 = vld [vmem:[%s1 + $0x2c] sm:$0xf]
  %v27 = vld [vmem:[%s1 + $0x30] sm:$0xf]
  %v28 = vld [vmem:[%s1 + $0x34] sm:$0xf]
  %v29 = vld [vmem:[%s1 + $0x38] sm:$0xf]
  %v30 = vld [vmem:[%s1 + $0x3c] sm:$0xf]
  %v31 = vld [vmem:[%s1 + $0x40] sm:$0xf]
  %v32 = vld [vmem:[%s1 + $0x44] sm:$0xf]
  %v33 = vld [vmem:[%s1 + $0x48] sm:$0x7]
  %v34 = vld [vmem:[%s0] sm:$0xff]
  %v35 = vld [vmem:[%s0 + $0x8] sm:$0xff]
  %v36 = vld [vmem:[%s0 + $0x10] sm:$0xff]
  %v37 = vld [vmem:[%s0 + $0x18] sm:$0xff]
  %v38 = vld [vmem:[%s0 + $0x20] sm:$0xff]
  %v39 = vld [vmem:[%s0 + $0x28] sm:$0xff]
  %v40 = vld [vmem:[%s0 + $0x30] sm:$0xff]
  %v48 = vunpack.c.l.b16 %v34
  %v49 = vunpack.c.h.b16 %v34
  %v50 = vunpack.c.l.b16 %v35
  %v51 = vunpack.c.h.b16 %v35
  %v52 = vunpack.c.l.b16 %v36
  %v53 = vunpack.c.h.b16 %v36
  %v54 = vunpack.c.l.b16 %v37
  %v55 = vunpack.c.h.b16 %v37
  %v56 = vunpack.c.l.b16 %v38
  %v57 = vunpack.c.h.b16 %v38
  %v58 = vunpack.c.l.b16 %v39
  %v59 = vunpack.c.h.b16 %v39
  %v60 = vunpack.c.l.b16 %v40
  %v61 = vunpack.c.h.b16 %v40
  %v62 = vpack.c.b16 %v50, %v48
  %v63 = vpack.c.b16 %v51, %v49
  %v64 = vpack.c.b16 %v54, %v52
  %v65 = vpack.c.b16 %v55, %v53
  %v66 = vpack.c.b16 %v58, %v56
  %v67 = vpack.c.b16 %v59, %v57
  %v68 = vpack.c.b16 %v60, %v60
  %v69 = vpack.c.b16 %v61, %v61
  %v93 = vunpack.c.l.b16 %v15
  %v94 = vunpack.c.l.b16 %v16
  %v95 = vunpack.c.l.b16 %v17
  %v96 = vunpack.c.l.b16 %v18
  %v97 = vunpack.c.l.b16 %v19
  %v98 = vunpack.c.l.b16 %v20
  %v99 = vunpack.c.l.b16 %v21
  %v100 = vunpack.c.l.b16 %v22
  %v101 = vunpack.c.l.b16 %v23
  %v102 = vunpack.c.l.b16 %v24
  %v103 = vunpack.c.l.b16 %v25
  %v104 = vunpack.c.l.b16 %v26
  %v105 = vunpack.c.l.b16 %v27
  %v106 = vunpack.c.l.b16 %v28
  %v107 = vunpack.c.l.b16 %v29
  %v108 = vunpack.c.l.b16 %v30
  %v109 = vunpack.c.l.b16 %v31
  %v110 = vunpack.c.l.b16 %v32
  %v111 = vunpack.c.l.b16 %v33
  %v112 = vpack.c.b16 %v94, %v93
  %v113 = vpack.c.b16 %v96, %v95
  %v114 = vpack.c.b16 %v98, %v97
  %v115 = vpack.c.b16 %v100, %v99
  %v116 = vpack.c.b16 %v102, %v101
  %v117 = vpack.c.b16 %v104, %v103
  %v118 = vpack.c.b16 %v106, %v105
  %v119 = vpack.c.b16 %v108, %v107
  %v120 = vpack.c.b16 %v110, %v109
  %v121 = vpack.c.b16 %v111, %v111
  %vm131 = vcmask 179200
  %v133 = vsel %vm131, %v63, 0
  %v136 = vsel %vm131, %v65, 0
  %v139 = vsel %vm131, %v67, 0
  %v142 = vsel %vm131, %v69, 0
  %vm144 = vcmask 1042432
  %v146 = vsel %vm144, %v121, 0
  %148 = vmatprep.subr.bf16.mxu0 0
  %149 = vmatpush1.bf16.msra.mxu0 %v112
  %150 = vmatprep.subr.bf16.mxu0 0
  %151 = vmatpush1.bf16.msra.mxu0 %v113
  %152 = vmatprep.subr.bf16.mxu0 0
  %153 = vmatpush1.bf16.msra.mxu0 %v114
  %154 = vmatprep.subr.bf16.mxu0 0
  %155 = vmatpush1.bf16.msra.mxu0 %v115
  %156 = vmatprep.subr.bf16.mxu0 0
  %157 = vmatpush1.bf16.msra.mxu0 %v116
  %158 = vmatprep.subr.bf16.mxu0 0
  %159 = vmatpush1.bf16.msra.mxu0 %v117
  %160 = vmatprep.subr.bf16.mxu0 0
  %161 = vmatpush1.bf16.msra.mxu0 %v118
  %162 = vmatprep.subr.bf16.mxu0 0
  %163 = vmatpush1.bf16.msra.mxu0 %v119
  %164 = vmatprep.subr.bf16.mxu0 0
  %165 = vmatpush1.bf16.msra.mxu0 %v120
  %166 = vmatprep.subr.bf16.mxu0 0
  %167 = vmatpush1.bf16.msra.mxu0 %v146
  %168 = vmatprep.subr.bf16.mxu0 0
  %169 = vmatpush1.bf16.msra.mxu0 0
  %170 = vmatprep.subr.bf16.mxu0 0
  %171 = vmatpush1.bf16.msra.mxu0 0
  %172 = vmatprep.subr.bf16.mxu0 0
  %173 = vmatpush1.bf16.msra.mxu0 0
  %174 = vmatprep.subr.bf16.mxu0 0
  %175 = vmatpush1.bf16.msra.mxu0 0
  %176 = vmatprep.subr.bf16.mxu0 0
  %177 = vmatpush1.bf16.msra.mxu0 0
  %178 = vmatprep.subr.bf16.mxu0 0
  %179 = vmatpush1.bf16.msra.mxu0 0
  %180 = vmatprep.mubr.bf16.mxu0 %v133
  %181 = vmatmul.mubr.bf16.gmra.mrb[0].mxu0 %v62
  %v182 = vpop.f32.mrb[0].mxu0
  %v183 = vadd.f32 0.0, %v182
  %v184 = vpop.f32.mrb[0].mxu0
  %v185 = vpop.f32.mrb[0].mxu0
  %v186 = vadd.f32 0.0, %v185
  %v187 = vpop.f32.mrb[0].mxu0
  %188 = vmatprep.mubr.bf16.mxu0 %v136
  %189 = vmatmul.mubr.bf16.gmra.mrb[0].mxu0 %v64
  %v190 = vpop.f32.mrb[0].mxu0
  %v191 = vadd.f32 0.0, %v190
  %v192 = vpop.f32.mrb[0].mxu0
  %v193 = vpop.f32.mrb[0].mxu0
  %v194 = vadd.f32 0.0, %v193
  %v195 = vpop.f32.mrb[0].mxu0
  %196 = vmatprep.mubr.bf16.mxu0 %v139
  %197 = vmatmul.mubr.bf16.gmra.mrb[0].mxu0 %v66
  %v198 = vpop.f32.mrb[0].mxu0
  %v199 = vadd.f32 0.0, %v198
  %v200 = vpop.f32.mrb[0].mxu0
  %v201 = vpop.f32.mrb[0].mxu0
  %v202 = vadd.f32 0.0, %v201
  %v203 = vpop.f32.mrb[0].mxu0
  %204 = vmatprep.mubr.bf16.mxu0 %v142
  %205 = vmatmul.mubr.bf16.gmra.mrb[0].mxu0 %v68
  %v206 = vpop.f32.mrb[0].mxu0
  %v207 = vadd.f32 0.0, %v206
  %v208 = vpop.f32.mrb[0].mxu0
  %v209 = vpop.f32.mrb[0].mxu0
  %v210 = vpop.f32.mrb[0].mxu0
  %211 = vdwg.mxu0
  %s212 = scalar_lea.vmem %s0, 56
  %v213 = vld [vmem:[%s212] sm:$0xff]
  %v214 = vld [vmem:[%s212 + $0x8] sm:$0xff]
  %v215 = vld [vmem:[%s212 + $0x10] sm:$0xff]
  %v216 = vld [vmem:[%s212 + $0x18] sm:$0xff]
  %v217 = vld [vmem:[%s212 + $0x20] sm:$0xff]
  %v218 = vld [vmem:[%s212 + $0x28] sm:$0xff]
  %v219 = vld [vmem:[%s212 + $0x30] sm:$0xff]
  %v227 = vunpack.c.l.b16 %v213
  %v228 = vunpack.c.h.b16 %v213
  %v229 = vunpack.c.l.b16 %v214
  %v230 = vunpack.c.h.b16 %v214
  %v231 = vunpack.c.l.b16 %v215
  %v232 = vunpack.c.h.b16 %v215
  %v233 = vunpack.c.l.b16 %v216
  %v234 = vunpack.c.h.b16 %v216
  %v235 = vunpack.c.l.b16 %v217
  %v236 = vunpack.c.h.b16 %v217
  %v237 = vunpack.c.l.b16 %v218
  %v238 = vunpack.c.h.b16 %v218
  %v239 = vunpack.c.l.b16 %v219
  %v240 = vunpack.c.h.b16 %v219
  %v241 = vpack.c.b16 %v229, %v227
  %v242 = vpack.c.b16 %v230, %v228
  %v243 = vpack.c.b16 %v233, %v231
  %v244 = vpack.c.b16 %v234, %v232
  %v245 = vpack.c.b16 %v237, %v235
  %v246 = vpack.c.b16 %v238, %v236
  %v247 = vpack.c.b16 %v239, %v239
  %v248 = vpack.c.b16 %v240, %v240
  %v254 = vsel %vm131, %v242, 0
  %v257 = vsel %vm131, %v244, 0
  %v260 = vsel %vm131, %v246, 0
  %v263 = vsel %vm131, %v248, 0
  %265 = vmatprep.subr.bf16.mxu0 0
  %266 = vmatpush1.bf16.msra.mxu0 %v112
  %267 = vmatprep.subr.bf16.mxu0 0
  %268 = vmatpush1.bf16.msra.mxu0 %v113
  %269 = vmatprep.subr.bf16.mxu0 0
  %270 = vmatpush1.bf16.msra.mxu0 %v114
  %271 = vmatprep.subr.bf16.mxu0 0
  %272 = vmatpush1.bf16.msra.mxu0 %v115
  %273 = vmatprep.subr.bf16.mxu0 0
  %274 = vmatpush1.bf16.msra.mxu0 %v116
  %275 = vmatprep.subr.bf16.mxu0 0
  %276 = vmatpush1.bf16.msra.mxu0 %v117
  %277 = vmatprep.subr.bf16.mxu0 0
  %278 = vmatpush1.bf16.msra.mxu0 %v118
  %279 = vmatprep.subr.bf16.mxu0 0
  %280 = vmatpush1.bf16.msra.mxu0 %v119
  %281 = vmatprep.subr.bf16.mxu0 0
  %282 = vmatpush1.bf16.msra.mxu0 %v120
  %283 = vmatprep.subr.bf16.mxu0 0
  %284 = vmatpush1.bf16.msra.mxu0 %v146
  %285 = vmatprep.subr.bf16.mxu0 0
  %286 = vmatpush1.bf16.msra.mxu0 0
  %287 = vmatprep.subr.bf16.mxu0 0
  %288 = vmatpush1.bf16.msra.mxu0 0
  %289 = vmatprep.subr.bf16.mxu0 0
  %290 = vmatpush1.bf16.msra.mxu0 0
  %291 = vmatprep.subr.bf16.mxu0 0
  %292 = vmatpush1.bf16.msra.mxu0 0
  %293 = vmatprep.subr.bf16.mxu0 0
  %294 = vmatpush1.bf16.msra.mxu0 0
  %295 = vmatprep.subr.bf16.mxu0 0
  %296 = vmatpush1.bf16.msra.mxu0 0
  %297 = vmatprep.mubr.bf16.mxu0 %v254
  %298 = vmatmul.mubr.bf16.gmra.mrb[0].mxu0 %v241
  %v299 = vpop.f32.mrb[0].mxu0
  %v300 = vadd.f32 0.0, %v299
  %v301 = vpop.f32.mrb[0].mxu0
  %v302 = vpop.f32.mrb[0].mxu0
  %v303 = vadd.f32 0.0, %v302
  %v304 = vpop.f32.mrb[0].mxu0
  %305 = vmatprep.mubr.bf16.mxu0 %v257
  %306 = vmatmul.mubr.bf16.gmra.mrb[0].mxu0 %v243
  %v307 = vpop.f32.mrb[0].mxu0
  %v308 = vadd.f32 0.0, %v307
  %v309 = vpop.f32.mrb[0].mxu0
  %v310 = vpop.f32.mrb[0].mxu0
  %v311 = vadd.f32 0.0, %v310
  %v312 = vpop.f32.mrb[0].mxu0
  %313 = vmatprep.mubr.bf16.mxu0 %v260
  %314 = vmatmul.mubr.bf16.gmra.mrb[0].mxu0 %v245
  %v315 = vpop.f32.mrb[0].mxu0
  %v316 = vadd.f32 0.0, %v315
  %v317 = vpop.f32.mrb[0].mxu0
  %v318 = vpop.f32.mrb[0].mxu0
  %v319 = vadd.f32 0.0, %v318
  %v320 = vpop.f32.mrb[0].mxu0
  %321 = vmatprep.mubr.bf16.mxu0 %v263
  %322 = vmatmul.mubr.bf16.gmra.mrb[0].mxu0 %v247
  %v323 = vpop.f32.mrb[0].mxu0
  %v324 = vadd.f32 0.0, %v323
  %v325 = vpop.f32.mrb[0].mxu0
  %v326 = vpop.f32.mrb[0].mxu0
  %v327 = vpop.f32.mrb[0].mxu0
  %328 = vdwg.mxu0
  %v329 = vmax.f32 %v183, %v300
  %v330 = vmax.f32 %v186, %v303
  %v331 = vmax.f32 %v191, %v308
  %v332 = vmax.f32 %v194, %v311
  %v333 = vmax.f32 %v199, %v316
  %v334 = vmax.f32 %v202, %v319
  %v335 = vmax.f32 %v207, %v324
  %s336 = scalar_lea.vmem %s0, 112
  %v337 = vld [vmem:[%s336] sm:$0xff]
  %v338 = vld [vmem:[%s336 + $0x8] sm:$0xff]
  %v339 = vld [vmem:[%s336 + $0x10] sm:$0xff]
  %v340 = vld [vmem:[%s336 + $0x18] sm:$0xff]
  %v341 = vld [vmem:[%s336 + $0x20] sm:$0xff]
  %v342 = vld [vmem:[%s336 + $0x28] sm:$0xff]
  %v343 = vld [vmem:[%s336 + $0x30] sm:$0xff]
  %v351 = vunpack.c.l.b16 %v337
  %v352 = vunpack.c.h.b16 %v337
  %v353 = vunpack.c.l.b16 %v338
  %v354 = vunpack.c.h.b16 %v338
  %v355 = vunpack.c.l.b16 %v339
  %v356 = vunpack.c.h.b16 %v339
  %v357 = vunpack.c.l.b16 %v340
  %v358 = vunpack.c.h.b16 %v340
  %v359 = vunpack.c.l.b16 %v341
  %v360 = vunpack.c.h.b16 %v341
  %v361 = vunpack.c.l.b16 %v342
  %v362 = vunpack.c.h.b16 %v342
  %v363 = vunpack.c.l.b16 %v343
  %v364 = vunpack.c.h.b16 %v343
  %v365 = vpack.c.b16 %v353, %v351
  %v366 = vpack.c.b16 %v354, %v352
  %v367 = vpack.c.b16 %v357, %v355
  %v368 = vpack.c.b16 %v358, %v356
  %v369 = vpack.c.b16 %v361, %v359
  %v370 = vpack.c.b16 %v362, %v360
  %v371 = vpack.c.b16 %v363, %v363
  %v372 = vpack.c.b16 %v364, %v364
  %v378 = vsel %vm131, %v366, 0
  %v381 = vsel %vm131, %v368, 0
  %v384 = vsel %vm131, %v370, 0
  %v387 = vsel %vm131, %v372, 0
  %389 = vmatprep.subr.bf16.mxu0 0
  %390 = vmatpush1.bf16.msra.mxu0 %v112
  %391 = vmatprep.subr.bf16.mxu0 0
  %392 = vmatpush1.bf16.msra.mxu0 %v113
  %393 = vmatprep.subr.bf16.mxu0 0
  %394 = vmatpush1.bf16.msra.mxu0 %v114
  %395 = vmatprep.subr.bf16.mxu0 0
  %396 = vmatpush1.bf16.msra.mxu0 %v115
  %397 = vmatprep.subr.bf16.mxu0 0
  %398 = vmatpush1.bf16.msra.mxu0 %v116
  %399 = vmatprep.subr.bf16.mxu0 0
  %400 = vmatpush1.bf16.msra.mxu0 %v117
  %401 = vmatprep.subr.bf16.mxu0 0
  %402 = vmatpush1.bf16.msra.mxu0 %v118
  %403 = vmatprep.subr.bf16.mxu0 0
  %404 = vmatpush1.bf16.msra.mxu0 %v119
  %405 = vmatprep.subr.bf16.mxu0 0
  %406 = vmatpush1.bf16.msra.mxu0 %v120
  %407 = vmatprep.subr.bf16.mxu0 0
  %408 = vmatpush1.bf16.msra.mxu0 %v146
  %409 = vmatprep.subr.bf16.mxu0 0
  %410 = vmatpush1.bf16.msra.mxu0 0
  %411 = vmatprep.subr.bf16.mxu0 0
  %412 = vmatpush1.bf16.msra.mxu0 0
  %413 = vmatprep.subr.bf16.mxu0 0
  %414 = vmatpush1.bf16.msra.mxu0 0
  %415 = vmatprep.subr.bf16.mxu0 0
  %416 = vmatpush1.bf16.msra.mxu0 0
  %417 = vmatprep.subr.bf16.mxu0 0
  %418 = vmatpush1.bf16.msra.mxu0 0
  %419 = vmatprep.subr.bf16.mxu0 0
  %420 = vmatpush1.bf16.msra.mxu0 0
  %421 = vmatprep.mubr.bf16.mxu0 %v378
  %422 = vmatmul.mubr.bf16.gmra.mrb[0].mxu0 %v365
  %v423 = vpop.f32.mrb[0].mxu0
  %v424 = vadd.f32 0.0, %v423
  %v425 = vpop.f32.mrb[0].mxu0
  %v426 = vpop.f32.mrb[0].mxu0
  %v427 = vadd.f32 0.0, %v426
  %v428 = vpop.f32.mrb[0].mxu0
  %429 = vmatprep.mubr.bf16.mxu0 %v381
  %430 = vmatmul.mubr.bf16.gmra.mrb[0].mxu0 %v367
  %v431 = vpop.f32.mrb[0].mxu0
  %v432 = vadd.f32 0.0, %v431
  %v433 = vpop.f32.mrb[0].mxu0
  %v434 = vpop.f32.mrb[0].mxu0
  %v435 = vadd.f32 0.0, %v434
  %v436 = vpop.f32.mrb[0].mxu0
  %437 = vmatprep.mubr.bf16.mxu0 %v384
  %438 = vmatmul.mubr.bf16.gmra.mrb[0].mxu0 %v369
  %v439 = vpop.f32.mrb[0].mxu0
  %v440 = vadd.f32 0.0, %v439
  %v441 = vpop.f32.mrb[0].mxu0
  %v442 = vpop.f32.mrb[0].mxu0
  %v443 = vadd.f32 0.0, %v442
  %v444 = vpop.f32.mrb[0].mxu0
  %445 = vmatprep.mubr.bf16.mxu0 %v387
  %446 = vmatmul.mubr.bf16.gmra.mrb[0].mxu0 %v371
  %v447 = vpop.f32.mrb[0].mxu0
  %v448 = vadd.f32 0.0, %v447
  %v449 = vpop.f32.mrb[0].mxu0
  %v450 = vpop.f32.mrb[0].mxu0
  %v451 = vpop.f32.mrb[0].mxu0
  %452 = vdwg.mxu0
  %v453 = vmax.f32 %v329, %v424
  %v454 = vmax.f32 %v330, %v427
  %v455 = vmax.f32 %v331, %v432
  %v456 = vmax.f32 %v332, %v435
  %v457 = vmax.f32 %v333, %v440
  %v458 = vmax.f32 %v334, %v443
  %v459 = vmax.f32 %v335, %v448
  %s460 = scalar_lea.vmem %s0, 168
  %v461 = vld [vmem:[%s460] sm:$0xff]
  %v462 = vld [vmem:[%s460 + $0x8] sm:$0xff]
  %v463 = vld [vmem:[%s460 + $0x10] sm:$0xff]
  %v464 = vld [vmem:[%s460 + $0x18] sm:$0xff]
  %v465 = vld [vmem:[%s460 + $0x20] sm:$0xff]
  %v466 = vld [vmem:[%s460 + $0x28] sm:$0xff]
  %v467 = vld [vmem:[%s460 + $0x30] sm:$0xff]
  %v475 = vunpack.c.l.b16 %v461
  %v476 = vunpack.c.h.b16 %v461
  %v477 = vunpack.c.l.b16 %v462
  %v478 = vunpack.c.h.b16 %v462
  %v479 = vunpack.c.l.b16 %v463
  %v480 = vunpack.c.h.b16 %v463
  %v481 = vunpack.c.l.b16 %v464
  %v482 = vunpack.c.h.b16 %v464
  %v483 = vunpack.c.l.b16 %v465
  %v484 = vunpack.c.h.b16 %v465
  %v485 = vunpack.c.l.b16 %v466
  %v486 = vunpack.c.h.b16 %v466
  %v487 = vunpack.c.l.b16 %v467
  %v488 = vunpack.c.h.b16 %v467
  %v489 = vpack.c.b16 %v477, %v475
  %v490 = vpack.c.b16 %v478, %v476
  %v491 = vpack.c.b16 %v481, %v479
  %v492 = vpack.c.b16 %v482, %v480
  %v493 = vpack.c.b16 %v485, %v483
  %v494 = vpack.c.b16 %v486, %v484
  %v495 = vpack.c.b16 %v487, %v487
  %v496 = vpack.c.b16 %v488, %v488
  %v502 = vsel %vm131, %v490, 0
  %v505 = vsel %vm131, %v492, 0
  %v508 = vsel %vm131, %v494, 0
  %v511 = vsel %vm131, %v496, 0
  %513 = vmatprep.subr.bf16.mxu0 0
  %514 = vmatpush1.bf16.msra.mxu0 %v112
  %515 = vmatprep.subr.bf16.mxu0 0
  %516 = vmatpush1.bf16.msra.mxu0 %v113
  %517 = vmatprep.subr.bf16.mxu0 0
  %518 = vmatpush1.bf16.msra.mxu0 %v114
  %519 = vmatprep.subr.bf16.mxu0 0
  %520 = vmatpush1.bf16.msra.mxu0 %v115
  %521 = vmatprep.subr.bf16.mxu0 0
  %522 = vmatpush1.bf16.msra.mxu0 %v116
  %523 = vmatprep.subr.bf16.mxu0 0
  %524 = vmatpush1.bf16.msra.mxu0 %v117
  %525 = vmatprep.subr.bf16.mxu0 0
  %526 = vmatpush1.bf16.msra.mxu0 %v118
  %527 = vmatprep.subr.bf16.mxu0 0
  %528 = vmatpush1.bf16.msra.mxu0 %v119
  %529 = vmatprep.subr.bf16.mxu0 0
  %530 = vmatpush1.bf16.msra.mxu0 %v120
  %531 = vmatprep.subr.bf16.mxu0 0
  %532 = vmatpush1.bf16.msra.mxu0 %v146
  %533 = vmatprep.subr.bf16.mxu0 0
  %534 = vmatpush1.bf16.msra.mxu0 0
  %535 = vmatprep.subr.bf16.mxu0 0
  %536 = vmatpush1.bf16.msra.mxu0 0
  %537 = vmatprep.subr.bf16.mxu0 0
  %538 = vmatpush1.bf16.msra.mxu0 0
  %539 = vmatprep.subr.bf16.mxu0 0
  %540 = vmatpush1.bf16.msra.mxu0 0
  %541 = vmatprep.subr.bf16.mxu0 0
  %542 = vmatpush1.bf16.msra.mxu0 0
  %543 = vmatprep.subr.bf16.mxu0 0
  %544 = vmatpush1.bf16.msra.mxu0 0
  %545 = vmatprep.mubr.bf16.mxu0 %v502
  %546 = vmatmul.mubr.bf16.gmra.mrb[0].mxu0 %v489
  %v547 = vpop.f32.mrb[0].mxu0
  %v548 = vadd.f32 0.0, %v547
  %v549 = vpop.f32.mrb[0].mxu0
  %v550 = vpop.f32.mrb[0].mxu0
  %v551 = vadd.f32 0.0, %v550
  %v552 = vpop.f32.mrb[0].mxu0
  %553 = vmatprep.mubr.bf16.mxu0 %v505
  %554 = vmatmul.mubr.bf16.gmra.mrb[0].mxu0 %v491
  %v555 = vpop.f32.mrb[0].mxu0
  %v556 = vadd.f32 0.0, %v555
  %v557 = vpop.f32.mrb[0].mxu0
  %v558 = vpop.f32.mrb[0].mxu0
  %v559 = vadd.f32 0.0, %v558
  %v560 = vpop.f32.mrb[0].mxu0
  %561 = vmatprep.mubr.bf16.mxu0 %v508
  %562 = vmatmul.mubr.bf16.gmra.mrb[0].mxu0 %v493
  %v563 = vpop.f32.mrb[0].mxu0
  %v564 = vadd.f32 0.0, %v563
  %v565 = vpop.f32.mrb[0].mxu0
  %v566 = vpop.f32.mrb[0].mxu0
  %v567 = vadd.f32 0.0, %v566
  %v568 = vpop.f32.mrb[0].mxu0
  %569 = vmatprep.mubr.bf16.mxu0 %v511
  %570 = vmatmul.mubr.bf16.gmra.mrb[0].mxu0 %v495
  %v571 = vpop.f32.mrb[0].mxu0
  %v572 = vadd.f32 0.0, %v571
  %v573 = vpop.f32.mrb[0].mxu0
  %v574 = vpop.f32.mrb[0].mxu0
  %v575 = vpop.f32.mrb[0].mxu0
  %576 = vdwg.mxu0
  %v577 = vmax.f32 %v453, %v548
  %v578 = vmax.f32 %v454, %v551
  %v579 = vmax.f32 %v455, %v556
  %v580 = vmax.f32 %v456, %v559
  %v581 = vmax.f32 %v457, %v564
  %v582 = vmax.f32 %v458, %v567
  %v583 = vmax.f32 %v459, %v572
  %v584 = vld [vmem:[%s2] sm:$0x1]
  %v586 = vlaneseq
  %v587 = vshrl.u32 %v586, 7
  %v588 = vsub.s32 0, %v587
  %v589 = vrot.slane %v584, %v588
  %v591 = vadd.f32 %v577, %v589
  %v592 = vadd.f32 %v578, %v589
  %v593 = vadd.f32 %v579, %v589
  %v594 = vadd.f32 %v580, %v589
  %v595 = vadd.f32 %v581, %v589
  %v596 = vadd.f32 %v582, %v589
  %v597 = vadd.f32 %v583, %v589
  %v598 = vmax.f32 %v591, 0.0
  %v599 = vmax.f32 %v592, 0.0
  %v600 = vmax.f32 %v593, 0.0
  %v601 = vmax.f32 %v594, 0.0
  %v602 = vmax.f32 %v595, 0.0
  %v603 = vmax.f32 %v596, 0.0
  %v604 = vmax.f32 %v597, 0.0
  %v605 = vpack.c.bf16 %v599, %v598
  %v606 = vpack.c.bf16 %v601, %v600
  %v607 = vpack.c.bf16 %v603, %v602
  %v608 = vpack.c.bf16 %v604, %v604
  %v613 = vunpack.c.l.b16 %v605
  %v614 = vunpack.c.h.b16 %v605
  %v615 = vunpack.c.l.b16 %v606
  %v616 = vunpack.c.h.b16 %v606
  %v617 = vunpack.c.l.b16 %v607
  %v618 = vunpack.c.h.b16 %v607
  %v619 = vunpack.c.l.b16 %v608
  %v620 = vpack.c.b16 %v613, %v613
  %v621 = vpack.c.b16 %v614, %v614
  %v622 = vpack.c.b16 %v615, %v615
  %v623 = vpack.c.b16 %v616, %v616
  %v624 = vpack.c.b16 %v617, %v617
  %v625 = vpack.c.b16 %v618, %v618
  %v626 = vpack.c.b16 %v619, %v619
  %634 = vst [vmem:[%s3] sm:$0xf] %v620
  %635 = vst [vmem:[%s3 + $0x4] sm:$0xf] %v621
  %636 = vst [vmem:[%s3 + $0x8] sm:$0xf] %v622
  %637 = vst [vmem:[%s3 + $0xc] sm:$0xf] %v623
  %638 = vst [vmem:[%s3 + $0x10] sm:$0xf] %v624
  %639 = vst [vmem:[%s3 + $0x14] sm:$0xf] %v625
  %640 = vst [vmem:[%s3 + $0x18] sm:$0xf] %v626
  // Predicated region
  $region14: #{lenet_forward.4} parent=0 // pred_check
    _
  $region15: #{lenet_forward.4} parent=0 // pred_check_branch
    %642 = sbr.rel (0) target = $region17
  $region16: #{lenet_forward.4} parent=0 // pred_region
    _
  $region17: #{lenet_forward.4} parent=0 // pred_fallthru
    _
  // Predicated region
  $region18: #{lenet_forward.4} parent=0 // pred_check
    _
  $region19: #{lenet_forward.4} parent=0 // pred_check_branch
    %644 = sbr.rel (0) target = $region21
  $region20: #{lenet_forward.4} parent=0 // pred_region
    _
  $region21: #{lenet_forward.4} parent=0 // pred_fallthru
    _

// kernel: lenet_forward.5
$region0: #{lenet_forward.5}
  #allocation0 [shape = 'u32[]', space=smem, size = 0x4, offset = 0x4, fixed_abs, tag = 'smem constant byte address 0x4 - core index']
  #allocation1 [shape = 'u32[144,128]{1,0:T(1,128)}', space=vmem, size = 0x12000, scoped, tag = 'internal scratch']
  %s0 = inlined_call_operand.vmem [shape: bf16[8,400], index: 0, kind: input, shape index: {}]
  %s1 = inlined_call_operand.vmem [shape: bf16[400,128], index: 1, kind: input, shape index: {}]
  %s2 = inlined_call_operand.vmem [shape: f32[1,128], index: 2, kind: input, shape index: {}]
  %s3 = inlined_call_operand.vmem [shape: bf16[128,128], index: 3, kind: input, shape index: {}]
  %s4 = inlined_call_operand.vmem [shape: f32[1,128], index: 4, kind: input, shape index: {}]
  %s5 = inlined_call_operand.vmem [shape: bf16[128,128], index: 5, kind: input, shape index: {}]
  %s6 = inlined_call_operand.vmem [shape: f32[1,128], index: 6, kind: input, shape index: {}]
  %s7 = inlined_call_operand.vmem [shape: f32[8,128], index: 7, kind: output, shape index: {}]
  %s8 = sld [smem:[#allocation0]]
  $region38: #{lenet_forward.5} parent=0
    _
  %s10 = ssub.s32 1, %s8
  %s11 = scalar_select 0, %s10, %s8
  // Predicated region
  $region2: #{lenet_forward.5} parent=0 // pred_check
    _
  $region3: #{lenet_forward.5} parent=0 // pred_check_branch
    %13 = sbr.rel (0) target = $region5
  $region4: #{lenet_forward.5} parent=0 // pred_region
    _
  $region5: #{lenet_forward.5} parent=0 // pred_fallthru
    _
  // Predicated region
  $region6: #{lenet_forward.5} parent=0 // pred_check
    _
  $region7: #{lenet_forward.5} parent=0 // pred_check_branch
    %15 = sbr.rel (0) target = $region9
  $region8: #{lenet_forward.5} parent=0 // pred_region
    _
  $region9: #{lenet_forward.5} parent=0 // pred_fallthru
    _
  // Predicated region
  $region10: #{lenet_forward.5} parent=0 // pred_check
    _
  $region11: #{lenet_forward.5} parent=0 // pred_check_branch
    %17 = sbr.rel (0) target = $region13
  $region12: #{lenet_forward.5} parent=0 // pred_region
    _
  $region13: #{lenet_forward.5} parent=0 // pred_fallthru
    _
  // Predicated region
  $region14: #{lenet_forward.5} parent=0 // pred_check
    _
  $region15: #{lenet_forward.5} parent=0 // pred_check_branch
    %19 = sbr.rel (0) target = $region17
  $region16: #{lenet_forward.5} parent=0 // pred_region
    _
  $region17: #{lenet_forward.5} parent=0 // pred_fallthru
    _
  // Predicated region
  $region18: #{lenet_forward.5} parent=0 // pred_check
    _
  $region19: #{lenet_forward.5} parent=0 // pred_check_branch
    %21 = sbr.rel (0) target = $region21
  $region20: #{lenet_forward.5} parent=0 // pred_region
    _
  $region21: #{lenet_forward.5} parent=0 // pred_fallthru
    _
  // Predicated region
  $region22: #{lenet_forward.5} parent=0 // pred_check
    _
  $region23: #{lenet_forward.5} parent=0 // pred_check_branch
    %23 = sbr.rel (0) target = $region25
  $region24: #{lenet_forward.5} parent=0 // pred_region
    _
  $region25: #{lenet_forward.5} parent=0 // pred_fallthru
    _
  // Predicated region
  $region26: #{lenet_forward.5} parent=0 // pred_check
    _
  $region27: #{lenet_forward.5} parent=0 // pred_check_branch
    %25 = sbr.rel (0) target = $region29
  $region28: #{lenet_forward.5} parent=0 // pred_region
    _
  $region29: #{lenet_forward.5} parent=0 // pred_fallthru
    _
  %v27 = vld [vmem:[%s0] sm:$0xff]
  %v28 = vld [vmem:[%s0 + $0x8] sm:$0xff]
  %v29 = vld [vmem:[%s1] sm:$0xf]
  %v30 = vld [vmem:[%s1 + $0x4] sm:$0xf]
  %v31 = vld [vmem:[%s1 + $0x8] sm:$0xf]
  %v32 = vld [vmem:[%s1 + $0xc] sm:$0xf]
  %v33 = vld [vmem:[%s1 + $0x10] sm:$0xf]
  %v34 = vld [vmem:[%s1 + $0x14] sm:$0xf]
  %v35 = vld [vmem:[%s1 + $0x18] sm:$0xf]
  %v36 = vld [vmem:[%s1 + $0x1c] sm:$0xf]
  %v37 = vld [vmem:[%s1 + $0x20] sm:$0xf]
  %v38 = vld [vmem:[%s1 + $0x24] sm:$0xf]
  %v39 = vld [vmem:[%s1 + $0x28] sm:$0xf]
  %v40 = vld [vmem:[%s1 + $0x2c] sm:$0xf]
  %v41 = vld [vmem:[%s1 + $0x30] sm:$0xf]
  %v42 = vld [vmem:[%s1 + $0x34] sm:$0xf]
  %v43 = vld [vmem:[%s1 + $0x38] sm:$0xf]
  %v44 = vld [vmem:[%s1 + $0x3c] sm:$0xf]
  %v45 = vld [vmem:[%s1 + $0x40] sm:$0xf]
  %v46 = vld [vmem:[%s1 + $0x44] sm:$0xf]
  %v47 = vld [vmem:[%s1 + $0x48] sm:$0xf]
  %v48 = vld [vmem:[%s1 + $0x4c] sm:$0xf]
  %v49 = vld [vmem:[%s1 + $0x50] sm:$0xf]
  %v50 = vld [vmem:[%s1 + $0x54] sm:$0xf]
  %v51 = vld [vmem:[%s1 + $0x58] sm:$0xf]
  %v52 = vld [vmem:[%s1 + $0x5c] sm:$0xf]
  %v53 = vld [vmem:[%s1 + $0x60] sm:$0xf]
  %v54 = vld [vmem:[%s1 + $0x64] sm:$0xf]
  %v55 = vld [vmem:[%s1 + $0x68] sm:$0xf]
  %v56 = vld [vmem:[%s1 + $0x6c] sm:$0xf]
  %v57 = vld [vmem:[%s1 + $0x70] sm:$0xf]
  %v58 = vld [vmem:[%s1 + $0x74] sm:$0xf]
  %v59 = vld [vmem:[%s1 + $0x78] sm:$0xf]
  %v60 = vld [vmem:[%s1 + $0x7c] sm:$0xf]
  %v61 = vld [vmem:[%s1 + $0x80] sm:$0xf]
  %v62 = vld [vmem:[%s1 + $0x84] sm:$0xf]
  %v63 = vld [vmem:[%s1 + $0x88] sm:$0xf]
  %v64 = vld [vmem:[%s1 + $0x8c] sm:$0xf]
  %v65 = vld [vmem:[%s1 + $0x90] sm:$0xf]
  %v66 = vld [vmem:[%s1 + $0x94] sm:$0xf]
  %v67 = vld [vmem:[%s1 + $0x98] sm:$0xf]
  %v68 = vld [vmem:[%s1 + $0x9c] sm:$0xf]
  %v69 = vld [vmem:[%s1 + $0xa0] sm:$0xf]
  %v70 = vld [vmem:[%s1 + $0xa4] sm:$0xf]
  %v71 = vld [vmem:[%s1 + $0xa8] sm:$0xf]
  %v72 = vld [vmem:[%s1 + $0xac] sm:$0xf]
  %v73 = vld [vmem:[%s1 + $0xb0] sm:$0xf]
  %v74 = vld [vmem:[%s1 + $0xb4] sm:$0xf]
  %v75 = vld [vmem:[%s1 + $0xb8] sm:$0xf]
  %v76 = vld [vmem:[%s1 + $0xbc] sm:$0xf]
  %v77 = vld [vmem:[%s1 + $0xc0] sm:$0xf]
  %v78 = vld [vmem:[%s1 + $0xc4] sm:$0xf]
  %v79 = vld [vmem:[%s2] sm:$0x1]
  %v81 = vlaneseq
  %v82 = vshrl.u32 %v81, 7
  %v83 = vsub.s32 0, %v82
  %v84 = vrot.slane %v79, %v83
  %v88 = vunpack.c.l.b16 %v27
  %v89 = vunpack.c.h.b16 %v27
  %v90 = vunpack.c.l.b16 %v28
  %v91 = vunpack.c.h.b16 %v28
  %v92 = vpack.c.b16 %v88, %v88
  %v93 = vpack.c.b16 %v89, %v89
  %v94 = vpack.c.b16 %v90, %v90
  %v95 = vpack.c.b16 %v91, %v91
  %v149 = vunpack.c.l.b16 %v29
  %v150 = vunpack.c.l.b16 %v30
  %v151 = vunpack.c.l.b16 %v31
  %v152 = vunpack.c.l.b16 %v32
  %v153 = vunpack.c.l.b16 %v33
  %v154 = vunpack.c.l.b16 %v34
  %v155 = vunpack.c.l.b16 %v35
  %v156 = vunpack.c.l.b16 %v36
  %v157 = vunpack.c.l.b16 %v37
  %v158 = vunpack.c.l.b16 %v38
  %v159 = vunpack.c.l.b16 %v39
  %v160 = vunpack.c.l.b16 %v40
  %v161 = vunpack.c.l.b16 %v41
  %v162 = vunpack.c.l.b16 %v42
  %v163 = vunpack.c.l.b16 %v43
  %v164 = vunpack.c.l.b16 %v44
  %v165 = vunpack.c.l.b16 %v45
  %v166 = vunpack.c.l.b16 %v46
  %v167 = vunpack.c.l.b16 %v47
  %v168 = vunpack.c.l.b16 %v48
  %v169 = vunpack.c.l.b16 %v49
  %v170 = vunpack.c.l.b16 %v50
  %v171 = vunpack.c.l.b16 %v51
  %v172 = vunpack.c.l.b16 %v52
  %v173 = vunpack.c.l.b16 %v53
  %v174 = vunpack.c.l.b16 %v54
  %v175 = vunpack.c.l.b16 %v55
  %v176 = vunpack.c.l.b16 %v56
  %v177 = vunpack.c.l.b16 %v57
  %v178 = vunpack.c.l.b16 %v58
  %v179 = vunpack.c.l.b16 %v59
  %v180 = vunpack.c.l.b16 %v60
  %v181 = vunpack.c.l.b16 %v61
  %v182 = vunpack.c.l.b16 %v62
  %v183 = vunpack.c.l.b16 %v63
  %v184 = vunpack.c.l.b16 %v64
  %v185 = vunpack.c.l.b16 %v65
  %v186 = vunpack.c.l.b16 %v66
  %v187 = vunpack.c.l.b16 %v67
  %v188 = vunpack.c.l.b16 %v68
  %v189 = vunpack.c.l.b16 %v69
  %v190 = vunpack.c.l.b16 %v70
  %v191 = vunpack.c.l.b16 %v71
  %v192 = vunpack.c.l.b16 %v72
  %v193 = vunpack.c.l.b16 %v73
  %v194 = vunpack.c.l.b16 %v74
  %v195 = vunpack.c.l.b16 %v75
  %v196 = vunpack.c.l.b16 %v76
  %v197 = vunpack.c.l.b16 %v77
  %v198 = vunpack.c.l.b16 %v78
  %v199 = vpack.c.b16 %v150, %v149
  %v200 = vpack.c.b16 %v152, %v151
  %v201 = vpack.c.b16 %v154, %v153
  %v202 = vpack.c.b16 %v156, %v155
  %v203 = vpack.c.b16 %v158, %v157
  %v204 = vpack.c.b16 %v160, %v159
  %v205 = vpack.c.b16 %v162, %v161
  %v206 = vpack.c.b16 %v164, %v163
  %v207 = vpack.c.b16 %v166, %v165
  %v208 = vpack.c.b16 %v168, %v167
  %v209 = vpack.c.b16 %v170, %v169
  %v210 = vpack.c.b16 %v172, %v171
  %v211 = vpack.c.b16 %v174, %v173
  %v212 = vpack.c.b16 %v176, %v175
  %v213 = vpack.c.b16 %v178, %v177
  %v214 = vpack.c.b16 %v180, %v179
  %v215 = vpack.c.b16 %v182, %v181
  %v216 = vpack.c.b16 %v184, %v183
  %v217 = vpack.c.b16 %v186, %v185
  %v218 = vpack.c.b16 %v188, %v187
  %v219 = vpack.c.b16 %v190, %v189
  %v220 = vpack.c.b16 %v192, %v191
  %v221 = vpack.c.b16 %v194, %v193
  %v222 = vpack.c.b16 %v196, %v195
  %v223 = vpack.c.b16 %v198, %v197
  %vm249 = vcmask 130048
  %v251 = vsel %vm249, %v95, 0
  %253 = vmatprep.subr.bf16.mxu0 0
  %254 = vmatpush1.bf16.msra.mxu0 %v199
  %255 = vmatprep.subr.bf16.mxu0 0
  %256 = vmatpush1.bf16.msra.mxu0 %v200
  %257 = vmatprep.subr.bf16.mxu0 0
  %258 = vmatpush1.bf16.msra.mxu0 %v201
  %259 = vmatprep.subr.bf16.mxu0 0
  %260 = vmatpush1.bf16.msra.mxu0 %v202
  %261 = vmatprep.subr.bf16.mxu0 0
  %262 = vmatpush1.bf16.msra.mxu0 %v203
  %263 = vmatprep.subr.bf16.mxu0 0
  %264 = vmatpush1.bf16.msra.mxu0 %v204
  %265 = vmatprep.subr.bf16.mxu0 0
  %266 = vmatpush1.bf16.msra.mxu0 %v205
  %267 = vmatprep.subr.bf16.mxu0 0
  %268 = vmatpush1.bf16.msra.mxu0 %v206
  %269 = vmatprep.subr.bf16.mxu0 0
  %270 = vmatpush1.bf16.msra.mxu0 %v207
  %271 = vmatprep.subr.bf16.mxu0 0
  %272 = vmatpush1.bf16.msra.mxu0 %v208
  %273 = vmatprep.subr.bf16.mxu0 0
  %274 = vmatpush1.bf16.msra.mxu0 %v209
  %275 = vmatprep.subr.bf16.mxu0 0
  %276 = vmatpush1.bf16.msra.mxu0 %v210
  %277 = vmatprep.subr.bf16.mxu0 0
  %278 = vmatpush1.bf16.msra.mxu0 %v211
  %279 = vmatprep.subr.bf16.mxu0 0
  %280 = vmatpush1.bf16.msra.mxu0 %v212
  %281 = vmatprep.subr.bf16.mxu0 0
  %282 = vmatpush1.bf16.msra.mxu0 %v213
  %283 = vmatprep.subr.bf16.mxu0 0
  %284 = vmatpush1.bf16.msra.mxu0 %v214
  %285 = vmatprep.mubr.bf16.mxu0 %v93
  %286 = vmatmul.mubr.bf16.gmra.mrb[0].mxu0 %v92
  %v287 = vpop.f32.mrb[0].mxu0
  %v288 = vadd.f32 %v84, %v287
  %v289 = vpop.f32.mrb[0].mxu0
  %v290 = vpop.f32.mrb[0].mxu0
  %v291 = vpop.f32.mrb[0].mxu0
  %292 = vdwg.mxu0
  %293 = vmatprep.subr.bf16.mxu0 0
  %294 = vmatpush1.bf16.msra.mxu0 %v215
  %295 = vmatprep.subr.bf16.mxu0 0
  %296 = vmatpush1.bf16.msra.mxu0 %v216
  %297 = vmatprep.subr.bf16.mxu0 0
  %298 = vmatpush1.bf16.msra.mxu0 %v217
  %299 = vmatprep.subr.bf16.mxu0 0
  %300 = vmatpush1.bf16.msra.mxu0 %v218
  %301 = vmatprep.subr.bf16.mxu0 0
  %302 = vmatpush1.bf16.msra.mxu0 %v219
  %303 = vmatprep.subr.bf16.mxu0 0
  %304 = vmatpush1.bf16.msra.mxu0 %v220
  %305 = vmatprep.subr.bf16.mxu0 0
  %306 = vmatpush1.bf16.msra.mxu0 %v221
  %307 = vmatprep.subr.bf16.mxu0 0
  %308 = vmatpush1.bf16.msra.mxu0 %v222
  %309 = vmatprep.subr.bf16.mxu0 0
  %310 = vmatpush1.bf16.msra.mxu0 %v223
  %311 = vmatprep.subr.bf16.mxu0 0
  %312 = vmatpush1.bf16.msra.mxu0 0
  %313 = vmatprep.subr.bf16.mxu0 0
  %314 = vmatpush1.bf16.msra.mxu0 0
  %315 = vmatprep.subr.bf16.mxu0 0
  %316 = vmatpush1.bf16.msra.mxu0 0
  %317 = vmatprep.subr.bf16.mxu0 0
  %318 = vmatpush1.bf16.msra.mxu0 0
  %319 = vmatprep.subr.bf16.mxu0 0
  %320 = vmatpush1.bf16.msra.mxu0 0
  %321 = vmatprep.subr.bf16.mxu0 0
  %322 = vmatpush1.bf16.msra.mxu0 0
  %323 = vmatprep.subr.bf16.mxu0 0
  %324 = vmatpush1.bf16.msra.mxu0 0
  %325 = vmatprep.mubr.bf16.mxu0 %v251
  %326 = vmatmul.mubr.bf16.gmra.mrb[0].mxu0 %v94
  %v327 = vpop.f32.mrb[0].mxu0
  %v328 = vadd.f32 %v288, %v327
  %v329 = vpop.f32.mrb[0].mxu0
  %v330 = vpop.f32.mrb[0].mxu0
  %v331 = vpop.f32.mrb[0].mxu0
  %332 = vdwg.mxu0
  %v333 = vmax.f32 %v328, 0.0
  %v334 = vpack.c.bf16 %v333, %v333
  %v335 = vld [vmem:[%s3] sm:$0xf]
  %v336 = vld [vmem:[%s3 + $0x4] sm:$0xf]
  %v337 = vld [vmem:[%s3 + $0x8] sm:$0xf]
  %v338 = vld [vmem:[%s3 + $0xc] sm:$0xf]
  %v339 = vld [vmem:[%s3 + $0x10] sm:$0xf]
  %v340 = vld [vmem:[%s3 + $0x14] sm:$0xf]
  %v341 = vld [vmem:[%s3 + $0x18] sm:$0xf]
  %v342 = vld [vmem:[%s3 + $0x1c] sm:$0xf]
  %v343 = vld [vmem:[%s3 + $0x20] sm:$0xf]
  %v344 = vld [vmem:[%s3 + $0x24] sm:$0xf]
  %v345 = vld [vmem:[%s3 + $0x28] sm:$0xf]
  %v346 = vld [vmem:[%s3 + $0x2c] sm:$0xf]
  %v347 = vld [vmem:[%s3 + $0x30] sm:$0xf]
  %v348 = vld [vmem:[%s3 + $0x34] sm:$0xf]
  %v349 = vld [vmem:[%s3 + $0x38] sm:$0xf]
  %v350 = vld [vmem:[%s3 + $0x3c] sm:$0xf]
  %v351 = vld [vmem:[%s4] sm:$0x1]
  %v353 = vlaneseq
  %v354 = vshrl.u32 %v353, 7
  %v355 = vsub.s32 0, %v354
  %v356 = vrot.slane %v351, %v355
  %v374 = vunpack.c.l.b16 %v335
  %v375 = vunpack.c.l.b16 %v336
  %v376 = vunpack.c.l.b16 %v337
  %v377 = vunpack.c.l.b16 %v338
  %v378 = vunpack.c.l.b16 %v339
  %v379 = vunpack.c.l.b16 %v340
  %v380 = vunpack.c.l.b16 %v341
  %v381 = vunpack.c.l.b16 %v342
  %v382 = vunpack.c.l.b16 %v343
  %v383 = vunpack.c.l.b16 %v344
  %v384 = vunpack.c.l.b16 %v345
  %v385 = vunpack.c.l.b16 %v346
  %v386 = vunpack.c.l.b16 %v347
  %v387 = vunpack.c.l.b16 %v348
  %v388 = vunpack.c.l.b16 %v349
  %v389 = vunpack.c.l.b16 %v350
  %v390 = vpack.c.b16 %v375, %v374
  %v391 = vpack.c.b16 %v377, %v376
  %v392 = vpack.c.b16 %v379, %v378
  %v393 = vpack.c.b16 %v381, %v380
  %v394 = vpack.c.b16 %v383, %v382
  %v395 = vpack.c.b16 %v385, %v384
  %v396 = vpack.c.b16 %v387, %v386
  %v397 = vpack.c.b16 %v389, %v388
  %406 = vmatprep.subr.bf16.mxu0 0
  %407 = vmatpush1.bf16.msra.mxu0 %v390
  %408 = vmatprep.subr.bf16.mxu0 0
  %409 = vmatpush1.bf16.msra.mxu0 %v391
  %410 = vmatprep.subr.bf16.mxu0 0
  %411 = vmatpush1.bf16.msra.mxu0 %v392
  %412 = vmatprep.subr.bf16.mxu0 0
  %413 = vmatpush1.bf16.msra.mxu0 %v393
  %414 = vmatprep.subr.bf16.mxu0 0
  %415 = vmatpush1.bf16.msra.mxu0 %v394
  %416 = vmatprep.subr.bf16.mxu0 0
  %417 = vmatpush1.bf16.msra.mxu0 %v395
  %418 = vmatprep.subr.bf16.mxu0 0
  %419 = vmatpush1.bf16.msra.mxu0 %v396
  %420 = vmatprep.subr.bf16.mxu0 0
  %421 = vmatpush1.bf16.msra.mxu0 %v397
  %422 = vmatprep.subr.bf16.mxu0 0
  %423 = vmatpush1.bf16.msra.mxu0 0
  %424 = vmatprep.subr.bf16.mxu0 0
  %425 = vmatpush1.bf16.msra.mxu0 0
  %426 = vmatprep.subr.bf16.mxu0 0
  %427 = vmatpush1.bf16.msra.mxu0 0
  %428 = vmatprep.subr.bf16.mxu0 0
  %429 = vmatpush1.bf16.msra.mxu0 0
  %430 = vmatprep.subr.bf16.mxu0 0
  %431 = vmatpush1.bf16.msra.mxu0 0
  %432 = vmatprep.subr.bf16.mxu0 0
  %433 = vmatpush1.bf16.msra.mxu0 0
  %434 = vmatprep.subr.bf16.mxu0 0
  %435 = vmatpush1.bf16.msra.mxu0 0
  %436 = vmatprep.subr.bf16.mxu0 0
  %437 = vmatpush1.bf16.msra.mxu0 0
  %438 = vmatprep.mubr.bf16.mxu0 0
  %439 = vmatmul.mubr.bf16.gmra.mrb[0].mxu0 %v334
  %v440 = vpop.f32.mrb[0].mxu0
  %v441 = vadd.f32 %v356, %v440
  %v442 = vpop.f32.mrb[0].mxu0
  %v443 = vpop.f32.mrb[0].mxu0
  %v444 = vpop.f32.mrb[0].mxu0
  %445 = vdwg.mxu0
  %v446 = vmax.f32 %v441, 0.0
  %v447 = vpack.c.bf16 %v446, %v446
  %v448 = vld [vmem:[%s5] sm:$0xf]
  %v449 = vld [vmem:[%s5 + $0x4] sm:$0xf]
  %v450 = vld [vmem:[%s5 + $0x8] sm:$0xf]
  %v451 = vld [vmem:[%s5 + $0xc] sm:$0xf]
  %v452 = vld [vmem:[%s5 + $0x10] sm:$0xf]
  %v453 = vld [vmem:[%s5 + $0x14] sm:$0xf]
  %v454 = vld [vmem:[%s5 + $0x18] sm:$0xf]
  %v455 = vld [vmem:[%s5 + $0x1c] sm:$0xf]
  %v456 = vld [vmem:[%s5 + $0x20] sm:$0xf]
  %v457 = vld [vmem:[%s5 + $0x24] sm:$0xf]
  %v458 = vld [vmem:[%s5 + $0x28] sm:$0xf]
  %v459 = vld [vmem:[%s5 + $0x2c] sm:$0xf]
  %v460 = vld [vmem:[%s5 + $0x30] sm:$0xf]
  %v461 = vld [vmem:[%s5 + $0x34] sm:$0xf]
  %v462 = vld [vmem:[%s5 + $0x38] sm:$0xf]
  %v463 = vld [vmem:[%s5 + $0x3c] sm:$0xf]
  %v464 = vld [vmem:[%s6] sm:$0x1]
  %v466 = vlaneseq
  %v467 = vshrl.u32 %v466, 7
  %v468 = vsub.s32 0, %v467
  %v469 = vrot.slane %v464, %v468
  %v487 = vunpack.c.l.b16 %v448
  %v488 = vunpack.c.l.b16 %v449
  %v489 = vunpack.c.l.b16 %v450
  %v490 = vunpack.c.l.b16 %v451
  %v491 = vunpack.c.l.b16 %v452
  %v492 = vunpack.c.l.b16 %v453
  %v493 = vunpack.c.l.b16 %v454
  %v494 = vunpack.c.l.b16 %v455
  %v495 = vunpack.c.l.b16 %v456
  %v496 = vunpack.c.l.b16 %v457
  %v497 = vunpack.c.l.b16 %v458
  %v498 = vunpack.c.l.b16 %v459
  %v499 = vunpack.c.l.b16 %v460
  %v500 = vunpack.c.l.b16 %v461
  %v501 = vunpack.c.l.b16 %v462
  %v502 = vunpack.c.l.b16 %v463
  %v503 = vpack.c.b16 %v488, %v487
  %v504 = vpack.c.b16 %v490, %v489
  %v505 = vpack.c.b16 %v492, %v491
  %v506 = vpack.c.b16 %v494, %v493
  %v507 = vpack.c.b16 %v496, %v495
  %v508 = vpack.c.b16 %v498, %v497
  %v509 = vpack.c.b16 %v500, %v499
  %v510 = vpack.c.b16 %v502, %v501
  %519 = vmatprep.subr.bf16.mxu0 0
  %520 = vmatpush1.bf16.msra.mxu0 %v503
  %521 = vmatprep.subr.bf16.mxu0 0
  %522 = vmatpush1.bf16.msra.mxu0 %v504
  %523 = vmatprep.subr.bf16.mxu0 0
  %524 = vmatpush1.bf16.msra.mxu0 %v505
  %525 = vmatprep.subr.bf16.mxu0 0
  %526 = vmatpush1.bf16.msra.mxu0 %v506
  %527 = vmatprep.subr.bf16.mxu0 0
  %528 = vmatpush1.bf16.msra.mxu0 %v507
  %529 = vmatprep.subr.bf16.mxu0 0
  %530 = vmatpush1.bf16.msra.mxu0 %v508
  %531 = vmatprep.subr.bf16.mxu0 0
  %532 = vmatpush1.bf16.msra.mxu0 %v509
  %533 = vmatprep.subr.bf16.mxu0 0
  %534 = vmatpush1.bf16.msra.mxu0 %v510
  %535 = vmatprep.subr.bf16.mxu0 0
  %536 = vmatpush1.bf16.msra.mxu0 0
  %537 = vmatprep.subr.bf16.mxu0 0
  %538 = vmatpush1.bf16.msra.mxu0 0
  %539 = vmatprep.subr.bf16.mxu0 0
  %540 = vmatpush1.bf16.msra.mxu0 0
  %541 = vmatprep.subr.bf16.mxu0 0
  %542 = vmatpush1.bf16.msra.mxu0 0
  %543 = vmatprep.subr.bf16.mxu0 0
  %544 = vmatpush1.bf16.msra.mxu0 0
  %545 = vmatprep.subr.bf16.mxu0 0
  %546 = vmatpush1.bf16.msra.mxu0 0
  %547 = vmatprep.subr.bf16.mxu0 0
  %548 = vmatpush1.bf16.msra.mxu0 0
  %549 = vmatprep.subr.bf16.mxu0 0
  %550 = vmatpush1.bf16.msra.mxu0 0
  %551 = vmatprep.mubr.bf16.mxu0 0
  %552 = vmatmul.mubr.bf16.gmra.mrb[0].mxu0 %v447
  %v553 = vpop.f32.mrb[0].mxu0
  %v554 = vadd.f32 %v469, %v553
  %v555 = vpop.f32.mrb[0].mxu0
  %v556 = vpop.f32.mrb[0].mxu0
  %v557 = vpop.f32.mrb[0].mxu0
  %558 = vdwg.mxu0
  %559 = vst [vmem:[%s7] sm:$0xff] %v554
  // Predicated region
  $region30: #{lenet_forward.5} parent=0 // pred_check
    _
  $region31: #{lenet_forward.5} parent=0 // pred_check_branch
    %561 = sbr.rel (0) target = $region33
  $region32: #{lenet_forward.5} parent=0 // pred_region
    _
  $region33: #{lenet_forward.5} parent=0 // pred_fallthru
    _
  // Predicated region
  $region34: #{lenet_forward.5} parent=0 // pred_check
    _
  $region35: #{lenet_forward.5} parent=0 // pred_check_branch
    %563 = sbr.rel (0) target = $region37
  $region36: #{lenet_forward.5} parent=0 // pred_region
    _
  $region37: #{lenet_forward.5} parent=0 // pred_fallthru
    _

</llo_original>
